<compile_context>
chip_gen: v6e
topology: v6e:2x2x1
jax: 0.10.0
libtpu: 0.0.40
codegen_flags: <defaults>
</compile_context>

<pallas_src>
import functools

import jax
import jax.numpy as jnp
import numpy as np
from jax.experimental import pallas as pl
from jax.experimental.pallas import tpu as pltpu

_VMEM_LIMIT = 48 * 1024 * 1024  # <= 48 MiB: safe on v7x (64 MiB/TC), fine on v5e/v6e


def _round_up(x, m):
    return ((x + m - 1) // m) * m


def _pick_tm(m, tm_max=512):
    """Adaptive M-tile: large tiles, but aim for >=2 grid steps (v7x has 2 TCs)."""
    if m <= 8:
        return m  # block dim equal to the full array dim is always legal
    half = -(-m // 2)
    return min(tm_max, _round_up(half, 8))


@functools.lru_cache(maxsize=1)
def _use_bf16_matmul():
    """bf16 MXU inputs on v6e / v7x (f32 accumulation); keep f32 on v5e & older."""
    try:
        kind = jax.devices()[0].device_kind.lower()
    except Exception:
        return False
    return any(tag in kind for tag in ("v6", "v7", "tpu7"))


# ---------------------------------------------------------------------------
# Pallas kernels
# ---------------------------------------------------------------------------
def _gemm_bias_relu_kernel(x_ref, w_ref, b_ref, o_ref):
    # x: (tm, K) [f32 or bf16], w: (K, N) [same], b: (1, N) f32 -> relu in f32.
    acc = jnp.dot(x_ref[...], w_ref[...], preferred_element_type=jnp.float32)
    o_ref[...] = jnp.maximum(acc + b_ref[...], 0.0).astype(o_ref.dtype)


def gemm_bias_relu(x, w, b, *, out_dtype, tm_max=512):
    """relu(x @ w + b).  x: (M, K), w: (K, N), b: (N,) f32."""
    M, K = x.shape
    K2, N = w.shape
    assert K == K2
    tm = _pick_tm(M, tm_max)
    grid = (pl.cdiv(M, tm),)  # ragged last block is masked by Pallas (no pad/slice)
    return pl.pallas_call(
        _gemm_bias_relu_kernel,
        out_shape=jax.ShapeDtypeStruct((M, N), out_dtype),
        grid=grid,
        in_specs=[
            pl.BlockSpec((tm, K), lambda i: (i, 0)),
            pl.BlockSpec((K, N), lambda i: (0, 0)),
            pl.BlockSpec((1, N), lambda i: (0, 0)),
        ],
        out_specs=pl.BlockSpec((tm, N), lambda i: (i, 0)),
        compiler_params=pltpu.CompilerParams(
            dimension_semantics=("parallel",),
            vmem_limit_bytes=_VMEM_LIMIT,
        ),
    )(x, w, b.reshape(1, N).astype(jnp.float32))


def _mlp_head_kernel(x_ref, w1_ref, b1_ref, w2_ref, b2_ref, o_ref):
    # Fused: h = relu(x @ w1 + b1) stays in registers/VMEM; q = h @ w2 + b2.
    h = jnp.dot(x_ref[...], w1_ref[...], preferred_element_type=jnp.float32)
    h = jnp.maximum(h + b1_ref[...], 0.0)
    q = jnp.dot(h.astype(w2_ref.dtype), w2_ref[...],
                preferred_element_type=jnp.float32)
    o_ref[...] = (q + b2_ref[...]).astype(o_ref.dtype)


def mlp_head(feat, w4, b4, wq, bq, *, tm_max=256):
    """q = relu(feat @ w4 + b4) @ wq + bq, one pallas_call; q lanes padded to 128."""
    M, K = feat.shape
    K2, H = w4.shape
    H2, A = wq.shape
    assert K == K2 and H == H2
    Np = _round_up(max(A, 128), 128)  # lane-dense output store; slice to A after
    wq_p = jnp.zeros((H, Np), wq.dtype).at[:, :A].set(wq)
    bq_p = jnp.zeros((1, Np), jnp.float32).at[:, :A].set(bq.astype(jnp.float32))
    tm = _pick_tm(M, tm_max)
    grid = (pl.cdiv(M, tm),)
    q = pl.pallas_call(
        _mlp_head_kernel,
        out_shape=jax.ShapeDtypeStruct((M, Np), jnp.float32),
        grid=grid,
        in_specs=[
            pl.BlockSpec((tm, K), lambda i: (i, 0)),
            pl.BlockSpec((K, H), lambda i: (0, 0)),
            pl.BlockSpec((1, H), lambda i: (0, 0)),
            pl.BlockSpec((H, Np), lambda i: (0, 0)),
            pl.BlockSpec((1, Np), lambda i: (0, 0)),
        ],
        out_specs=pl.BlockSpec((tm, Np), lambda i: (i, 0)),
        compiler_params=pltpu.CompilerParams(
            dimension_semantics=("parallel",),
            vmem_limit_bytes=_VMEM_LIMIT,
        ),
    )(feat, w4, b4.reshape(1, H).astype(jnp.float32), wq_p, bq_p)
    return q[:, :A]


# ---------------------------------------------------------------------------
# NHWC conv-as-GEMM glue (im2col is strided-slice glue; GEMM is the Pallas kernel)
# ---------------------------------------------------------------------------
def im2col_nhwc(x, k, s):
    """x: (B, H, W, C) -> (B*oh*ow, k*k*C); feature index = (kh*k + kw)*C + c."""
    B, H, W, C = x.shape
    oh = (H - k) // s + 1
    ow = (W - k) // s + 1
    patches = [
        x[:, dh:dh + s * oh:s, dw:dw + s * ow:s, :]
        for dh in range(k) for dw in range(k)
    ]
    cols = jnp.concatenate(patches, axis=-1)  # (B, oh, ow, k*k*C)
    return cols.reshape(B * oh * ow, k * k * C), oh, ow


def conv2d_relu_nhwc(x, w_mat, b, k, s, *, tm_max=512):
    """x: (B, H, W, C) NHWC; w_mat: (k*k*C, O); returns (B, oh, ow, O) NHWC."""
    B = x.shape[0]
    cols, oh, ow = im2col_nhwc(x, k, s)
    O = w_mat.shape[1]
    y = gemm_bias_relu(cols, w_mat, b, out_dtype=x.dtype, tm_max=tm_max)
    return y.reshape(B, oh, ow, O)  # already channel-last; no transpose needed


# ---------------------------------------------------------------------------
# Parameter folding (PyTorch layouts -> NHWC GEMM matrices)
# ---------------------------------------------------------------------------
_RGB_WEIGHTS = np.array([0.2989, 0.587, 0.114], np.float32) / 255.0


def fold_params(params, compute_dtype=jnp.float32):
    """Fold grayscale+norm into conv1; reorder weights for NHWC im2col GEMMs."""
    w1 = params["conv1_w"]  # (32, 1, 8, 8) PyTorch (O, C=1, kh, kw)
    O1 = w1.shape[0]
    rgb = jnp.asarray(_RGB_WEIGHTS)
    w1_khwo = jnp.transpose(w1[:, 0], (1, 2, 0))  # (8, 8, 32) [kh, kw, o]
    # Folded conv1: W1'[kh, kw, c, o] = W1[o, 0, kh, kw] * rgb[c] / 255
    w1_mat = (w1_khwo[:, :, None, :] * rgb[None, None, :, None]).reshape(-1, O1)

    def conv_mat(w):  # (O, C, kh, kw) -> (kh*kw*C, O), matching im2col_nhwc order
        return jnp.transpose(w, (2, 3, 1, 0)).reshape(-1, w.shape[0])

    # lin4 consumes PyTorch's (c, h, w)-ordered flatten; permute its input dim
    # to the (h, w, c) order produced by the NHWC conv stack.
    w4 = params["lin4_w"]  # (256, 4096)
    H = w4.shape[0]
    w4_mat = jnp.transpose(w4.reshape(H, 64, 8, 8), (2, 3, 1, 0)).reshape(4096, H)

    cdt = compute_dtype
    return {
        "w1": w1_mat.astype(cdt), "b1": params["conv1_b"].astype(jnp.float32),
        "w2": conv_mat(params["conv2_w"]).astype(cdt),
        "b2": params["conv2_b"].astype(jnp.float32),
        "w3": conv_mat(params["conv3_w"]).astype(cdt),
        "b3": params["conv3_b"].astype(jnp.float32),
        "w4": w4_mat.astype(cdt), "b4": params["lin4_b"].astype(jnp.float32),
        "wq": params["q_w"].T.astype(cdt), "bq": params["q_b"].astype(jnp.float32),
    }


# ---------------------------------------------------------------------------
# DQN forward
# ---------------------------------------------------------------------------
def dqn_forward(params, observation):
    """observation: (B, 96, 96, >=3) float32 RGB in [0, 255] -> (B, action_size)."""
    cdt = jnp.bfloat16 if _use_bf16_matmul() else jnp.float32
    p = fold_params(params, cdt)
    B = observation.shape[0]
    x = observation[..., :3].astype(cdt)                        # (B, 96, 96, 3) NHWC
    x = conv2d_relu_nhwc(x, p["w1"], p["b1"], k=8, s=4)         # (B, 23, 23, 32)
    x = conv2d_relu_nhwc(x, p["w2"], p["b2"], k=4, s=2)         # (B, 10, 10, 64)
    x = conv2d_relu_nhwc(x, p["w3"], p["b3"], k=3, s=1)         # (B, 8, 8, 64)
    feat = x.reshape(B, -1)                                     # (B, 4096), (h, w, c) order
    return mlp_head(feat, p["w4"], p["b4"], p["wq"], p["bq"])   # (B, action_size) f32


def init_params(key, action_size):
    keys = jax.random.split(key, 10)

    def u(k, shape, fan_in):
        bound = 1.0 / np.sqrt(fan_in)
        return jax.random.uniform(k, shape, jnp.float32, -bound, bound)

    return {
        "conv1_w": u(keys[0], (32, 1, 8, 8), 1 * 8 * 8),
        "conv1_b": u(keys[1], (32,), 1 * 8 * 8),
        "conv2_w": u(keys[2], (64, 32, 4, 4), 32 * 4 * 4),
        "conv2_b": u(keys[3], (64,), 32 * 4 * 4),
        "conv3_w": u(keys[4], (64, 64, 3, 3), 64 * 3 * 3),
        "conv3_b": u(keys[5], (64,), 64 * 3 * 3),
        "lin4_w": u(keys[6], (256, 4096), 4096),   # PyTorch Linear: (out, in)
        "lin4_b": u(keys[7], (256,), 4096),
        "q_w": u(keys[8], (action_size, 256), 256),
        "q_b": u(keys[9], (action_size,), 256),
    }


if __name__ == "__main__":
    key = jax.random.PRNGKey(0)
    pkey, xkey = jax.random.split(key)
    action_size = 5
    batch = 2  # spatial must be 96x96x3: lin4 expects 64*8*8 = 4096 features
    params = init_params(pkey, action_size)
    obs = jax.random.uniform(xkey, (batch, 96, 96, 3), jnp.float32, 0.0, 255.0)

    q = jax.jit(dqn_forward)(params, obs)
    jax.block_until_ready(q)
    assert q.shape == (batch, action_size)
    assert q.dtype == jnp.float32
    print("KERNEL_OK")
</pallas_src>

<mosaic_0001>
module attributes {stable_mosaic.version = 11 : i64} {
  func.func @_gemm_bias_relu_kernel(%arg0: i32, %arg1: memref<512x192xf32, #tpu.memory_space<vmem>>, %arg2: memref<192x32xf32, #tpu.memory_space<vmem>>, %arg3: memref<1x32xf32, #tpu.memory_space<vmem>>, %arg4: memref<512x32xf32, #tpu.memory_space<vmem>>) attributes {dimension_semantics = [#tpu.dimension_semantics<parallel>], iteration_bounds = array<i64: 3>, scalar_prefetch = 0 : i64, scratch_operands = 0 : i64, tpu.core_type = #tpu.core_type<tc>, window_params = [{transform_indices = @transform_0, window_bounds = array<i64: 512, 192>}, {pipeline_mode = #tpu.pipeline_mode<synchronous>, transform_indices = @transform_1, window_bounds = array<i64: 192, 32>}, {pipeline_mode = #tpu.pipeline_mode<synchronous>, transform_indices = @transform_2, window_bounds = array<i64: 1, 32>}, {transform_indices = @transform_3, window_bounds = array<i64: 512, 32>}]} {
    %c0 = arith.constant 0 : index
    %c0_0 = arith.constant 0 : index
    %0 = vector.load %arg1[%c0, %c0_0] : memref<512x192xf32, #tpu.memory_space<vmem>>, vector<512x192xf32>
    %c0_1 = arith.constant 0 : index
    %c0_2 = arith.constant 0 : index
    %1 = vector.load %arg2[%c0_1, %c0_2] : memref<192x32xf32, #tpu.memory_space<vmem>>, vector<192x32xf32>
    %cst = arith.constant dense<0.000000e+00> : vector<512x32xf32>
    %2 = tpu.matmul %0, %1, %cst {dimension_numbers = #tpu.dot_dimension_numbers<[1], [0], [0], [1], [0, 0, 1, 1], [], []>} : vector<512x192xf32>, vector<192x32xf32>, vector<512x32xf32> -> vector<512x32xf32>
    %c0_3 = arith.constant 0 : index
    %c0_4 = arith.constant 0 : index
    %3 = vector.load %arg3[%c0_3, %c0_4] : memref<1x32xf32, #tpu.memory_space<vmem>>, vector<1x32xf32>
    %4 = vector.broadcast %3 : vector<1x32xf32> to vector<512x32xf32>
    %5 = arith.addf %2, %4 : vector<512x32xf32>
    %cst_5 = arith.constant 0.000000e+00 : f32
    %6 = vector.broadcast %cst_5 : f32 to vector<512x32xf32>
    %7 = arith.maximumf %5, %6 : vector<512x32xf32>
    %c0_6 = arith.constant 0 : index
    %c0_7 = arith.constant 0 : index
    %8 = vector.load %arg4[%c0_6, %c0_7] : memref<512x32xf32, #tpu.memory_space<vmem>>, vector<512x32xf32>
    tpu.vector_store %arg4[%c0_6, %c0_7], %7 {strides = array<i32>} : memref<512x32xf32, #tpu.memory_space<vmem>>, vector<512x32xf32>,
    return
  }
  func.func @transform_0(%arg0: i32) -> (i32, i32) {
    %c0_i32 = arith.constant 0 : i32
    %c0_i32_0 = arith.constant 0 : i32
    return %arg0, %c0_i32 : i32, i32
  }
  func.func @transform_1(%arg0: i32) -> (i32, i32) {
    %c0_i32 = arith.constant 0 : i32
    %c0_i32_0 = arith.constant 0 : i32
    %c0_i32_1 = arith.constant 0 : i32
    return %c0_i32, %c0_i32_0 : i32, i32
  }
  func.func @transform_2(%arg0: i32) -> (i32, i32) {
    %c0_i32 = arith.constant 0 : i32
    %c0_i32_0 = arith.constant 0 : i32
    %c0_i32_1 = arith.constant 0 : i32
    return %c0_i32, %c0_i32_0 : i32, i32
  }
  func.func @transform_3(%arg0: i32) -> (i32, i32) {
    %c0_i32 = arith.constant 0 : i32
    %c0_i32_0 = arith.constant 0 : i32
    return %arg0, %c0_i32 : i32, i32
  }
}

module attributes {stable_mosaic.version = 11 : i64} {
  func.func @_gemm_bias_relu_kernel(%arg0: i32, %arg1: memref<104x512xf32, #tpu.memory_space<vmem>>, %arg2: memref<512x64xf32, #tpu.memory_space<vmem>>, %arg3: memref<1x64xf32, #tpu.memory_space<vmem>>, %arg4: memref<104x64xf32, #tpu.memory_space<vmem>>) attributes {dimension_semantics = [#tpu.dimension_semantics<parallel>], iteration_bounds = array<i64: 2>, scalar_prefetch = 0 : i64, scratch_operands = 0 : i64, tpu.core_type = #tpu.core_type<tc>, window_params = [{transform_indices = @transform_0, window_bounds = array<i64: 104, 512>}, {pipeline_mode = #tpu.pipeline_mode<synchronous>, transform_indices = @transform_1, window_bounds = array<i64: 512, 64>}, {pipeline_mode = #tpu.pipeline_mode<synchronous>, transform_indices = @transform_2, window_bounds = array<i64: 1, 64>}, {transform_indices = @transform_3, window_bounds = array<i64: 104, 64>}]} {
    %c0 = arith.constant 0 : index
    %c0_0 = arith.constant 0 : index
    %0 = vector.load %arg1[%c0, %c0_0] : memref<104x512xf32, #tpu.memory_space<vmem>>, vector<104x512xf32>
    %c0_1 = arith.constant 0 : index
    %c0_2 = arith.constant 0 : index
    %1 = vector.load %arg2[%c0_1, %c0_2] : memref<512x64xf32, #tpu.memory_space<vmem>>, vector<512x64xf32>
    %cst = arith.constant dense<0.000000e+00> : vector<104x64xf32>
    %2 = tpu.matmul %0, %1, %cst {dimension_numbers = #tpu.dot_dimension_numbers<[1], [0], [0], [1], [0, 0, 1, 1], [], []>} : vector<104x512xf32>, vector<512x64xf32>, vector<104x64xf32> -> vector<104x64xf32>
    %c0_3 = arith.constant 0 : index
    %c0_4 = arith.constant 0 : index
    %3 = vector.load %arg3[%c0_3, %c0_4] : memref<1x64xf32, #tpu.memory_space<vmem>>, vector<1x64xf32>
    %4 = vector.broadcast %3 : vector<1x64xf32> to vector<104x64xf32>
    %5 = arith.addf %2, %4 : vector<104x64xf32>
    %cst_5 = arith.constant 0.000000e+00 : f32
    %6 = vector.broadcast %cst_5 : f32 to vector<104x64xf32>
    %7 = arith.maximumf %5, %6 : vector<104x64xf32>
    %c0_6 = arith.constant 0 : index
    %c0_7 = arith.constant 0 : index
    %8 = vector.load %arg4[%c0_6, %c0_7] : memref<104x64xf32, #tpu.memory_space<vmem>>, vector<104x64xf32>
    tpu.vector_store %arg4[%c0_6, %c0_7], %7 {strides = array<i32>} : memref<104x64xf32, #tpu.memory_space<vmem>>, vector<104x64xf32>,
    return
  }
  func.func @transform_0(%arg0: i32) -> (i32, i32) {
    %c0_i32 = arith.constant 0 : i32
    %c0_i32_0 = arith.constant 0 : i32
    return %arg0, %c0_i32 : i32, i32
  }
  func.func @transform_1(%arg0: i32) -> (i32, i32) {
    %c0_i32 = arith.constant 0 : i32
    %c0_i32_0 = arith.constant 0 : i32
    %c0_i32_1 = arith.constant 0 : i32
    return %c0_i32, %c0_i32_0 : i32, i32
  }
  func.func @transform_2(%arg0: i32) -> (i32, i32) {
    %c0_i32 = arith.constant 0 : i32
    %c0_i32_0 = arith.constant 0 : i32
    %c0_i32_1 = arith.constant 0 : i32
    return %c0_i32, %c0_i32_0 : i32, i32
  }
  func.func @transform_3(%arg0: i32) -> (i32, i32) {
    %c0_i32 = arith.constant 0 : i32
    %c0_i32_0 = arith.constant 0 : i32
    return %arg0, %c0_i32 : i32, i32
  }
}

module attributes {stable_mosaic.version = 11 : i64} {
  func.func @_gemm_bias_relu_kernel(%arg0: i32, %arg1: memref<64x576xf32, #tpu.memory_space<vmem>>, %arg2: memref<576x64xf32, #tpu.memory_space<vmem>>, %arg3: memref<1x64xf32, #tpu.memory_space<vmem>>, %arg4: memref<64x64xf32, #tpu.memory_space<vmem>>) attributes {dimension_semantics = [#tpu.dimension_semantics<parallel>], iteration_bounds = array<i64: 2>, scalar_prefetch = 0 : i64, scratch_operands = 0 : i64, tpu.core_type = #tpu.core_type<tc>, window_params = [{transform_indices = @transform_0, window_bounds = array<i64: 64, 576>}, {pipeline_mode = #tpu.pipeline_mode<synchronous>, transform_indices = @transform_1, window_bounds = array<i64: 576, 64>}, {pipeline_mode = #tpu.pipeline_mode<synchronous>, transform_indices = @transform_2, window_bounds = array<i64: 1, 64>}, {transform_indices = @transform_3, window_bounds = array<i64: 64, 64>}]} {
    %c0 = arith.constant 0 : index
    %c0_0 = arith.constant 0 : index
    %0 = vector.load %arg1[%c0, %c0_0] : memref<64x576xf32, #tpu.memory_space<vmem>>, vector<64x576xf32>
    %c0_1 = arith.constant 0 : index
    %c0_2 = arith.constant 0 : index
    %1 = vector.load %arg2[%c0_1, %c0_2] : memref<576x64xf32, #tpu.memory_space<vmem>>, vector<576x64xf32>
    %cst = arith.constant dense<0.000000e+00> : vector<64x64xf32>
    %2 = tpu.matmul %0, %1, %cst {dimension_numbers = #tpu.dot_dimension_numbers<[1], [0], [0], [1], [0, 0, 1, 1], [], []>} : vector<64x576xf32>, vector<576x64xf32>, vector<64x64xf32> -> vector<64x64xf32>
    %c0_3 = arith.constant 0 : index
    %c0_4 = arith.constant 0 : index
    %3 = vector.load %arg3[%c0_3, %c0_4] : memref<1x64xf32, #tpu.memory_space<vmem>>, vector<1x64xf32>
    %4 = vector.broadcast %3 : vector<1x64xf32> to vector<64x64xf32>
    %5 = arith.addf %2, %4 : vector<64x64xf32>
    %cst_5 = arith.constant 0.000000e+00 : f32
    %6 = vector.broadcast %cst_5 : f32 to vector<64x64xf32>
    %7 = arith.maximumf %5, %6 : vector<64x64xf32>
    %c0_6 = arith.constant 0 : index
    %c0_7 = arith.constant 0 : index
    %8 = vector.load %arg4[%c0_6, %c0_7] : memref<64x64xf32, #tpu.memory_space<vmem>>, vector<64x64xf32>
    tpu.vector_store %arg4[%c0_6, %c0_7], %7 {strides = array<i32>} : memref<64x64xf32, #tpu.memory_space<vmem>>, vector<64x64xf32>,
    return
  }
  func.func @transform_0(%arg0: i32) -> (i32, i32) {
    %c0_i32 = arith.constant 0 : i32
    %c0_i32_0 = arith.constant 0 : i32
    return %arg0, %c0_i32 : i32, i32
  }
  func.func @transform_1(%arg0: i32) -> (i32, i32) {
    %c0_i32 = arith.constant 0 : i32
    %c0_i32_0 = arith.constant 0 : i32
    %c0_i32_1 = arith.constant 0 : i32
    return %c0_i32, %c0_i32_0 : i32, i32
  }
  func.func @transform_2(%arg0: i32) -> (i32, i32) {
    %c0_i32 = arith.constant 0 : i32
    %c0_i32_0 = arith.constant 0 : i32
    %c0_i32_1 = arith.constant 0 : i32
    return %c0_i32, %c0_i32_0 : i32, i32
  }
  func.func @transform_3(%arg0: i32) -> (i32, i32) {
    %c0_i32 = arith.constant 0 : i32
    %c0_i32_0 = arith.constant 0 : i32
    return %arg0, %c0_i32 : i32, i32
  }
}

module attributes {stable_mosaic.version = 11 : i64} {
  func.func @_mlp_head_kernel(%arg0: i32, %arg1: memref<2x4096xf32, #tpu.memory_space<vmem>>, %arg2: memref<4096x256xf32, #tpu.memory_space<vmem>>, %arg3: memref<1x256xf32, #tpu.memory_space<vmem>>, %arg4: memref<256x128xf32, #tpu.memory_space<vmem>>, %arg5: memref<1x128xf32, #tpu.memory_space<vmem>>, %arg6: memref<2x128xf32, #tpu.memory_space<vmem>>) attributes {dimension_semantics = [#tpu.dimension_semantics<parallel>], iteration_bounds = array<i64: 1>, scalar_prefetch = 0 : i64, scratch_operands = 0 : i64, tpu.core_type = #tpu.core_type<tc>, window_params = [{transform_indices = @transform_0, window_bounds = array<i64: 2, 4096>}, {pipeline_mode = #tpu.pipeline_mode<synchronous>, transform_indices = @transform_1, window_bounds = array<i64: 4096, 256>}, {pipeline_mode = #tpu.pipeline_mode<synchronous>, transform_indices = @transform_2, window_bounds = array<i64: 1, 256>}, {pipeline_mode = #tpu.pipeline_mode<synchronous>, transform_indices = @transform_3, window_bounds = array<i64: 256, 128>}, {pipeline_mode = #tpu.pipeline_mode<synchronous>, transform_indices = @transform_4, window_bounds = array<i64: 1, 128>}, {transform_indices = @transform_5, window_bounds = array<i64: 2, 128>}]} {
    %c0 = arith.constant 0 : index
    %c0_0 = arith.constant 0 : index
    %0 = vector.load %arg1[%c0, %c0_0] : memref<2x4096xf32, #tpu.memory_space<vmem>>, vector<2x4096xf32>
    %c0_1 = arith.constant 0 : index
    %c0_2 = arith.constant 0 : index
    %1 = vector.load %arg2[%c0_1, %c0_2] : memref<4096x256xf32, #tpu.memory_space<vmem>>, vector<4096x256xf32>
    %cst = arith.constant dense<0.000000e+00> : vector<2x256xf32>
    %2 = tpu.matmul %0, %1, %cst {dimension_numbers = #tpu.dot_dimension_numbers<[1], [0], [0], [1], [0, 0, 1, 1], [], []>} : vector<2x4096xf32>, vector<4096x256xf32>, vector<2x256xf32> -> vector<2x256xf32>
    %c0_3 = arith.constant 0 : index
    %c0_4 = arith.constant 0 : index
    %3 = vector.load %arg3[%c0_3, %c0_4] : memref<1x256xf32, #tpu.memory_space<vmem>>, vector<1x256xf32>
    %4 = vector.broadcast %3 : vector<1x256xf32> to vector<2x256xf32>
    %5 = arith.addf %2, %4 : vector<2x256xf32>
    %cst_5 = arith.constant 0.000000e+00 : f32
    %6 = vector.broadcast %cst_5 : f32 to vector<2x256xf32>
    %7 = arith.maximumf %5, %6 : vector<2x256xf32>
    %c0_6 = arith.constant 0 : index
    %c0_7 = arith.constant 0 : index
    %8 = vector.load %arg4[%c0_6, %c0_7] : memref<256x128xf32, #tpu.memory_space<vmem>>, vector<256x128xf32>
    %cst_8 = arith.constant dense<0.000000e+00> : vector<2x128xf32>
    %9 = tpu.matmul %7, %8, %cst_8 {dimension_numbers = #tpu.dot_dimension_numbers<[1], [0], [0], [1], [0, 0, 1, 1], [], []>} : vector<2x256xf32>, vector<256x128xf32>, vector<2x128xf32> -> vector<2x128xf32>
    %c0_9 = arith.constant 0 : index
    %c0_10 = arith.constant 0 : index
    %10 = vector.load %arg5[%c0_9, %c0_10] : memref<1x128xf32, #tpu.memory_space<vmem>>, vector<1x128xf32>
    %11 = vector.broadcast %10 : vector<1x128xf32> to vector<2x128xf32>
    %12 = arith.addf %9, %11 : vector<2x128xf32>
    %c0_11 = arith.constant 0 : index
    %c0_12 = arith.constant 0 : index
    %13 = vector.load %arg6[%c0_11, %c0_12] : memref<2x128xf32, #tpu.memory_space<vmem>>, vector<2x128xf32>
    tpu.vector_store %arg6[%c0_11, %c0_12], %12 {strides = array<i32>} : memref<2x128xf32, #tpu.memory_space<vmem>>, vector<2x128xf32>,
    return
  }
  func.func @transform_0(%arg0: i32) -> (i32, i32) {
    %c0_i32 = arith.constant 0 : i32
    %c0_i32_0 = arith.constant 0 : i32
    return %arg0, %c0_i32 : i32, i32
  }
  func.func @transform_1(%arg0: i32) -> (i32, i32) {
    %c0_i32 = arith.constant 0 : i32
    %c0_i32_0 = arith.constant 0 : i32
    %c0_i32_1 = arith.constant 0 : i32
    return %c0_i32, %c0_i32_0 : i32, i32
  }
  func.func @transform_2(%arg0: i32) -> (i32, i32) {
    %c0_i32 = arith.constant 0 : i32
    %c0_i32_0 = arith.constant 0 : i32
    %c0_i32_1 = arith.constant 0 : i32
    return %c0_i32, %c0_i32_0 : i32, i32
  }
  func.func @transform_3(%arg0: i32) -> (i32, i32) {
    %c0_i32 = arith.constant 0 : i32
    %c0_i32_0 = arith.constant 0 : i32
    %c0_i32_1 = arith.constant 0 : i32
    return %c0_i32, %c0_i32_0 : i32, i32
  }
  func.func @transform_4(%arg0: i32) -> (i32, i32) {
    %c0_i32 = arith.constant 0 : i32
    %c0_i32_0 = arith.constant 0 : i32
    %c0_i32_1 = arith.constant 0 : i32
    return %c0_i32, %c0_i32_0 : i32, i32
  }
  func.func @transform_5(%arg0: i32) -> (i32, i32) {
    %c0_i32 = arith.constant 0 : i32
    %c0_i32_0 = arith.constant 0 : i32
    return %arg0, %c0_i32 : i32, i32
  }
}

</mosaic_0001>

<llo_original>
// kernel: dqn_forward.4
$region0: #{dqn_forward.4}
  #allocation0 [shape = 'u32[]', space=smem, size = 0x4, offset = 0x4, fixed_abs, tag = 'smem constant byte address 0x4 - core index']
  #allocation1 [shape = 'u32[144,128]{1,0:T(1,128)}', space=vmem, size = 0x12000, scoped, tag = 'internal scratch']
  %s0 = inlined_call_operand.vmem [shape: f32[1058,192], index: 0, kind: input, shape index: {}]
  %s1 = inlined_call_operand.vmem [shape: f32[192,32], index: 1, kind: input, shape index: {}]
  %s2 = inlined_call_operand.vmem [shape: f32[1,32], index: 2, kind: input, shape index: {}]
  %s3 = inlined_call_operand.vmem [shape: f32[1058,32], index: 3, kind: output, shape index: {}]
  %s4 = sld [smem:[#allocation0]]
  $region93: #{dqn_forward.4} parent=0
    _
  %s6 = ssub.s32 1, %s4
  %s7 = scalar_select 0, %s6, %s4
  $region1: #{dqn_forward.4} parent=0
    #allocation2 [shape = 'u8[524288]{0}', space=vmem, size = 0x80000, scoped, tag = 'output window, operand 0']
    loop: start=0, step=1, limit=5
    $region2: #{dqn_forward.4} parent=1 // loop_pre_header
      _
    $region3: #{dqn_forward.4} parent=1 // loop_header
      %s9 = sphi 0, %s13
      %p10 = scmp.ge.s32.totalorder %s9, 5
      %s19 = sphi 0, %s21
      %s22 = sphi 0, %s19
      %s23 = sphi 0, %s22
      %s39 = sphi 0, %s23
      %s43 = sphi 0, %s43
      %s45 = sphi 0, %s43
      %s46 = sphi 0, %s45
      %s60 = sphi 0, %s46
      %s64 = sphi 0, %s64
      %s66 = sphi 0, %s64
      %s67 = sphi 0, %s66
      %s81 = sphi 0, %s67
      %s87 = sphi 0, %s89
      %s90 = sphi 0, %s87
      %s91 = sphi 0, %s90
      %s107 = sphi 0, %s91
    $region4: #{dqn_forward.4} parent=1 // loop_header_branch
      %12 = sbr.rel (%p10) target = $region8
    $region5: #{dqn_forward.4} parent=1 // loop_body
      %s14 = ssub.s32 %s9, 1
      %s15 = ssub.s32 %s9, 2
      %s16 = sadd.s32 %s9, 1
      %s17 = ssub.s32 %s9, %s16
      %p18 = scmp.eq.s32.totalorder %s17, 0
      %s20 = sadd.s32 %s19, 1
      %s21 = scalar_select %p18, %s19, %s20
      %p24 = pneg %p18
      %p25 = scmp.eq.s32.totalorder %s9, 2
      %p26 = por %p24, %p25
      %p27 = scmp.ne.s32.totalorder %s19, %s22
      %p28 = scmp.eq.s32.totalorder %s9, 0
      %p29 = por %p27, %p28
      %p30 = scmp.ne.s32.totalorder %s19, %s22
      %p31 = scmp.eq.s32.totalorder %s14, 2
      %p32 = por %p30, %p31
      %p33 = scmp.ne.s32.totalorder %s22, %s23
      %p34 = scmp.eq.s32.totalorder %s14, 0
      %p35 = por %p33, %p34
      %p36 = scmp.ne.s32.totalorder %s22, %s23
      %p37 = scmp.eq.s32.totalorder %s15, 2
      %p38 = por %p36, %p37
      %p40 = scmp.ne.s32.totalorder %s23, %s39
      %p41 = scmp.eq.s32.totalorder %s15, 0
      %p42 = por %p40, %p41
      %s44 = sadd.s32 %s43, 1
      %p47 = scmp.eq.s32.totalorder %s9, 2
      %p48 = scmp.ne.s32.totalorder %s43, %s45
      %p49 = scmp.eq.s32.totalorder %s9, 0
      %p50 = por %p48, %p49
      %p51 = scmp.ne.s32.totalorder %s43, %s45
      %p52 = scmp.eq.s32.totalorder %s14, 2
      %p53 = por %p51, %p52
      %p54 = scmp.ne.s32.totalorder %s45, %s46
      %p55 = scmp.eq.s32.totalorder %s14, 0
      %p56 = por %p54, %p55
      %p57 = scmp.ne.s32.totalorder %s45, %s46
      %p58 = scmp.eq.s32.totalorder %s15, 2
      %p59 = por %p57, %p58
      %p61 = scmp.ne.s32.totalorder %s46, %s60
      %p62 = scmp.eq.s32.totalorder %s15, 0
      %p63 = por %p61, %p62
      %s65 = sadd.s32 %s64, 1
      %p68 = scmp.eq.s32.totalorder %s9, 2
      %p69 = scmp.ne.s32.totalorder %s64, %s66
      %p70 = scmp.eq.s32.totalorder %s9, 0
      %p71 = por %p69, %p70
      %p72 = scmp.ne.s32.totalorder %s64, %s66
      %p73 = scmp.eq.s32.totalorder %s14, 2
      %p74 = por %p72, %p73
      %p75 = scmp.ne.s32.totalorder %s66, %s67
      %p76 = scmp.eq.s32.totalorder %s14, 0
      %p77 = por %p75, %p76
      %p78 = scmp.ne.s32.totalorder %s66, %s67
      %p79 = scmp.eq.s32.totalorder %s15, 2
      %p80 = por %p78, %p79
      %p82 = scmp.ne.s32.totalorder %s67, %s81
      %p83 = scmp.eq.s32.totalorder %s15, 0
      %p84 = por %p82, %p83
      %s85 = ssub.s32 %s9, %s16
      %p86 = scmp.eq.s32.totalorder %s85, 0
      %s88 = sadd.s32 %s87, 1
      %s89 = scalar_select %p86, %s87, %s88
      %p92 = pneg %p86
      %p93 = scmp.eq.s32.totalorder %s9, 2
      %p94 = por %p92, %p93
      %p95 = scmp.ne.s32.totalorder %s87, %s90
      %p96 = scmp.eq.s32.totalorder %s9, 0
      %p97 = por %p95, %p96
      %p98 = scmp.ne.s32.totalorder %s87, %s90
      %p99 = scmp.eq.s32.totalorder %s14, 2
      %p100 = por %p98, %p99
      %p101 = scmp.ne.s32.totalorder %s90, %s91
      %p102 = scmp.eq.s32.totalorder %s14, 0
      %p103 = por %p101, %p102
      %p104 = scmp.ne.s32.totalorder %s90, %s91
      %p105 = scmp.eq.s32.totalorder %s15, 2
      %p106 = por %p104, %p105
      %p108 = scmp.ne.s32.totalorder %s91, %s107
      %p109 = scmp.eq.s32.totalorder %s15, 0
      %p110 = por %p108, %p109
      %p111 = scmp.le.s32.totalorder 1, %s9
      %p112 = scmp.lt.s32.totalorder %s9, 4
      %p113 = pnand %p111, %p112
      %p114 = pneg %p113
      // Predicated region
      $region9: #{dqn_forward.4} parent=5 // pred_check
        _
      $region10: #{dqn_forward.4} parent=5 // pred_check_branch
        %116 = sbr.rel (%p113) target = $region12
      $region11: #{dqn_forward.4} parent=5 // pred_region
        %s117 = ssub.s32 %s9, 1
        // Predicated region
        $region13: #{dqn_forward.4} parent=11 // pred_check
          %p118 = pneg %p56
        $region14: #{dqn_forward.4} parent=11 // pred_check_branch
          %120 = sbr.rel (%p118) target = $region16
        $region15: #{dqn_forward.4} parent=11 // pred_region
          _
        $region16: #{dqn_forward.4} parent=11 // pred_fallthru
          _
        // Predicated region
        $region17: #{dqn_forward.4} parent=11 // pred_check
          %p121 = pneg %p77
        $region18: #{dqn_forward.4} parent=11 // pred_check_branch
          %123 = sbr.rel (%p121) target = $region20
        $region19: #{dqn_forward.4} parent=11 // pred_region
          _
        $region20: #{dqn_forward.4} parent=11 // pred_fallthru
          _
      $region12: #{dqn_forward.4} parent=5 // pred_fallthru
        _
      %p124 = scmp.lt.s32.totalorder %s9, 3
      // Predicated region
      $region21: #{dqn_forward.4} parent=5 // pred_check
        %p125 = pneg %p124
      $region22: #{dqn_forward.4} parent=5 // pred_check_branch
        %127 = sbr.rel (%p125) target = $region24
      $region23: #{dqn_forward.4} parent=5 // pred_region
        // Predicated region
        $region25: #{dqn_forward.4} parent=23 // pred_check
          %p128 = pneg %p29
        $region26: #{dqn_forward.4} parent=23 // pred_check_branch
          %130 = sbr.rel (%p128) target = $region28
        $region27: #{dqn_forward.4} parent=23 // pred_region
          %s131 = smul.u32 64, %s9
          %s132 = ssub.s32 133, %s131
          %p133 = scmp.lt.s32.totalorder %s132, 64
          %s134 = scalar_select %p133, %s132, 64
          %s135 = smul.u32 128, %s134
          %s136 = smul.u32 %s135, 2
          %p137 = scmp.lt.s32.totalorder %s131, 132
          %s138 = scalar_select %p137, %s131, 132
          %s139 = smul.addr %s138, 2
          %s140 = smul.addr %s139, 8
          %s141 = scalar_lea.vmem %s0, %s140
          %s142 = smul.u32 64, %s9
          %s143 = ssub.s32 133, %s142
          %p144 = scmp.lt.s32.totalorder %s143, 64
          %s145 = scalar_select %p144, %s143, 64
          %s146 = smul.u32 128, %s145
          %s147 = smul.u32 %s146, 2
        $region28: #{dqn_forward.4} parent=23 // pred_fallthru
          _
      $region24: #{dqn_forward.4} parent=5 // pred_fallthru
        _
      %p148 = scmp.le.s32.totalorder 1, %s9
      %p149 = scmp.lt.s32.totalorder %s9, 4
      %p150 = pnand %p148, %p149
      %p151 = pneg %p150
      // Predicated region
      $region29: #{dqn_forward.4} parent=5 // pred_check
        _
      $region30: #{dqn_forward.4} parent=5 // pred_check_branch
        %153 = sbr.rel (%p150) target = $region32
      $region31: #{dqn_forward.4} parent=5 // pred_region
        %s154 = ssub.s32 %s9, 1
        %s155 = smul.u32 64, %s14
        %s156 = ssub.s32 133, %s155
        %p157 = scmp.lt.s32.totalorder %s156, 64
        %s158 = scalar_select %p157, %s156, 64
        %s159 = smul.u32 128, %s158
        %s160 = smul.u32 %s159, 2
        %p161 = scmp.lt.s32.totalorder %s155, 132
        %s162 = scalar_select %p161, %s155, 132
        %s163 = smul.addr %s162, 2
        %s164 = smul.addr %s163, 8
        %s165 = scalar_lea.vmem %s0, %s164
        %p166 = pneg %p35
        %p167 = pneg %p32
        %p168 = pneg %p56
        %p169 = pneg %p53
        %p170 = pneg %p77
        %p171 = pneg %p74
        %p172 = pneg %p103
        %p173 = pneg %p100
        %s174 = sand.u32 %s90, 1
        %s175 = sand.u32 %s90, 1
        %s176 = smul.addr %s175, 512
        %s177 = scalar_lea.vmem [#allocation2], %s176
        %s178 = smul.u32 64, %s14
        %s179 = ssub.s32 133, %s178
        %p180 = scmp.lt.s32.totalorder %s179, 64
        %s181 = scalar_select %p180, %s179, 64
        %s182 = smul.u32 128, %s181
        %s183 = smul.u32 %s182, 2
        %p184 = scmp.lt.s32.totalorder %s178, 132
        %s185 = scalar_select %p184, %s178, 132
        %s186 = smul.addr %s185, 2
        %s187 = smul.addr %s186, 8
        %s188 = scalar_lea.vmem %s0, %s187
        %s189 = smul.u32 64, %s14
        %s190 = ssub.s32 133, %s189
        %p191 = scmp.lt.s32.totalorder %s190, 64
        %s192 = scalar_select %p191, %s190, 64
        %s193 = smul.u32 128, %s192
        %s194 = smul.u32 %s193, 2
        %s195 = smul.u32 64, %s14
        %s196 = ssub.s32 133, %s195
        %p197 = scmp.lt.s32.totalorder %s196, 64
        %s198 = scalar_select %p197, %s196, 64
        %s199 = smul.u32 128, %s198
        %v200 = vld [vmem:[%s188] sm:$0xff]
        %v201 = vld [vmem:[%s188 + $0x8] sm:$0xff]
        %v202 = vld [vmem:[%s188 + $0x10] sm:$0xff]
        %v203 = vld [vmem:[%s188 + $0x18] sm:$0xff]
        %v204 = vld [vmem:[%s188 + $0x20] sm:$0xff]
        %v205 = vld [vmem:[%s188 + $0x28] sm:$0xff]
        %v206 = vld [vmem:[%s188 + $0x30] sm:$0xff]
        %v207 = vld [vmem:[%s188 + $0x38] sm:$0xff]
        %v208 = vld [vmem:[%s188 + $0x40] sm:$0xff]
        %v209 = vld [vmem:[%s188 + $0x48] sm:$0xff]
        %v210 = vld [vmem:[%s188 + $0x50] sm:$0xff]
        %v211 = vld [vmem:[%s188 + $0x58] sm:$0xff]
        %v212 = vld [vmem:[%s188 + $0x60] sm:$0xff]
        %v213 = vld [vmem:[%s188 + $0x68] sm:$0xff]
        %v214 = vld [vmem:[%s188 + $0x70] sm:$0xff]
        %v215 = vld [vmem:[%s188 + $0x78] sm:$0xff]
        %v216 = vld [vmem:[%s188 + $0x80] sm:$0xff]
        %v217 = vld [vmem:[%s188 + $0x88] sm:$0xff]
        %v218 = vld [vmem:[%s188 + $0x90] sm:$0xff]
        %v219 = vld [vmem:[%s188 + $0x98] sm:$0xff]
        %v220 = vld [vmem:[%s188 + $0xa0] sm:$0xff]
        %v221 = vld [vmem:[%s188 + $0xa8] sm:$0xff]
        %v222 = vld [vmem:[%s188 + $0xb0] sm:$0xff]
        %v223 = vld [vmem:[%s188 + $0xb8] sm:$0xff]
        %v224 = vld [vmem:[%s188 + $0xc0] sm:$0xff]
        %v225 = vld [vmem:[%s188 + $0xc8] sm:$0xff]
        %v226 = vld [vmem:[%s188 + $0xd0] sm:$0xff]
        %v227 = vld [vmem:[%s188 + $0xd8] sm:$0xff]
        %v228 = vld [vmem:[%s188 + $0xe0] sm:$0xff]
        %v229 = vld [vmem:[%s188 + $0xe8] sm:$0xff]
        %v230 = vld [vmem:[%s188 + $0xf0] sm:$0xff]
        %v231 = vld [vmem:[%s188 + $0xf8] sm:$0xff]
        %v232 = vld [vmem:[%s188 + $0x100] sm:$0xff]
        %v233 = vld [vmem:[%s188 + $0x108] sm:$0xff]
        %v234 = vld [vmem:[%s188 + $0x110] sm:$0xff]
        %v235 = vld [vmem:[%s188 + $0x118] sm:$0xff]
        %v236 = vld [vmem:[%s188 + $0x120] sm:$0xff]
        %v237 = vld [vmem:[%s188 + $0x128] sm:$0xff]
        %v238 = vld [vmem:[%s188 + $0x130] sm:$0xff]
        %v239 = vld [vmem:[%s188 + $0x138] sm:$0xff]
        %v240 = vld [vmem:[%s188 + $0x140] sm:$0xff]
        %v241 = vld [vmem:[%s188 + $0x148] sm:$0xff]
        %v242 = vld [vmem:[%s188 + $0x150] sm:$0xff]
        %v243 = vld [vmem:[%s188 + $0x158] sm:$0xff]
        %v244 = vld [vmem:[%s188 + $0x160] sm:$0xff]
        %v245 = vld [vmem:[%s188 + $0x168] sm:$0xff]
        %v246 = vld [vmem:[%s188 + $0x170] sm:$0xff]
        %v247 = vld [vmem:[%s188 + $0x178] sm:$0xff]
        %v248 = vld [vmem:[%s188 + $0x180] sm:$0xff]
        %v249 = vld [vmem:[%s188 + $0x188] sm:$0xff]
        %v250 = vld [vmem:[%s188 + $0x190] sm:$0xff]
        %v251 = vld [vmem:[%s188 + $0x198] sm:$0xff]
        %v252 = vld [vmem:[%s188 + $0x1a0] sm:$0xff]
        %v253 = vld [vmem:[%s188 + $0x1a8] sm:$0xff]
        %v254 = vld [vmem:[%s188 + $0x1b0] sm:$0xff]
        %v255 = vld [vmem:[%s188 + $0x1b8] sm:$0xff]
        %v256 = vld [vmem:[%s188 + $0x1c0] sm:$0xff]
        %v257 = vld [vmem:[%s188 + $0x1c8] sm:$0xff]
        %v258 = vld [vmem:[%s188 + $0x1d0] sm:$0xff]
        %v259 = vld [vmem:[%s188 + $0x1d8] sm:$0xff]
        %v260 = vld [vmem:[%s188 + $0x1e0] sm:$0xff]
        %v261 = vld [vmem:[%s188 + $0x1e8] sm:$0xff]
        %v262 = vld [vmem:[%s188 + $0x1f0] sm:$0xff]
        %v263 = vld [vmem:[%s188 + $0x1f8] sm:$0xff]
        %v264 = vld [vmem:[%s188 + $0x200] sm:$0xff]
        %v265 = vld [vmem:[%s188 + $0x208] sm:$0xff]
        %v266 = vld [vmem:[%s188 + $0x210] sm:$0xff]
        %v267 = vld [vmem:[%s188 + $0x218] sm:$0xff]
        %v268 = vld [vmem:[%s188 + $0x220] sm:$0xff]
        %v269 = vld [vmem:[%s188 + $0x228] sm:$0xff]
        %v270 = vld [vmem:[%s188 + $0x230] sm:$0xff]
        %v271 = vld [vmem:[%s188 + $0x238] sm:$0xff]
        %v272 = vld [vmem:[%s188 + $0x240] sm:$0xff]
        %v273 = vld [vmem:[%s188 + $0x248] sm:$0xff]
        %v274 = vld [vmem:[%s188 + $0x250] sm:$0xff]
        %v275 = vld [vmem:[%s188 + $0x258] sm:$0xff]
        %v276 = vld [vmem:[%s188 + $0x260] sm:$0xff]
        %v277 = vld [vmem:[%s188 + $0x268] sm:$0xff]
        %v278 = vld [vmem:[%s188 + $0x270] sm:$0xff]
        %v279 = vld [vmem:[%s188 + $0x278] sm:$0xff]
        %v280 = vld [vmem:[%s188 + $0x280] sm:$0xff]
        %v281 = vld [vmem:[%s188 + $0x288] sm:$0xff]
        %v282 = vld [vmem:[%s188 + $0x290] sm:$0xff]
        %v283 = vld [vmem:[%s188 + $0x298] sm:$0xff]
        %v284 = vld [vmem:[%s188 + $0x2a0] sm:$0xff]
        %v285 = vld [vmem:[%s188 + $0x2a8] sm:$0xff]
        %v286 = vld [vmem:[%s188 + $0x2b0] sm:$0xff]
        %v287 = vld [vmem:[%s188 + $0x2b8] sm:$0xff]
        %v288 = vld [vmem:[%s188 + $0x2c0] sm:$0xff]
        %v289 = vld [vmem:[%s188 + $0x2c8] sm:$0xff]
        %v290 = vld [vmem:[%s188 + $0x2d0] sm:$0xff]
        %v291 = vld [vmem:[%s188 + $0x2d8] sm:$0xff]
        %v292 = vld [vmem:[%s188 + $0x2e0] sm:$0xff]
        %v293 = vld [vmem:[%s188 + $0x2e8] sm:$0xff]
        %v294 = vld [vmem:[%s188 + $0x2f0] sm:$0xff]
        %v295 = vld [vmem:[%s188 + $0x2f8] sm:$0xff]
        %v296 = vld [vmem:[%s188 + $0x300] sm:$0xff]
        %v297 = vld [vmem:[%s188 + $0x308] sm:$0xff]
        %v298 = vld [vmem:[%s188 + $0x310] sm:$0xff]
        %v299 = vld [vmem:[%s188 + $0x318] sm:$0xff]
        %v300 = vld [vmem:[%s188 + $0x320] sm:$0xff]
        %v301 = vld [vmem:[%s188 + $0x328] sm:$0xff]
        %v302 = vld [vmem:[%s188 + $0x330] sm:$0xff]
        %v303 = vld [vmem:[%s188 + $0x338] sm:$0xff]
        %v304 = vld [vmem:[%s188 + $0x340] sm:$0xff]
        %v305 = vld [vmem:[%s188 + $0x348] sm:$0xff]
        %v306 = vld [vmem:[%s188 + $0x350] sm:$0xff]
        %v307 = vld [vmem:[%s188 + $0x358] sm:$0xff]
        %v308 = vld [vmem:[%s188 + $0x360] sm:$0xff]
        %v309 = vld [vmem:[%s188 + $0x368] sm:$0xff]
        %v310 = vld [vmem:[%s188 + $0x370] sm:$0xff]
        %v311 = vld [vmem:[%s188 + $0x378] sm:$0xff]
        %v312 = vld [vmem:[%s188 + $0x380] sm:$0xff]
        %v313 = vld [vmem:[%s188 + $0x388] sm:$0xff]
        %v314 = vld [vmem:[%s188 + $0x390] sm:$0xff]
        %v315 = vld [vmem:[%s188 + $0x398] sm:$0xff]
        %v316 = vld [vmem:[%s188 + $0x3a0] sm:$0xff]
        %v317 = vld [vmem:[%s188 + $0x3a8] sm:$0xff]
        %v318 = vld [vmem:[%s188 + $0x3b0] sm:$0xff]
        %v319 = vld [vmem:[%s188 + $0x3b8] sm:$0xff]
        %v320 = vld [vmem:[%s188 + $0x3c0] sm:$0xff]
        %v321 = vld [vmem:[%s188 + $0x3c8] sm:$0xff]
        %v322 = vld [vmem:[%s188 + $0x3d0] sm:$0xff]
        %v323 = vld [vmem:[%s188 + $0x3d8] sm:$0xff]
        %v324 = vld [vmem:[%s188 + $0x3e0] sm:$0xff]
        %v325 = vld [vmem:[%s188 + $0x3e8] sm:$0xff]
        %v326 = vld [vmem:[%s188 + $0x3f0] sm:$0xff]
        %v327 = vld [vmem:[%s188 + $0x3f8] sm:$0xff]
        %v328 = vld [vmem:[%s1] sm:$0xff]
        %v329 = vld [vmem:[%s1 + $0x8] sm:$0xff]
        %v330 = vld [vmem:[%s1 + $0x10] sm:$0xff]
        %v331 = vld [vmem:[%s1 + $0x18] sm:$0xff]
        %v332 = vld [vmem:[%s1 + $0x20] sm:$0xff]
        %v333 = vld [vmem:[%s1 + $0x28] sm:$0xff]
        %v334 = vld [vmem:[%s1 + $0x30] sm:$0xff]
        %v335 = vld [vmem:[%s1 + $0x38] sm:$0xff]
        %v336 = vld [vmem:[%s1 + $0x40] sm:$0xff]
        %v337 = vld [vmem:[%s1 + $0x48] sm:$0xff]
        %v338 = vld [vmem:[%s1 + $0x50] sm:$0xff]
        %v339 = vld [vmem:[%s1 + $0x58] sm:$0xff]
        %v340 = vld [vmem:[%s1 + $0x60] sm:$0xff]
        %v341 = vld [vmem:[%s1 + $0x68] sm:$0xff]
        %v342 = vld [vmem:[%s1 + $0x70] sm:$0xff]
        %v343 = vld [vmem:[%s1 + $0x78] sm:$0xff]
        %v344 = vld [vmem:[%s1 + $0x80] sm:$0xff]
        %v345 = vld [vmem:[%s1 + $0x88] sm:$0xff]
        %v346 = vld [vmem:[%s1 + $0x90] sm:$0xff]
        %v347 = vld [vmem:[%s1 + $0x98] sm:$0xff]
        %v348 = vld [vmem:[%s1 + $0xa0] sm:$0xff]
        %v349 = vld [vmem:[%s1 + $0xa8] sm:$0xff]
        %v350 = vld [vmem:[%s1 + $0xb0] sm:$0xff]
        %v351 = vld [vmem:[%s1 + $0xb8] sm:$0xff]
        %v352 = vld [vmem:[%s2] sm:$0x1]
        %v354 = vlaneseq
        %v355 = vshrl.u32 %v354, 7
        %v356 = vsub.s32 0, %v355
        %v357 = vrot.slane %v352, %v356
        %vm359 = vcmask 523264
        %v361 = vsel %vm359, %v201, 0
        %v364 = vsel %vm359, %v203, 0
        %v367 = vsel %vm359, %v205, 0
        %v370 = vsel %vm359, %v207, 0
        %v373 = vsel %vm359, %v209, 0
        %v376 = vsel %vm359, %v211, 0
        %v379 = vsel %vm359, %v213, 0
        %v382 = vsel %vm359, %v215, 0
        %v385 = vsel %vm359, %v217, 0
        %v388 = vsel %vm359, %v219, 0
        %v391 = vsel %vm359, %v221, 0
        %v394 = vsel %vm359, %v223, 0
        %v397 = vsel %vm359, %v225, 0
        %v400 = vsel %vm359, %v227, 0
        %v403 = vsel %vm359, %v229, 0
        %v406 = vsel %vm359, %v231, 0
        %v409 = vsel %vm359, %v233, 0
        %v412 = vsel %vm359, %v235, 0
        %v415 = vsel %vm359, %v237, 0
        %v418 = vsel %vm359, %v239, 0
        %v421 = vsel %vm359, %v241, 0
        %v424 = vsel %vm359, %v243, 0
        %v427 = vsel %vm359, %v245, 0
        %v430 = vsel %vm359, %v247, 0
        %v433 = vsel %vm359, %v249, 0
        %v436 = vsel %vm359, %v251, 0
        %v439 = vsel %vm359, %v253, 0
        %v442 = vsel %vm359, %v255, 0
        %v445 = vsel %vm359, %v257, 0
        %v448 = vsel %vm359, %v259, 0
        %v451 = vsel %vm359, %v261, 0
        %v454 = vsel %vm359, %v263, 0
        %v457 = vsel %vm359, %v265, 0
        %v460 = vsel %vm359, %v267, 0
        %v463 = vsel %vm359, %v269, 0
        %v466 = vsel %vm359, %v271, 0
        %v469 = vsel %vm359, %v273, 0
        %v472 = vsel %vm359, %v275, 0
        %v475 = vsel %vm359, %v277, 0
        %v478 = vsel %vm359, %v279, 0
        %v481 = vsel %vm359, %v281, 0
        %v484 = vsel %vm359, %v283, 0
        %v487 = vsel %vm359, %v285, 0
        %v490 = vsel %vm359, %v287, 0
        %v493 = vsel %vm359, %v289, 0
        %v496 = vsel %vm359, %v291, 0
        %v499 = vsel %vm359, %v293, 0
        %v502 = vsel %vm359, %v295, 0
        %v505 = vsel %vm359, %v297, 0
        %v508 = vsel %vm359, %v299, 0
        %v511 = vsel %vm359, %v301, 0
        %v514 = vsel %vm359, %v303, 0
        %v517 = vsel %vm359, %v305, 0
        %v520 = vsel %vm359, %v307, 0
        %v523 = vsel %vm359, %v309, 0
        %v526 = vsel %vm359, %v311, 0
        %v529 = vsel %vm359, %v313, 0
        %v532 = vsel %vm359, %v315, 0
        %v535 = vsel %vm359, %v317, 0
        %v538 = vsel %vm359, %v319, 0
        %v541 = vsel %vm359, %v321, 0
        %v544 = vsel %vm359, %v323, 0
        %v547 = vsel %vm359, %v325, 0
        %v550 = vsel %vm359, %v327, 0
        %552 = vmatprep.subr.mxu0 0.0
        %553 = vmatpush1.msra.mxu0 %v343
        %554 = vmatprep.subr.mxu0 0.0
        %555 = vmatpush1.msra.mxu0 %v342
        %556 = vmatprep.subr.mxu0 0.0
        %557 = vmatpush1.msra.mxu0 %v341
        %558 = vmatprep.subr.mxu0 0.0
        %559 = vmatpush1.msra.mxu0 %v340
        %560 = vmatprep.subr.mxu0 0.0
        %561 = vmatpush1.msra.mxu0 %v339
        %562 = vmatprep.subr.mxu0 0.0
        %563 = vmatpush1.msra.mxu0 %v338
        %564 = vmatprep.subr.mxu0 0.0
        %565 = vmatpush1.msra.mxu0 %v337
        %566 = vmatprep.subr.mxu0 0.0
        %567 = vmatpush1.msra.mxu0 %v336
        %568 = vmatprep.subr.mxu0 0.0
        %569 = vmatpush1.msra.mxu0 %v335
        %570 = vmatprep.subr.mxu0 0.0
        %571 = vmatpush1.msra.mxu0 %v334
        %572 = vmatprep.subr.mxu0 0.0
        %573 = vmatpush1.msra.mxu0 %v333
        %574 = vmatprep.subr.mxu0 0.0
        %575 = vmatpush1.msra.mxu0 %v332
        %576 = vmatprep.subr.mxu0 0.0
        %577 = vmatpush1.msra.mxu0 %v331
        %578 = vmatprep.subr.mxu0 0.0
        %579 = vmatpush1.msra.mxu0 %v330
        %580 = vmatprep.subr.mxu0 0.0
        %581 = vmatpush1.msra.mxu0 %v329
        %582 = vmatprep.subr.mxu0 0.0
        %583 = vmatpush1.msra.mxu0 %v328
        %584 = vmatprep.subr.mxu0 0.0
        %585 = vmatpush2.msra.mxu0 0.0
        %586 = vmatprep.subr.mxu0 0.0
        %587 = vmatpush2.msra.mxu0 0.0
        %588 = vmatprep.subr.mxu0 0.0
        %589 = vmatpush2.msra.mxu0 0.0
        %590 = vmatprep.subr.mxu0 0.0
        %591 = vmatpush2.msra.mxu0 0.0
        %592 = vmatprep.subr.mxu0 0.0
        %593 = vmatpush2.msra.mxu0 0.0
        %594 = vmatprep.subr.mxu0 0.0
        %595 = vmatpush2.msra.mxu0 0.0
        %596 = vmatprep.subr.mxu0 0.0
        %597 = vmatpush2.msra.mxu0 0.0
        %598 = vmatprep.subr.mxu0 0.0
        %599 = vmatpush2.msra.mxu0 0.0
        %600 = vmatprep.subr.mxu0 0.0
        %601 = vmatpush2.msra.mxu0 %v351
        %602 = vmatprep.subr.mxu0 0.0
        %603 = vmatpush2.msra.mxu0 %v350
        %604 = vmatprep.subr.mxu0 0.0
        %605 = vmatpush2.msra.mxu0 %v349
        %606 = vmatprep.subr.mxu0 0.0
        %607 = vmatpush2.msra.mxu0 %v348
        %608 = vmatprep.subr.mxu0 0.0
        %609 = vmatpush2.msra.mxu0 %v347
        %610 = vmatprep.subr.mxu0 0.0
        %611 = vmatpush2.msra.mxu0 %v346
        %612 = vmatprep.subr.mxu0 0.0
        %613 = vmatpush2.msra.mxu0 %v345
        %614 = vmatprep.subr.mxu0 0.0
        %615 = vmatpush2.msra.mxu0 %v344
        %616 = vmatprep.mubr.f32.mxu0 %v361
        %617 = vmatmul.mubr.f32.gmra.mxu0 %v200
        %v618 = vpop.f32.mrf.mxu0
        %v619 = vadd.f32 %v357, %v618
        %v620 = vpop.f32.mrf.mxu0
        %621 = vmatprep.mubr.f32.mxu0 %v364
        %622 = vmatmul.mubr.f32.gmra.mxu0 %v202
        %v623 = vpop.f32.mrf.mxu0
        %v624 = vadd.f32 %v357, %v623
        %v625 = vpop.f32.mrf.mxu0
        %626 = vmatprep.mubr.f32.mxu0 %v367
        %627 = vmatmul.mubr.f32.gmra.mxu0 %v204
        %v628 = vpop.f32.mrf.mxu0
        %v629 = vadd.f32 %v357, %v628
        %v630 = vpop.f32.mrf.mxu0
        %631 = vmatprep.mubr.f32.mxu0 %v370
        %632 = vmatmul.mubr.f32.gmra.mxu0 %v206
        %v633 = vpop.f32.mrf.mxu0
        %v634 = vadd.f32 %v357, %v633
        %v635 = vpop.f32.mrf.mxu0
        %636 = vmatprep.mubr.f32.mxu0 %v373
        %637 = vmatmul.mubr.f32.gmra.mxu0 %v208
        %v638 = vpop.f32.mrf.mxu0
        %v639 = vadd.f32 %v357, %v638
        %v640 = vpop.f32.mrf.mxu0
        %641 = vmatprep.mubr.f32.mxu0 %v376
        %642 = vmatmul.mubr.f32.gmra.mxu0 %v210
        %v643 = vpop.f32.mrf.mxu0
        %v644 = vadd.f32 %v357, %v643
        %v645 = vpop.f32.mrf.mxu0
        %646 = vmatprep.mubr.f32.mxu0 %v379
        %647 = vmatmul.mubr.f32.gmra.mxu0 %v212
        %v648 = vpop.f32.mrf.mxu0
        %v649 = vadd.f32 %v357, %v648
        %v650 = vpop.f32.mrf.mxu0
        %651 = vmatprep.mubr.f32.mxu0 %v382
        %652 = vmatmul.mubr.f32.gmra.mxu0 %v214
        %v653 = vpop.f32.mrf.mxu0
        %v654 = vadd.f32 %v357, %v653
        %v655 = vpop.f32.mrf.mxu0
        %656 = vmatprep.mubr.f32.mxu0 %v385
        %657 = vmatmul.mubr.f32.gmra.mxu0 %v216
        %v658 = vpop.f32.mrf.mxu0
        %v659 = vadd.f32 %v357, %v658
        %v660 = vpop.f32.mrf.mxu0
        %661 = vmatprep.mubr.f32.mxu0 %v388
        %662 = vmatmul.mubr.f32.gmra.mxu0 %v218
        %v663 = vpop.f32.mrf.mxu0
        %v664 = vadd.f32 %v357, %v663
        %v665 = vpop.f32.mrf.mxu0
        %666 = vmatprep.mubr.f32.mxu0 %v391
        %667 = vmatmul.mubr.f32.gmra.mxu0 %v220
        %v668 = vpop.f32.mrf.mxu0
        %v669 = vadd.f32 %v357, %v668
        %v670 = vpop.f32.mrf.mxu0
        %671 = vmatprep.mubr.f32.mxu0 %v394
        %672 = vmatmul.mubr.f32.gmra.mxu0 %v222
        %v673 = vpop.f32.mrf.mxu0
        %v674 = vadd.f32 %v357, %v673
        %v675 = vpop.f32.mrf.mxu0
        %676 = vmatprep.mubr.f32.mxu0 %v397
        %677 = vmatmul.mubr.f32.gmra.mxu0 %v224
        %v678 = vpop.f32.mrf.mxu0
        %v679 = vadd.f32 %v357, %v678
        %v680 = vpop.f32.mrf.mxu0
        %681 = vmatprep.mubr.f32.mxu0 %v400
        %682 = vmatmul.mubr.f32.gmra.mxu0 %v226
        %v683 = vpop.f32.mrf.mxu0
        %v684 = vadd.f32 %v357, %v683
        %v685 = vpop.f32.mrf.mxu0
        %686 = vmatprep.mubr.f32.mxu0 %v403
        %687 = vmatmul.mubr.f32.gmra.mxu0 %v228
        %v688 = vpop.f32.mrf.mxu0
        %v689 = vadd.f32 %v357, %v688
        %v690 = vpop.f32.mrf.mxu0
        %691 = vmatprep.mubr.f32.mxu0 %v406
        %692 = vmatmul.mubr.f32.gmra.mxu0 %v230
        %v693 = vpop.f32.mrf.mxu0
        %v694 = vadd.f32 %v357, %v693
        %v695 = vpop.f32.mrf.mxu0
        %696 = vmatprep.mubr.f32.mxu0 %v409
        %697 = vmatmul.mubr.f32.gmra.mxu0 %v232
        %v698 = vpop.f32.mrf.mxu0
        %v699 = vadd.f32 %v357, %v698
        %v700 = vpop.f32.mrf.mxu0
        %701 = vmatprep.mubr.f32.mxu0 %v412
        %702 = vmatmul.mubr.f32.gmra.mxu0 %v234
        %v703 = vpop.f32.mrf.mxu0
        %v704 = vadd.f32 %v357, %v703
        %v705 = vpop.f32.mrf.mxu0
        %706 = vmatprep.mubr.f32.mxu0 %v415
        %707 = vmatmul.mubr.f32.gmra.mxu0 %v236
        %v708 = vpop.f32.mrf.mxu0
        %v709 = vadd.f32 %v357, %v708
        %v710 = vpop.f32.mrf.mxu0
        %711 = vmatprep.mubr.f32.mxu0 %v418
        %712 = vmatmul.mubr.f32.gmra.mxu0 %v238
        %v713 = vpop.f32.mrf.mxu0
        %v714 = vadd.f32 %v357, %v713
        %v715 = vpop.f32.mrf.mxu0
        %716 = vmatprep.mubr.f32.mxu0 %v421
        %717 = vmatmul.mubr.f32.gmra.mxu0 %v240
        %v718 = vpop.f32.mrf.mxu0
        %v719 = vadd.f32 %v357, %v718
        %v720 = vpop.f32.mrf.mxu0
        %721 = vmatprep.mubr.f32.mxu0 %v424
        %722 = vmatmul.mubr.f32.gmra.mxu0 %v242
        %v723 = vpop.f32.mrf.mxu0
        %v724 = vadd.f32 %v357, %v723
        %v725 = vpop.f32.mrf.mxu0
        %726 = vmatprep.mubr.f32.mxu0 %v427
        %727 = vmatmul.mubr.f32.gmra.mxu0 %v244
        %v728 = vpop.f32.mrf.mxu0
        %v729 = vadd.f32 %v357, %v728
        %v730 = vpop.f32.mrf.mxu0
        %731 = vmatprep.mubr.f32.mxu0 %v430
        %732 = vmatmul.mubr.f32.gmra.mxu0 %v246
        %v733 = vpop.f32.mrf.mxu0
        %v734 = vadd.f32 %v357, %v733
        %v735 = vpop.f32.mrf.mxu0
        %736 = vmatprep.mubr.f32.mxu0 %v433
        %737 = vmatmul.mubr.f32.gmra.mxu0 %v248
        %v738 = vpop.f32.mrf.mxu0
        %v739 = vadd.f32 %v357, %v738
        %v740 = vpop.f32.mrf.mxu0
        %741 = vmatprep.mubr.f32.mxu0 %v436
        %742 = vmatmul.mubr.f32.gmra.mxu0 %v250
        %v743 = vpop.f32.mrf.mxu0
        %v744 = vadd.f32 %v357, %v743
        %v745 = vpop.f32.mrf.mxu0
        %746 = vmatprep.mubr.f32.mxu0 %v439
        %747 = vmatmul.mubr.f32.gmra.mxu0 %v252
        %v748 = vpop.f32.mrf.mxu0
        %v749 = vadd.f32 %v357, %v748
        %v750 = vpop.f32.mrf.mxu0
        %751 = vmatprep.mubr.f32.mxu0 %v442
        %752 = vmatmul.mubr.f32.gmra.mxu0 %v254
        %v753 = vpop.f32.mrf.mxu0
        %v754 = vadd.f32 %v357, %v753
        %v755 = vpop.f32.mrf.mxu0
        %756 = vmatprep.mubr.f32.mxu0 %v445
        %757 = vmatmul.mubr.f32.gmra.mxu0 %v256
        %v758 = vpop.f32.mrf.mxu0
        %v759 = vadd.f32 %v357, %v758
        %v760 = vpop.f32.mrf.mxu0
        %761 = vmatprep.mubr.f32.mxu0 %v448
        %762 = vmatmul.mubr.f32.gmra.mxu0 %v258
        %v763 = vpop.f32.mrf.mxu0
        %v764 = vadd.f32 %v357, %v763
        %v765 = vpop.f32.mrf.mxu0
        %766 = vmatprep.mubr.f32.mxu0 %v451
        %767 = vmatmul.mubr.f32.gmra.mxu0 %v260
        %v768 = vpop.f32.mrf.mxu0
        %v769 = vadd.f32 %v357, %v768
        %v770 = vpop.f32.mrf.mxu0
        %771 = vmatprep.mubr.f32.mxu0 %v454
        %772 = vmatmul.mubr.f32.gmra.mxu0 %v262
        %v773 = vpop.f32.mrf.mxu0
        %v774 = vadd.f32 %v357, %v773
        %v775 = vpop.f32.mrf.mxu0
        %776 = vmatprep.mubr.f32.mxu0 %v457
        %777 = vmatmul.mubr.f32.gmra.mxu0 %v264
        %v778 = vpop.f32.mrf.mxu0
        %v779 = vadd.f32 %v357, %v778
        %v780 = vpop.f32.mrf.mxu0
        %781 = vmatprep.mubr.f32.mxu0 %v460
        %782 = vmatmul.mubr.f32.gmra.mxu0 %v266
        %v783 = vpop.f32.mrf.mxu0
        %v784 = vadd.f32 %v357, %v783
        %v785 = vpop.f32.mrf.mxu0
        %786 = vmatprep.mubr.f32.mxu0 %v463
        %787 = vmatmul.mubr.f32.gmra.mxu0 %v268
        %v788 = vpop.f32.mrf.mxu0
        %v789 = vadd.f32 %v357, %v788
        %v790 = vpop.f32.mrf.mxu0
        %791 = vmatprep.mubr.f32.mxu0 %v466
        %792 = vmatmul.mubr.f32.gmra.mxu0 %v270
        %v793 = vpop.f32.mrf.mxu0
        %v794 = vadd.f32 %v357, %v793
        %v795 = vpop.f32.mrf.mxu0
        %796 = vmatprep.mubr.f32.mxu0 %v469
        %797 = vmatmul.mubr.f32.gmra.mxu0 %v272
        %v798 = vpop.f32.mrf.mxu0
        %v799 = vadd.f32 %v357, %v798
        %v800 = vpop.f32.mrf.mxu0
        %801 = vmatprep.mubr.f32.mxu0 %v472
        %802 = vmatmul.mubr.f32.gmra.mxu0 %v274
        %v803 = vpop.f32.mrf.mxu0
        %v804 = vadd.f32 %v357, %v803
        %v805 = vpop.f32.mrf.mxu0
        %806 = vmatprep.mubr.f32.mxu0 %v475
        %807 = vmatmul.mubr.f32.gmra.mxu0 %v276
        %v808 = vpop.f32.mrf.mxu0
        %v809 = vadd.f32 %v357, %v808
        %v810 = vpop.f32.mrf.mxu0
        %811 = vmatprep.mubr.f32.mxu0 %v478
        %812 = vmatmul.mubr.f32.gmra.mxu0 %v278
        %v813 = vpop.f32.mrf.mxu0
        %v814 = vadd.f32 %v357, %v813
        %v815 = vpop.f32.mrf.mxu0
        %816 = vmatprep.mubr.f32.mxu0 %v481
        %817 = vmatmul.mubr.f32.gmra.mxu0 %v280
        %v818 = vpop.f32.mrf.mxu0
        %v819 = vadd.f32 %v357, %v818
        %v820 = vpop.f32.mrf.mxu0
        %821 = vmatprep.mubr.f32.mxu0 %v484
        %822 = vmatmul.mubr.f32.gmra.mxu0 %v282
        %v823 = vpop.f32.mrf.mxu0
        %v824 = vadd.f32 %v357, %v823
        %v825 = vpop.f32.mrf.mxu0
        %826 = vmatprep.mubr.f32.mxu0 %v487
        %827 = vmatmul.mubr.f32.gmra.mxu0 %v284
        %v828 = vpop.f32.mrf.mxu0
        %v829 = vadd.f32 %v357, %v828
        %v830 = vpop.f32.mrf.mxu0
        %831 = vmatprep.mubr.f32.mxu0 %v490
        %832 = vmatmul.mubr.f32.gmra.mxu0 %v286
        %v833 = vpop.f32.mrf.mxu0
        %v834 = vadd.f32 %v357, %v833
        %v835 = vpop.f32.mrf.mxu0
        %836 = vmatprep.mubr.f32.mxu0 %v493
        %837 = vmatmul.mubr.f32.gmra.mxu0 %v288
        %v838 = vpop.f32.mrf.mxu0
        %v839 = vadd.f32 %v357, %v838
        %v840 = vpop.f32.mrf.mxu0
        %841 = vmatprep.mubr.f32.mxu0 %v496
        %842 = vmatmul.mubr.f32.gmra.mxu0 %v290
        %v843 = vpop.f32.mrf.mxu0
        %v844 = vadd.f32 %v357, %v843
        %v845 = vpop.f32.mrf.mxu0
        %846 = vmatprep.mubr.f32.mxu0 %v499
        %847 = vmatmul.mubr.f32.gmra.mxu0 %v292
        %v848 = vpop.f32.mrf.mxu0
        %v849 = vadd.f32 %v357, %v848
        %v850 = vpop.f32.mrf.mxu0
        %851 = vmatprep.mubr.f32.mxu0 %v502
        %852 = vmatmul.mubr.f32.gmra.mxu0 %v294
        %v853 = vpop.f32.mrf.mxu0
        %v854 = vadd.f32 %v357, %v853
        %v855 = vpop.f32.mrf.mxu0
        %856 = vmatprep.mubr.f32.mxu0 %v505
        %857 = vmatmul.mubr.f32.gmra.mxu0 %v296
        %v858 = vpop.f32.mrf.mxu0
        %v859 = vadd.f32 %v357, %v858
        %v860 = vpop.f32.mrf.mxu0
        %861 = vmatprep.mubr.f32.mxu0 %v508
        %862 = vmatmul.mubr.f32.gmra.mxu0 %v298
        %v863 = vpop.f32.mrf.mxu0
        %v864 = vadd.f32 %v357, %v863
        %v865 = vpop.f32.mrf.mxu0
        %866 = vmatprep.mubr.f32.mxu0 %v511
        %867 = vmatmul.mubr.f32.gmra.mxu0 %v300
        %v868 = vpop.f32.mrf.mxu0
        %v869 = vadd.f32 %v357, %v868
        %v870 = vpop.f32.mrf.mxu0
        %871 = vmatprep.mubr.f32.mxu0 %v514
        %872 = vmatmul.mubr.f32.gmra.mxu0 %v302
        %v873 = vpop.f32.mrf.mxu0
        %v874 = vadd.f32 %v357, %v873
        %v875 = vpop.f32.mrf.mxu0
        %876 = vmatprep.mubr.f32.mxu0 %v517
        %877 = vmatmul.mubr.f32.gmra.mxu0 %v304
        %v878 = vpop.f32.mrf.mxu0
        %v879 = vadd.f32 %v357, %v878
        %v880 = vpop.f32.mrf.mxu0
        %881 = vmatprep.mubr.f32.mxu0 %v520
        %882 = vmatmul.mubr.f32.gmra.mxu0 %v306
        %v883 = vpop.f32.mrf.mxu0
        %v884 = vadd.f32 %v357, %v883
        %v885 = vpop.f32.mrf.mxu0
        %886 = vmatprep.mubr.f32.mxu0 %v523
        %887 = vmatmul.mubr.f32.gmra.mxu0 %v308
        %v888 = vpop.f32.mrf.mxu0
        %v889 = vadd.f32 %v357, %v888
        %v890 = vpop.f32.mrf.mxu0
        %891 = vmatprep.mubr.f32.mxu0 %v526
        %892 = vmatmul.mubr.f32.gmra.mxu0 %v310
        %v893 = vpop.f32.mrf.mxu0
        %v894 = vadd.f32 %v357, %v893
        %v895 = vpop.f32.mrf.mxu0
        %896 = vmatprep.mubr.f32.mxu0 %v529
        %897 = vmatmul.mubr.f32.gmra.mxu0 %v312
        %v898 = vpop.f32.mrf.mxu0
        %v899 = vadd.f32 %v357, %v898
        %v900 = vpop.f32.mrf.mxu0
        %901 = vmatprep.mubr.f32.mxu0 %v532
        %902 = vmatmul.mubr.f32.gmra.mxu0 %v314
        %v903 = vpop.f32.mrf.mxu0
        %v904 = vadd.f32 %v357, %v903
        %v905 = vpop.f32.mrf.mxu0
        %906 = vmatprep.mubr.f32.mxu0 %v535
        %907 = vmatmul.mubr.f32.gmra.mxu0 %v316
        %v908 = vpop.f32.mrf.mxu0
        %v909 = vadd.f32 %v357, %v908
        %v910 = vpop.f32.mrf.mxu0
        %911 = vmatprep.mubr.f32.mxu0 %v538
        %912 = vmatmul.mubr.f32.gmra.mxu0 %v318
        %v913 = vpop.f32.mrf.mxu0
        %v914 = vadd.f32 %v357, %v913
        %v915 = vpop.f32.mrf.mxu0
        %916 = vmatprep.mubr.f32.mxu0 %v541
        %917 = vmatmul.mubr.f32.gmra.mxu0 %v320
        %v918 = vpop.f32.mrf.mxu0
        %v919 = vadd.f32 %v357, %v918
        %v920 = vpop.f32.mrf.mxu0
        %921 = vmatprep.mubr.f32.mxu0 %v544
        %922 = vmatmul.mubr.f32.gmra.mxu0 %v322
        %v923 = vpop.f32.mrf.mxu0
        %v924 = vadd.f32 %v357, %v923
        %v925 = vpop.f32.mrf.mxu0
        %926 = vmatprep.mubr.f32.mxu0 %v547
        %927 = vmatmul.mubr.f32.gmra.mxu0 %v324
        %v928 = vpop.f32.mrf.mxu0
        %v929 = vadd.f32 %v357, %v928
        %v930 = vpop.f32.mrf.mxu0
        %931 = vmatprep.mubr.f32.mxu0 %v550
        %932 = vmatmul.mubr.f32.gmra.mxu0 %v326
        %v933 = vpop.f32.mrf.mxu0
        %v934 = vadd.f32 %v357, %v933
        %v935 = vpop.f32.mrf.mxu0
        %936 = vdwg.mxu0
        %v937 = vmax.f32 %v619, 0.0
        %v938 = vmax.f32 %v624, 0.0
        %v939 = vmax.f32 %v629, 0.0
        %v940 = vmax.f32 %v634, 0.0
        %v941 = vmax.f32 %v639, 0.0
        %v942 = vmax.f32 %v644, 0.0
        %v943 = vmax.f32 %v649, 0.0
        %v944 = vmax.f32 %v654, 0.0
        %v945 = vmax.f32 %v659, 0.0
        %v946 = vmax.f32 %v664, 0.0
        %v947 = vmax.f32 %v669, 0.0
        %v948 = vmax.f32 %v674, 0.0
        %v949 = vmax.f32 %v679, 0.0
        %v950 = vmax.f32 %v684, 0.0
        %v951 = vmax.f32 %v689, 0.0
        %v952 = vmax.f32 %v694, 0.0
        %v953 = vmax.f32 %v699, 0.0
        %v954 = vmax.f32 %v704, 0.0
        %v955 = vmax.f32 %v709, 0.0
        %v956 = vmax.f32 %v714, 0.0
        %v957 = vmax.f32 %v719, 0.0
        %v958 = vmax.f32 %v724, 0.0
        %v959 = vmax.f32 %v729, 0.0
        %v960 = vmax.f32 %v734, 0.0
        %v961 = vmax.f32 %v739, 0.0
        %v962 = vmax.f32 %v744, 0.0
        %v963 = vmax.f32 %v749, 0.0
        %v964 = vmax.f32 %v754, 0.0
        %v965 = vmax.f32 %v759, 0.0
        %v966 = vmax.f32 %v764, 0.0
        %v967 = vmax.f32 %v769, 0.0
        %v968 = vmax.f32 %v774, 0.0
        %v969 = vmax.f32 %v779, 0.0
        %v970 = vmax.f32 %v784, 0.0
        %v971 = vmax.f32 %v789, 0.0
        %v972 = vmax.f32 %v794, 0.0
        %v973 = vmax.f32 %v799, 0.0
        %v974 = vmax.f32 %v804, 0.0
        %v975 = vmax.f32 %v809, 0.0
        %v976 = vmax.f32 %v814, 0.0
        %v977 = vmax.f32 %v819, 0.0
        %v978 = vmax.f32 %v824, 0.0
        %v979 = vmax.f32 %v829, 0.0
        %v980 = vmax.f32 %v834, 0.0
        %v981 = vmax.f32 %v839, 0.0
        %v982 = vmax.f32 %v844, 0.0
        %v983 = vmax.f32 %v849, 0.0
        %v984 = vmax.f32 %v854, 0.0
        %v985 = vmax.f32 %v859, 0.0
        %v986 = vmax.f32 %v864, 0.0
        %v987 = vmax.f32 %v869, 0.0
        %v988 = vmax.f32 %v874, 0.0
        %v989 = vmax.f32 %v879, 0.0
        %v990 = vmax.f32 %v884, 0.0
        %v991 = vmax.f32 %v889, 0.0
        %v992 = vmax.f32 %v894, 0.0
        %v993 = vmax.f32 %v899, 0.0
        %v994 = vmax.f32 %v904, 0.0
        %v995 = vmax.f32 %v909, 0.0
        %v996 = vmax.f32 %v914, 0.0
        %v997 = vmax.f32 %v919, 0.0
        %v998 = vmax.f32 %v924, 0.0
        %v999 = vmax.f32 %v929, 0.0
        %v1000 = vmax.f32 %v934, 0.0
        %vm1001 = vcmask 261120
        %1002 = vst.msk [vmem:[%s177] sm:$0xff] %vm1001, %v937
        %1003 = vst.msk [vmem:[%s177 + $0x8] sm:$0xff] %vm1001, %v938
        %1004 = vst.msk [vmem:[%s177 + $0x10] sm:$0xff] %vm1001, %v939
        %1005 = vst.msk [vmem:[%s177 + $0x18] sm:$0xff] %vm1001, %v940
        %1006 = vst.msk [vmem:[%s177 + $0x20] sm:$0xff] %vm1001, %v941
        %1007 = vst.msk [vmem:[%s177 + $0x28] sm:$0xff] %vm1001, %v942
        %1008 = vst.msk [vmem:[%s177 + $0x30] sm:$0xff] %vm1001, %v943
        %1009 = vst.msk [vmem:[%s177 + $0x38] sm:$0xff] %vm1001, %v944
        %1010 = vst.msk [vmem:[%s177 + $0x40] sm:$0xff] %vm1001, %v945
        %1011 = vst.msk [vmem:[%s177 + $0x48] sm:$0xff] %vm1001, %v946
        %1012 = vst.msk [vmem:[%s177 + $0x50] sm:$0xff] %vm1001, %v947
        %1013 = vst.msk [vmem:[%s177 + $0x58] sm:$0xff] %vm1001, %v948
        %1014 = vst.msk [vmem:[%s177 + $0x60] sm:$0xff] %vm1001, %v949
        %1015 = vst.msk [vmem:[%s177 + $0x68] sm:$0xff] %vm1001, %v950
        %1016 = vst.msk [vmem:[%s177 + $0x70] sm:$0xff] %vm1001, %v951
        %1017 = vst.msk [vmem:[%s177 + $0x78] sm:$0xff] %vm1001, %v952
        %1018 = vst.msk [vmem:[%s177 + $0x80] sm:$0xff] %vm1001, %v953
        %1019 = vst.msk [vmem:[%s177 + $0x88] sm:$0xff] %vm1001, %v954
        %1020 = vst.msk [vmem:[%s177 + $0x90] sm:$0xff] %vm1001, %v955
        %1021 = vst.msk [vmem:[%s177 + $0x98] sm:$0xff] %vm1001, %v956
        %1022 = vst.msk [vmem:[%s177 + $0xa0] sm:$0xff] %vm1001, %v957
        %1023 = vst.msk [vmem:[%s177 + $0xa8] sm:$0xff] %vm1001, %v958
        %1024 = vst.msk [vmem:[%s177 + $0xb0] sm:$0xff] %vm1001, %v959
        %1025 = vst.msk [vmem:[%s177 + $0xb8] sm:$0xff] %vm1001, %v960
        %1026 = vst.msk [vmem:[%s177 + $0xc0] sm:$0xff] %vm1001, %v961
        %1027 = vst.msk [vmem:[%s177 + $0xc8] sm:$0xff] %vm1001, %v962
        %1028 = vst.msk [vmem:[%s177 + $0xd0] sm:$0xff] %vm1001, %v963
        %1029 = vst.msk [vmem:[%s177 + $0xd8] sm:$0xff] %vm1001, %v964
        %1030 = vst.msk [vmem:[%s177 + $0xe0] sm:$0xff] %vm1001, %v965
        %1031 = vst.msk [vmem:[%s177 + $0xe8] sm:$0xff] %vm1001, %v966
        %1032 = vst.msk [vmem:[%s177 + $0xf0] sm:$0xff] %vm1001, %v967
        %1033 = vst.msk [vmem:[%s177 + $0xf8] sm:$0xff] %vm1001, %v968
        %1034 = vst.msk [vmem:[%s177 + $0x100] sm:$0xff] %vm1001, %v969
        %1035 = vst.msk [vmem:[%s177 + $0x108] sm:$0xff] %vm1001, %v970
        %1036 = vst.msk [vmem:[%s177 + $0x110] sm:$0xff] %vm1001, %v971
        %1037 = vst.msk [vmem:[%s177 + $0x118] sm:$0xff] %vm1001, %v972
        %1038 = vst.msk [vmem:[%s177 + $0x120] sm:$0xff] %vm1001, %v973
        %1039 = vst.msk [vmem:[%s177 + $0x128] sm:$0xff] %vm1001, %v974
        %1040 = vst.msk [vmem:[%s177 + $0x130] sm:$0xff] %vm1001, %v975
        %1041 = vst.msk [vmem:[%s177 + $0x138] sm:$0xff] %vm1001, %v976
        %1042 = vst.msk [vmem:[%s177 + $0x140] sm:$0xff] %vm1001, %v977
        %1043 = vst.msk [vmem:[%s177 + $0x148] sm:$0xff] %vm1001, %v978
        %1044 = vst.msk [vmem:[%s177 + $0x150] sm:$0xff] %vm1001, %v979
        %1045 = vst.msk [vmem:[%s177 + $0x158] sm:$0xff] %vm1001, %v980
        %1046 = vst.msk [vmem:[%s177 + $0x160] sm:$0xff] %vm1001, %v981
        %1047 = vst.msk [vmem:[%s177 + $0x168] sm:$0xff] %vm1001, %v982
        %1048 = vst.msk [vmem:[%s177 + $0x170] sm:$0xff] %vm1001, %v983
        %1049 = vst.msk [vmem:[%s177 + $0x178] sm:$0xff] %vm1001, %v984
        %1050 = vst.msk [vmem:[%s177 + $0x180] sm:$0xff] %vm1001, %v985
        %1051 = vst.msk [vmem:[%s177 + $0x188] sm:$0xff] %vm1001, %v986
        %1052 = vst.msk [vmem:[%s177 + $0x190] sm:$0xff] %vm1001, %v987
        %1053 = vst.msk [vmem:[%s177 + $0x198] sm:$0xff] %vm1001, %v988
        %1054 = vst.msk [vmem:[%s177 + $0x1a0] sm:$0xff] %vm1001, %v989
        %1055 = vst.msk [vmem:[%s177 + $0x1a8] sm:$0xff] %vm1001, %v990
        %1056 = vst.msk [vmem:[%s177 + $0x1b0] sm:$0xff] %vm1001, %v991
        %1057 = vst.msk [vmem:[%s177 + $0x1b8] sm:$0xff] %vm1001, %v992
        %1058 = vst.msk [vmem:[%s177 + $0x1c0] sm:$0xff] %vm1001, %v993
        %1059 = vst.msk [vmem:[%s177 + $0x1c8] sm:$0xff] %vm1001, %v994
        %1060 = vst.msk [vmem:[%s177 + $0x1d0] sm:$0xff] %vm1001, %v995
        %1061 = vst.msk [vmem:[%s177 + $0x1d8] sm:$0xff] %vm1001, %v996
        %1062 = vst.msk [vmem:[%s177 + $0x1e0] sm:$0xff] %vm1001, %v997
        %1063 = vst.msk [vmem:[%s177 + $0x1e8] sm:$0xff] %vm1001, %v998
        %1064 = vst.msk [vmem:[%s177 + $0x1f0] sm:$0xff] %vm1001, %v999
        %1065 = vst.msk [vmem:[%s177 + $0x1f8] sm:$0xff] %vm1001, %v1000
        %s1066 = sand.u32 %s90, 1
        %s1067 = sand.u32 %s90, 1
        %s1068 = smul.addr %s1067, 512
        %s1069 = scalar_lea.vmem [#allocation2], %s1068
        // Predicated region
        $region33: #{dqn_forward.4} parent=31 // pred_check
          %p1070 = pneg %p100
        $region34: #{dqn_forward.4} parent=31 // pred_check_branch
          %1072 = sbr.rel (%p1070) target = $region36
        $region35: #{dqn_forward.4} parent=31 // pred_region
          %s1073 = smul.u32 64, %s14
          %s1074 = ssub.s32 133, %s1073
          %p1075 = scmp.lt.s32.totalorder %s1074, 64
          %s1076 = scalar_select %p1075, %s1074, 64
          %s1077 = smul.u32 128, %s1076
          %p1078 = scmp.ne.s32.totalorder 0, %s1077
          %s1079 = smul.addr %s1073, 8
          %s1080 = scalar_lea.vmem %s3, %s1079
          // Predicated region
          $region37: #{dqn_forward.4} parent=35 // pred_check
            %p1081 = pneg %p1078
          $region38: #{dqn_forward.4} parent=35 // pred_check_branch
            %1083 = sbr.rel (%p1081) target = $region40
          $region39: #{dqn_forward.4} parent=35 // pred_region
            // Predicated region
            $region41: #{dqn_forward.4} parent=39 // pred_check
              _
            $region42: #{dqn_forward.4} parent=39 // pred_check_branch
              %1085 = sbr.rel (0) target = $region44
            $region43: #{dqn_forward.4} parent=39 // pred_region
              // Predicated region
              $region63: #{dqn_forward.4} parent=43 // pred_check
                _
              $region64: #{dqn_forward.4} parent=43 // pred_check_branch
                %1261 = sbr.rel (0) target = $region66
              $region65: #{dqn_forward.4} parent=43 // pred_region
                %s1262 = sshrl.u32 %s1076, 6
                // While loop
                $region67: #{dqn_forward.4} parent=65 // loop_pre_header
                  _
                $region68: #{dqn_forward.4} parent=65 // loop_header
                  %s1264 = sphi 0, %s1266
                  %p1265 = scmp.ge.s32.totalorder %s1264, %s1262
                  %s1269 = sphi 0, %s1402
                  %s1270 = sphi %s1069, %s1405
                  %s1271 = sphi %s1080, %s1406
                $region69: #{dqn_forward.4} parent=65 // loop_header_branch
                  %1268 = sbr.rel (%p1265) target = $region73
                $region70: #{dqn_forward.4} parent=65 // loop_body
                  %v1272 = vld [vmem:[%s1270] sm:$0xff]
                  %1273 = vst [vmem:[%s1271] sm:$0xff] %v1272
                  %v1274 = vld [vmem:[%s1270 + $0x8] sm:$0xff]
                  %1275 = vst [vmem:[%s1271 + $0x8] sm:$0xff] %v1274
                  %v1276 = vld [vmem:[%s1270 + $0x10] sm:$0xff]
                  %1277 = vst [vmem:[%s1271 + $0x10] sm:$0xff] %v1276
                  %v1278 = vld [vmem:[%s1270 + $0x18] sm:$0xff]
                  %1279 = vst [vmem:[%s1271 + $0x18] sm:$0xff] %v1278
                  %v1280 = vld [vmem:[%s1270 + $0x20] sm:$0xff]
                  %1281 = vst [vmem:[%s1271 + $0x20] sm:$0xff] %v1280
                  %v1282 = vld [vmem:[%s1270 + $0x28] sm:$0xff]
                  %1283 = vst [vmem:[%s1271 + $0x28] sm:$0xff] %v1282
                  %v1284 = vld [vmem:[%s1270 + $0x30] sm:$0xff]
                  %1285 = vst [vmem:[%s1271 + $0x30] sm:$0xff] %v1284
                  %v1286 = vld [vmem:[%s1270 + $0x38] sm:$0xff]
                  %1287 = vst [vmem:[%s1271 + $0x38] sm:$0xff] %v1286
                  %v1288 = vld [vmem:[%s1270 + $0x40] sm:$0xff]
                  %1289 = vst [vmem:[%s1271 + $0x40] sm:$0xff] %v1288
                  %v1290 = vld [vmem:[%s1270 + $0x48] sm:$0xff]
                  %1291 = vst [vmem:[%s1271 + $0x48] sm:$0xff] %v1290
                  %v1292 = vld [vmem:[%s1270 + $0x50] sm:$0xff]
                  %1293 = vst [vmem:[%s1271 + $0x50] sm:$0xff] %v1292
                  %v1294 = vld [vmem:[%s1270 + $0x58] sm:$0xff]
                  %1295 = vst [vmem:[%s1271 + $0x58] sm:$0xff] %v1294
                  %v1296 = vld [vmem:[%s1270 + $0x60] sm:$0xff]
                  %1297 = vst [vmem:[%s1271 + $0x60] sm:$0xff] %v1296
                  %v1298 = vld [vmem:[%s1270 + $0x68] sm:$0xff]
                  %1299 = vst [vmem:[%s1271 + $0x68] sm:$0xff] %v1298
                  %v1300 = vld [vmem:[%s1270 + $0x70] sm:$0xff]
                  %1301 = vst [vmem:[%s1271 + $0x70] sm:$0xff] %v1300
                  %v1302 = vld [vmem:[%s1270 + $0x78] sm:$0xff]
                  %1303 = vst [vmem:[%s1271 + $0x78] sm:$0xff] %v1302
                  %v1304 = vld [vmem:[%s1270 + $0x80] sm:$0xff]
                  %1305 = vst [vmem:[%s1271 + $0x80] sm:$0xff] %v1304
                  %v1306 = vld [vmem:[%s1270 + $0x88] sm:$0xff]
                  %1307 = vst [vmem:[%s1271 + $0x88] sm:$0xff] %v1306
                  %v1308 = vld [vmem:[%s1270 + $0x90] sm:$0xff]
                  %1309 = vst [vmem:[%s1271 + $0x90] sm:$0xff] %v1308
                  %v1310 = vld [vmem:[%s1270 + $0x98] sm:$0xff]
                  %1311 = vst [vmem:[%s1271 + $0x98] sm:$0xff] %v1310
                  %v1312 = vld [vmem:[%s1270 + $0xa0] sm:$0xff]
                  %1313 = vst [vmem:[%s1271 + $0xa0] sm:$0xff] %v1312
                  %v1314 = vld [vmem:[%s1270 + $0xa8] sm:$0xff]
                  %1315 = vst [vmem:[%s1271 + $0xa8] sm:$0xff] %v1314
                  %v1316 = vld [vmem:[%s1270 + $0xb0] sm:$0xff]
                  %1317 = vst [vmem:[%s1271 + $0xb0] sm:$0xff] %v1316
                  %v1318 = vld [vmem:[%s1270 + $0xb8] sm:$0xff]
                  %1319 = vst [vmem:[%s1271 + $0xb8] sm:$0xff] %v1318
                  %v1320 = vld [vmem:[%s1270 + $0xc0] sm:$0xff]
                  %1321 = vst [vmem:[%s1271 + $0xc0] sm:$0xff] %v1320
                  %v1322 = vld [vmem:[%s1270 + $0xc8] sm:$0xff]
                  %1323 = vst [vmem:[%s1271 + $0xc8] sm:$0xff] %v1322
                  %v1324 = vld [vmem:[%s1270 + $0xd0] sm:$0xff]
                  %1325 = vst [vmem:[%s1271 + $0xd0] sm:$0xff] %v1324
                  %v1326 = vld [vmem:[%s1270 + $0xd8] sm:$0xff]
                  %1327 = vst [vmem:[%s1271 + $0xd8] sm:$0xff] %v1326
                  %v1328 = vld [vmem:[%s1270 + $0xe0] sm:$0xff]
                  %1329 = vst [vmem:[%s1271 + $0xe0] sm:$0xff] %v1328
                  %v1330 = vld [vmem:[%s1270 + $0xe8] sm:$0xff]
                  %1331 = vst [vmem:[%s1271 + $0xe8] sm:$0xff] %v1330
                  %v1332 = vld [vmem:[%s1270 + $0xf0] sm:$0xff]
                  %1333 = vst [vmem:[%s1271 + $0xf0] sm:$0xff] %v1332
                  %v1334 = vld [vmem:[%s1270 + $0xf8] sm:$0xff]
                  %1335 = vst [vmem:[%s1271 + $0xf8] sm:$0xff] %v1334
                  %v1336 = vld [vmem:[%s1270 + $0x100] sm:$0xff]
                  %1337 = vst [vmem:[%s1271 + $0x100] sm:$0xff] %v1336
                  %v1338 = vld [vmem:[%s1270 + $0x108] sm:$0xff]
                  %1339 = vst [vmem:[%s1271 + $0x108] sm:$0xff] %v1338
                  %v1340 = vld [vmem:[%s1270 + $0x110] sm:$0xff]
                  %1341 = vst [vmem:[%s1271 + $0x110] sm:$0xff] %v1340
                  %v1342 = vld [vmem:[%s1270 + $0x118] sm:$0xff]
                  %1343 = vst [vmem:[%s1271 + $0x118] sm:$0xff] %v1342
                  %v1344 = vld [vmem:[%s1270 + $0x120] sm:$0xff]
                  %1345 = vst [vmem:[%s1271 + $0x120] sm:$0xff] %v1344
                  %v1346 = vld [vmem:[%s1270 + $0x128] sm:$0xff]
                  %1347 = vst [vmem:[%s1271 + $0x128] sm:$0xff] %v1346
                  %v1348 = vld [vmem:[%s1270 + $0x130] sm:$0xff]
                  %1349 = vst [vmem:[%s1271 + $0x130] sm:$0xff] %v1348
                  %v1350 = vld [vmem:[%s1270 + $0x138] sm:$0xff]
                  %1351 = vst [vmem:[%s1271 + $0x138] sm:$0xff] %v1350
                  %v1352 = vld [vmem:[%s1270 + $0x140] sm:$0xff]
                  %1353 = vst [vmem:[%s1271 + $0x140] sm:$0xff] %v1352
                  %v1354 = vld [vmem:[%s1270 + $0x148] sm:$0xff]
                  %1355 = vst [vmem:[%s1271 + $0x148] sm:$0xff] %v1354
                  %v1356 = vld [vmem:[%s1270 + $0x150] sm:$0xff]
                  %1357 = vst [vmem:[%s1271 + $0x150] sm:$0xff] %v1356
                  %v1358 = vld [vmem:[%s1270 + $0x158] sm:$0xff]
                  %1359 = vst [vmem:[%s1271 + $0x158] sm:$0xff] %v1358
                  %v1360 = vld [vmem:[%s1270 + $0x160] sm:$0xff]
                  %1361 = vst [vmem:[%s1271 + $0x160] sm:$0xff] %v1360
                  %v1362 = vld [vmem:[%s1270 + $0x168] sm:$0xff]
                  %1363 = vst [vmem:[%s1271 + $0x168] sm:$0xff] %v1362
                  %v1364 = vld [vmem:[%s1270 + $0x170] sm:$0xff]
                  %1365 = vst [vmem:[%s1271 + $0x170] sm:$0xff] %v1364
                  %v1366 = vld [vmem:[%s1270 + $0x178] sm:$0xff]
                  %1367 = vst [vmem:[%s1271 + $0x178] sm:$0xff] %v1366
                  %v1368 = vld [vmem:[%s1270 + $0x180] sm:$0xff]
                  %1369 = vst [vmem:[%s1271 + $0x180] sm:$0xff] %v1368
                  %v1370 = vld [vmem:[%s1270 + $0x188] sm:$0xff]
                  %1371 = vst [vmem:[%s1271 + $0x188] sm:$0xff] %v1370
                  %v1372 = vld [vmem:[%s1270 + $0x190] sm:$0xff]
                  %1373 = vst [vmem:[%s1271 + $0x190] sm:$0xff] %v1372
                  %v1374 = vld [vmem:[%s1270 + $0x198] sm:$0xff]
                  %1375 = vst [vmem:[%s1271 + $0x198] sm:$0xff] %v1374
                  %v1376 = vld [vmem:[%s1270 + $0x1a0] sm:$0xff]
                  %1377 = vst [vmem:[%s1271 + $0x1a0] sm:$0xff] %v1376
                  %v1378 = vld [vmem:[%s1270 + $0x1a8] sm:$0xff]
                  %1379 = vst [vmem:[%s1271 + $0x1a8] sm:$0xff] %v1378
                  %v1380 = vld [vmem:[%s1270 + $0x1b0] sm:$0xff]
                  %1381 = vst [vmem:[%s1271 + $0x1b0] sm:$0xff] %v1380
                  %v1382 = vld [vmem:[%s1270 + $0x1b8] sm:$0xff]
                  %1383 = vst [vmem:[%s1271 + $0x1b8] sm:$0xff] %v1382
                  %v1384 = vld [vmem:[%s1270 + $0x1c0] sm:$0xff]
                  %1385 = vst [vmem:[%s1271 + $0x1c0] sm:$0xff] %v1384
                  %v1386 = vld [vmem:[%s1270 + $0x1c8] sm:$0xff]
                  %1387 = vst [vmem:[%s1271 + $0x1c8] sm:$0xff] %v1386
                  %v1388 = vld [vmem:[%s1270 + $0x1d0] sm:$0xff]
                  %1389 = vst [vmem:[%s1271 + $0x1d0] sm:$0xff] %v1388
                  %v1390 = vld [vmem:[%s1270 + $0x1d8] sm:$0xff]
                  %1391 = vst [vmem:[%s1271 + $0x1d8] sm:$0xff] %v1390
                  %v1392 = vld [vmem:[%s1270 + $0x1e0] sm:$0xff]
                  %1393 = vst [vmem:[%s1271 + $0x1e0] sm:$0xff] %v1392
                  %v1394 = vld [vmem:[%s1270 + $0x1e8] sm:$0xff]
                  %1395 = vst [vmem:[%s1271 + $0x1e8] sm:$0xff] %v1394
                  %v1396 = vld [vmem:[%s1270 + $0x1f0] sm:$0xff]
                  %1397 = vst [vmem:[%s1271 + $0x1f0] sm:$0xff] %v1396
                  %v1398 = vld [vmem:[%s1270 + $0x1f8] sm:$0xff]
                  %1399 = vst [vmem:[%s1271 + $0x1f8] sm:$0xff] %v1398
                  %s1400 = sadd.s32 1, %s1269
                  %p1401 = scmp.ge.s32.totalorder %s1400, %s1262
                  %s1402 = scalar_select %p1401, 0, %s1400
                  %s1403 = smul.u32 %s1402, 512
                  %s1404 = smul.u32 %s1402, 512
                  %s1405 = scalar_lea.vmem %s1069, %s1403 [#allocation2]
                  %s1406 = scalar_lea.vmem %s1080, %s1404
                $region71: #{dqn_forward.4} parent=65 // loop_footer
                  %s1266 = sadd.s32 %s1264, 1
                $region72: #{dqn_forward.4} parent=65 // loop_footer_branch
                  %1263 = sbr.rel target = $region68
                $region73: #{dqn_forward.4} parent=65 // loop_exit
                  _
                %s1407 = sshrl.u32 %s1076, 6
                %s1408 = sand.u32 %s1076, 63
                %s1409 = smul.u32 %s1407, 64
                %s1410 = smul.u32 8, %s1409
                %s1411 = scalar_lea.vmem %s1069, %s1410 [#allocation2]
                %s1412 = smul.u32 8, %s1409
                %s1413 = scalar_lea.vmem %s1080, %s1412
                // While loop
                $region74: #{dqn_forward.4} parent=65 // loop_pre_header
                  _
                $region75: #{dqn_forward.4} parent=65 // loop_header
                  %s1415 = sphi 0, %s1417
                  %p1416 = scmp.ge.s32.totalorder %s1415, %s1408
                  %s1420 = sphi 0, %s1427
                  %s1421 = sphi %s1411, %s1430
                  %s1422 = sphi %s1413, %s1431
                $region76: #{dqn_forward.4} parent=65 // loop_header_branch
                  %1419 = sbr.rel (%p1416) target = $region80
                $region77: #{dqn_forward.4} parent=65 // loop_body
                  %v1423 = vld [vmem:[%s1421] sm:$0xff]
                  %1424 = vst [vmem:[%s1422] sm:$0xff] %v1423
                  %s1425 = sadd.s32 1, %s1420
                  %p1426 = scmp.ge.s32.totalorder %s1425, %s1408
                  %s1427 = scalar_select %p1426, 0, %s1425
                  %s1428 = smul.u32 %s1427, 8
                  %s1429 = smul.u32 %s1427, 8
                  %s1430 = scalar_lea.vmem %s1411, %s1428 [#allocation2]
                  %s1431 = scalar_lea.vmem %s1413, %s1429
                $region78: #{dqn_forward.4} parent=65 // loop_footer
                  %s1417 = sadd.s32 %s1415, 1
                $region79: #{dqn_forward.4} parent=65 // loop_footer_branch
                  %1414 = sbr.rel target = $region75
                $region80: #{dqn_forward.4} parent=65 // loop_exit
                  _
              $region66: #{dqn_forward.4} parent=43 // pred_fallthru
                _
              // Predicated region
              $region81: #{dqn_forward.4} parent=43 // pred_check
                _
              $region82: #{dqn_forward.4} parent=43 // pred_check_branch
                %1433 = sbr.rel target = $region84
              $region83: #{dqn_forward.4} parent=43 // pred_region
                _
              $region84: #{dqn_forward.4} parent=43 // pred_fallthru
                _
            $region44: #{dqn_forward.4} parent=39 // pred_fallthru
              _
            // Predicated region
            $region45: #{dqn_forward.4} parent=39 // pred_check
              _
            $region46: #{dqn_forward.4} parent=39 // pred_check_branch
              %1087 = sbr.rel target = $region48
            $region47: #{dqn_forward.4} parent=39 // pred_region
              %s1089 = ssub.s32 256, 1
              %s1090 = sshrl.u32 %s1076, 6
              // While loop
              $region49: #{dqn_forward.4} parent=47 // loop_pre_header
                _
              $region50: #{dqn_forward.4} parent=47 // loop_header
                %s1092 = sphi 0, %s1094
                %p1093 = scmp.ge.s32.totalorder %s1092, %s1090
                %s1097 = sphi 0, %s1230
                %s1098 = sphi %s1069, %s1233
                %s1099 = sphi %s1080, %s1234
              $region51: #{dqn_forward.4} parent=47 // loop_header_branch
                %1096 = sbr.rel (%p1093) target = $region55
              $region52: #{dqn_forward.4} parent=47 // loop_body
                %v1100 = vld [vmem:[%s1098] sm:%s1089]
                %1101 = vst [vmem:[%s1099] sm:%s1089] %v1100
                %v1102 = vld [vmem:[%s1098 + $0x8] sm:%s1089]
                %1103 = vst [vmem:[%s1099 + $0x8] sm:%s1089] %v1102
                %v1104 = vld [vmem:[%s1098 + $0x10] sm:%s1089]
                %1105 = vst [vmem:[%s1099 + $0x10] sm:%s1089] %v1104
                %v1106 = vld [vmem:[%s1098 + $0x18] sm:%s1089]
                %1107 = vst [vmem:[%s1099 + $0x18] sm:%s1089] %v1106
                %v1108 = vld [vmem:[%s1098 + $0x20] sm:%s1089]
                %1109 = vst [vmem:[%s1099 + $0x20] sm:%s1089] %v1108
                %v1110 = vld [vmem:[%s1098 + $0x28] sm:%s1089]
                %1111 = vst [vmem:[%s1099 + $0x28] sm:%s1089] %v1110
                %v1112 = vld [vmem:[%s1098 + $0x30] sm:%s1089]
                %1113 = vst [vmem:[%s1099 + $0x30] sm:%s1089] %v1112
                %v1114 = vld [vmem:[%s1098 + $0x38] sm:%s1089]
                %1115 = vst [vmem:[%s1099 + $0x38] sm:%s1089] %v1114
                %v1116 = vld [vmem:[%s1098 + $0x40] sm:%s1089]
                %1117 = vst [vmem:[%s1099 + $0x40] sm:%s1089] %v1116
                %v1118 = vld [vmem:[%s1098 + $0x48] sm:%s1089]
                %1119 = vst [vmem:[%s1099 + $0x48] sm:%s1089] %v1118
                %v1120 = vld [vmem:[%s1098 + $0x50] sm:%s1089]
                %1121 = vst [vmem:[%s1099 + $0x50] sm:%s1089] %v1120
                %v1122 = vld [vmem:[%s1098 + $0x58] sm:%s1089]
                %1123 = vst [vmem:[%s1099 + $0x58] sm:%s1089] %v1122
                %v1124 = vld [vmem:[%s1098 + $0x60] sm:%s1089]
                %1125 = vst [vmem:[%s1099 + $0x60] sm:%s1089] %v1124
                %v1126 = vld [vmem:[%s1098 + $0x68] sm:%s1089]
                %1127 = vst [vmem:[%s1099 + $0x68] sm:%s1089] %v1126
                %v1128 = vld [vmem:[%s1098 + $0x70] sm:%s1089]
                %1129 = vst [vmem:[%s1099 + $0x70] sm:%s1089] %v1128
                %v1130 = vld [vmem:[%s1098 + $0x78] sm:%s1089]
                %1131 = vst [vmem:[%s1099 + $0x78] sm:%s1089] %v1130
                %v1132 = vld [vmem:[%s1098 + $0x80] sm:%s1089]
                %1133 = vst [vmem:[%s1099 + $0x80] sm:%s1089] %v1132
                %v1134 = vld [vmem:[%s1098 + $0x88] sm:%s1089]
                %1135 = vst [vmem:[%s1099 + $0x88] sm:%s1089] %v1134
                %v1136 = vld [vmem:[%s1098 + $0x90] sm:%s1089]
                %1137 = vst [vmem:[%s1099 + $0x90] sm:%s1089] %v1136
                %v1138 = vld [vmem:[%s1098 + $0x98] sm:%s1089]
                %1139 = vst [vmem:[%s1099 + $0x98] sm:%s1089] %v1138
                %v1140 = vld [vmem:[%s1098 + $0xa0] sm:%s1089]
                %1141 = vst [vmem:[%s1099 + $0xa0] sm:%s1089] %v1140
                %v1142 = vld [vmem:[%s1098 + $0xa8] sm:%s1089]
                %1143 = vst [vmem:[%s1099 + $0xa8] sm:%s1089] %v1142
                %v1144 = vld [vmem:[%s1098 + $0xb0] sm:%s1089]
                %1145 = vst [vmem:[%s1099 + $0xb0] sm:%s1089] %v1144
                %v1146 = vld [vmem:[%s1098 + $0xb8] sm:%s1089]
                %1147 = vst [vmem:[%s1099 + $0xb8] sm:%s1089] %v1146
                %v1148 = vld [vmem:[%s1098 + $0xc0] sm:%s1089]
                %1149 = vst [vmem:[%s1099 + $0xc0] sm:%s1089] %v1148
                %v1150 = vld [vmem:[%s1098 + $0xc8] sm:%s1089]
                %1151 = vst [vmem:[%s1099 + $0xc8] sm:%s1089] %v1150
                %v1152 = vld [vmem:[%s1098 + $0xd0] sm:%s1089]
                %1153 = vst [vmem:[%s1099 + $0xd0] sm:%s1089] %v1152
                %v1154 = vld [vmem:[%s1098 + $0xd8] sm:%s1089]
                %1155 = vst [vmem:[%s1099 + $0xd8] sm:%s1089] %v1154
                %v1156 = vld [vmem:[%s1098 + $0xe0] sm:%s1089]
                %1157 = vst [vmem:[%s1099 + $0xe0] sm:%s1089] %v1156
                %v1158 = vld [vmem:[%s1098 + $0xe8] sm:%s1089]
                %1159 = vst [vmem:[%s1099 + $0xe8] sm:%s1089] %v1158
                %v1160 = vld [vmem:[%s1098 + $0xf0] sm:%s1089]
                %1161 = vst [vmem:[%s1099 + $0xf0] sm:%s1089] %v1160
                %v1162 = vld [vmem:[%s1098 + $0xf8] sm:%s1089]
                %1163 = vst [vmem:[%s1099 + $0xf8] sm:%s1089] %v1162
                %v1164 = vld [vmem:[%s1098 + $0x100] sm:%s1089]
                %1165 = vst [vmem:[%s1099 + $0x100] sm:%s1089] %v1164
                %v1166 = vld [vmem:[%s1098 + $0x108] sm:%s1089]
                %1167 = vst [vmem:[%s1099 + $0x108] sm:%s1089] %v1166
                %v1168 = vld [vmem:[%s1098 + $0x110] sm:%s1089]
                %1169 = vst [vmem:[%s1099 + $0x110] sm:%s1089] %v1168
                %v1170 = vld [vmem:[%s1098 + $0x118] sm:%s1089]
                %1171 = vst [vmem:[%s1099 + $0x118] sm:%s1089] %v1170
                %v1172 = vld [vmem:[%s1098 + $0x120] sm:%s1089]
                %1173 = vst [vmem:[%s1099 + $0x120] sm:%s1089] %v1172
                %v1174 = vld [vmem:[%s1098 + $0x128] sm:%s1089]
                %1175 = vst [vmem:[%s1099 + $0x128] sm:%s1089] %v1174
                %v1176 = vld [vmem:[%s1098 + $0x130] sm:%s1089]
                %1177 = vst [vmem:[%s1099 + $0x130] sm:%s1089] %v1176
                %v1178 = vld [vmem:[%s1098 + $0x138] sm:%s1089]
                %1179 = vst [vmem:[%s1099 + $0x138] sm:%s1089] %v1178
                %v1180 = vld [vmem:[%s1098 + $0x140] sm:%s1089]
                %1181 = vst [vmem:[%s1099 + $0x140] sm:%s1089] %v1180
                %v1182 = vld [vmem:[%s1098 + $0x148] sm:%s1089]
                %1183 = vst [vmem:[%s1099 + $0x148] sm:%s1089] %v1182
                %v1184 = vld [vmem:[%s1098 + $0x150] sm:%s1089]
                %1185 = vst [vmem:[%s1099 + $0x150] sm:%s1089] %v1184
                %v1186 = vld [vmem:[%s1098 + $0x158] sm:%s1089]
                %1187 = vst [vmem:[%s1099 + $0x158] sm:%s1089] %v1186
                %v1188 = vld [vmem:[%s1098 + $0x160] sm:%s1089]
                %1189 = vst [vmem:[%s1099 + $0x160] sm:%s1089] %v1188
                %v1190 = vld [vmem:[%s1098 + $0x168] sm:%s1089]
                %1191 = vst [vmem:[%s1099 + $0x168] sm:%s1089] %v1190
                %v1192 = vld [vmem:[%s1098 + $0x170] sm:%s1089]
                %1193 = vst [vmem:[%s1099 + $0x170] sm:%s1089] %v1192
                %v1194 = vld [vmem:[%s1098 + $0x178] sm:%s1089]
                %1195 = vst [vmem:[%s1099 + $0x178] sm:%s1089] %v1194
                %v1196 = vld [vmem:[%s1098 + $0x180] sm:%s1089]
                %1197 = vst [vmem:[%s1099 + $0x180] sm:%s1089] %v1196
                %v1198 = vld [vmem:[%s1098 + $0x188] sm:%s1089]
                %1199 = vst [vmem:[%s1099 + $0x188] sm:%s1089] %v1198
                %v1200 = vld [vmem:[%s1098 + $0x190] sm:%s1089]
                %1201 = vst [vmem:[%s1099 + $0x190] sm:%s1089] %v1200
                %v1202 = vld [vmem:[%s1098 + $0x198] sm:%s1089]
                %1203 = vst [vmem:[%s1099 + $0x198] sm:%s1089] %v1202
                %v1204 = vld [vmem:[%s1098 + $0x1a0] sm:%s1089]
                %1205 = vst [vmem:[%s1099 + $0x1a0] sm:%s1089] %v1204
                %v1206 = vld [vmem:[%s1098 + $0x1a8] sm:%s1089]
                %1207 = vst [vmem:[%s1099 + $0x1a8] sm:%s1089] %v1206
                %v1208 = vld [vmem:[%s1098 + $0x1b0] sm:%s1089]
                %1209 = vst [vmem:[%s1099 + $0x1b0] sm:%s1089] %v1208
                %v1210 = vld [vmem:[%s1098 + $0x1b8] sm:%s1089]
                %1211 = vst [vmem:[%s1099 + $0x1b8] sm:%s1089] %v1210
                %v1212 = vld [vmem:[%s1098 + $0x1c0] sm:%s1089]
                %1213 = vst [vmem:[%s1099 + $0x1c0] sm:%s1089] %v1212
                %v1214 = vld [vmem:[%s1098 + $0x1c8] sm:%s1089]
                %1215 = vst [vmem:[%s1099 + $0x1c8] sm:%s1089] %v1214
                %v1216 = vld [vmem:[%s1098 + $0x1d0] sm:%s1089]
                %1217 = vst [vmem:[%s1099 + $0x1d0] sm:%s1089] %v1216
                %v1218 = vld [vmem:[%s1098 + $0x1d8] sm:%s1089]
                %1219 = vst [vmem:[%s1099 + $0x1d8] sm:%s1089] %v1218
                %v1220 = vld [vmem:[%s1098 + $0x1e0] sm:%s1089]
                %1221 = vst [vmem:[%s1099 + $0x1e0] sm:%s1089] %v1220
                %v1222 = vld [vmem:[%s1098 + $0x1e8] sm:%s1089]
                %1223 = vst [vmem:[%s1099 + $0x1e8] sm:%s1089] %v1222
                %v1224 = vld [vmem:[%s1098 + $0x1f0] sm:%s1089]
                %1225 = vst [vmem:[%s1099 + $0x1f0] sm:%s1089] %v1224
                %v1226 = vld [vmem:[%s1098 + $0x1f8] sm:%s1089]
                %1227 = vst [vmem:[%s1099 + $0x1f8] sm:%s1089] %v1226
                %s1228 = sadd.s32 1, %s1097
                %p1229 = scmp.ge.s32.totalorder %s1228, %s1090
                %s1230 = scalar_select %p1229, 0, %s1228
                %s1231 = smul.u32 %s1230, 512
                %s1232 = smul.u32 %s1230, 512
                %s1233 = scalar_lea.vmem %s1069, %s1231 [#allocation2]
                %s1234 = scalar_lea.vmem %s1080, %s1232
              $region53: #{dqn_forward.4} parent=47 // loop_footer
                %s1094 = sadd.s32 %s1092, 1
              $region54: #{dqn_forward.4} parent=47 // loop_footer_branch
                %1091 = sbr.rel target = $region50
              $region55: #{dqn_forward.4} parent=47 // loop_exit
                _
              %s1235 = sshrl.u32 %s1076, 6
              %s1236 = sand.u32 %s1076, 63
              %s1237 = smul.u32 %s1235, 64
              %s1238 = smul.u32 8, %s1237
              %s1239 = scalar_lea.vmem %s1069, %s1238 [#allocation2]
              %s1240 = smul.u32 8, %s1237
              %s1241 = scalar_lea.vmem %s1080, %s1240
              // While loop
              $region56: #{dqn_forward.4} parent=47 // loop_pre_header
                _
              $region57: #{dqn_forward.4} parent=47 // loop_header
                %s1243 = sphi 0, %s1245
                %p1244 = scmp.ge.s32.totalorder %s1243, %s1236
                %s1248 = sphi 0, %s1255
                %s1249 = sphi %s1239, %s1258
                %s1250 = sphi %s1241, %s1259
              $region58: #{dqn_forward.4} parent=47 // loop_header_branch
                %1247 = sbr.rel (%p1244) target = $region62
              $region59: #{dqn_forward.4} parent=47 // loop_body
                %v1251 = vld [vmem:[%s1249] sm:%s1089]
                %1252 = vst [vmem:[%s1250] sm:%s1089] %v1251
                %s1253 = sadd.s32 1, %s1248
                %p1254 = scmp.ge.s32.totalorder %s1253, %s1236
                %s1255 = scalar_select %p1254, 0, %s1253
                %s1256 = smul.u32 %s1255, 8
                %s1257 = smul.u32 %s1255, 8
                %s1258 = scalar_lea.vmem %s1239, %s1256 [#allocation2]
                %s1259 = scalar_lea.vmem %s1241, %s1257
              $region60: #{dqn_forward.4} parent=47 // loop_footer
                %s1245 = sadd.s32 %s1243, 1
              $region61: #{dqn_forward.4} parent=47 // loop_footer_branch
                %1242 = sbr.rel target = $region57
              $region62: #{dqn_forward.4} parent=47 // loop_exit
                _
            $region48: #{dqn_forward.4} parent=39 // pred_fallthru
              _
          $region40: #{dqn_forward.4} parent=35 // pred_fallthru
            _
          %1434 = vnop
        $region36: #{dqn_forward.4} parent=31 // pred_fallthru
          _
      $region32: #{dqn_forward.4} parent=5 // pred_fallthru
        _
      %p1435 = scmp.le.s32.totalorder 2, %s9
      // Predicated region
      $region85: #{dqn_forward.4} parent=5 // pred_check
        %p1436 = pneg %p1435
      $region86: #{dqn_forward.4} parent=5 // pred_check_branch
        %1438 = sbr.rel (%p1436) target = $region88
      $region87: #{dqn_forward.4} parent=5 // pred_region
        %s1439 = ssub.s32 %s9, 2
        // Predicated region
        $region89: #{dqn_forward.4} parent=87 // pred_check
          %p1440 = pneg %p106
        $region90: #{dqn_forward.4} parent=87 // pred_check_branch
          %1442 = sbr.rel (%p1440) target = $region92
        $region91: #{dqn_forward.4} parent=87 // pred_region
          %s1443 = sand.u32 %s91, 1
          %s1444 = sand.u32 %s91, 1
          %s1445 = smul.addr %s1444, 512
          %s1446 = scalar_lea.vmem [#allocation2], %s1445
        $region92: #{dqn_forward.4} parent=87 // pred_fallthru
          _
      $region88: #{dqn_forward.4} parent=5 // pred_fallthru
        _
    $region6: #{dqn_forward.4} parent=1 // loop_footer
      %s13 = sadd.s32 1, %s9
    $region7: #{dqn_forward.4} parent=1 // loop_footer_branch
      %8 = sbr.rel target = $region3
    $region8: #{dqn_forward.4} parent=1 // loop_exit
      _

// kernel: dqn_forward.5
$region0: #{dqn_forward.5}
  #allocation0 [shape = 'u32[]', space=smem, size = 0x4, offset = 0x4, fixed_abs, tag = 'smem constant byte address 0x4 - core index']
  #allocation1 [shape = 'u32[144,128]{1,0:T(1,128)}', space=vmem, size = 0x12000, scoped, tag = 'internal scratch']
  %s0 = inlined_call_operand.vmem [shape: f32[200,512], index: 0, kind: input, shape index: {}]
  %s1 = inlined_call_operand.vmem [shape: f32[512,64], index: 1, kind: input, shape index: {}]
  %s2 = inlined_call_operand.vmem [shape: f32[1,64], index: 2, kind: input, shape index: {}]
  %s3 = inlined_call_operand.vmem [shape: f32[200,64], index: 3, kind: output, shape index: {}]
  %s4 = sld [smem:[#allocation0]]
  $region93: #{dqn_forward.5} parent=0
    _
  %s6 = ssub.s32 1, %s4
  %s7 = scalar_select 0, %s6, %s4
  $region1: #{dqn_forward.5} parent=0
    #allocation2 [shape = 'u8[106496]{0}', space=vmem, size = 0x1a000, scoped, tag = 'output window, operand 0']
    loop: start=0, step=1, limit=4
    $region2: #{dqn_forward.5} parent=1 // loop_pre_header
      _
    $region3: #{dqn_forward.5} parent=1 // loop_header
      %s9 = sphi 0, %s13
      %p10 = scmp.ge.s32.totalorder %s9, 4
      %s19 = sphi 0, %s21
      %s22 = sphi 0, %s19
      %s23 = sphi 0, %s22
      %s39 = sphi 0, %s23
      %s43 = sphi 0, %s43
      %s45 = sphi 0, %s43
      %s46 = sphi 0, %s45
      %s60 = sphi 0, %s46
      %s64 = sphi 0, %s64
      %s66 = sphi 0, %s64
      %s67 = sphi 0, %s66
      %s81 = sphi 0, %s67
      %s87 = sphi 0, %s89
      %s90 = sphi 0, %s87
      %s91 = sphi 0, %s90
      %s107 = sphi 0, %s91
    $region4: #{dqn_forward.5} parent=1 // loop_header_branch
      %12 = sbr.rel (%p10) target = $region8
    $region5: #{dqn_forward.5} parent=1 // loop_body
      %s14 = ssub.s32 %s9, 1
      %s15 = ssub.s32 %s9, 2
      %s16 = sadd.s32 %s9, 1
      %s17 = ssub.s32 %s9, %s16
      %p18 = scmp.eq.s32.totalorder %s17, 0
      %s20 = sadd.s32 %s19, 1
      %s21 = scalar_select %p18, %s19, %s20
      %p24 = pneg %p18
      %p25 = scmp.eq.s32.totalorder %s9, 1
      %p26 = por %p24, %p25
      %p27 = scmp.ne.s32.totalorder %s19, %s22
      %p28 = scmp.eq.s32.totalorder %s9, 0
      %p29 = por %p27, %p28
      %p30 = scmp.ne.s32.totalorder %s19, %s22
      %p31 = scmp.eq.s32.totalorder %s14, 1
      %p32 = por %p30, %p31
      %p33 = scmp.ne.s32.totalorder %s22, %s23
      %p34 = scmp.eq.s32.totalorder %s14, 0
      %p35 = por %p33, %p34
      %p36 = scmp.ne.s32.totalorder %s22, %s23
      %p37 = scmp.eq.s32.totalorder %s15, 1
      %p38 = por %p36, %p37
      %p40 = scmp.ne.s32.totalorder %s23, %s39
      %p41 = scmp.eq.s32.totalorder %s15, 0
      %p42 = por %p40, %p41
      %s44 = sadd.s32 %s43, 1
      %p47 = scmp.eq.s32.totalorder %s9, 1
      %p48 = scmp.ne.s32.totalorder %s43, %s45
      %p49 = scmp.eq.s32.totalorder %s9, 0
      %p50 = por %p48, %p49
      %p51 = scmp.ne.s32.totalorder %s43, %s45
      %p52 = scmp.eq.s32.totalorder %s14, 1
      %p53 = por %p51, %p52
      %p54 = scmp.ne.s32.totalorder %s45, %s46
      %p55 = scmp.eq.s32.totalorder %s14, 0
      %p56 = por %p54, %p55
      %p57 = scmp.ne.s32.totalorder %s45, %s46
      %p58 = scmp.eq.s32.totalorder %s15, 1
      %p59 = por %p57, %p58
      %p61 = scmp.ne.s32.totalorder %s46, %s60
      %p62 = scmp.eq.s32.totalorder %s15, 0
      %p63 = por %p61, %p62
      %s65 = sadd.s32 %s64, 1
      %p68 = scmp.eq.s32.totalorder %s9, 1
      %p69 = scmp.ne.s32.totalorder %s64, %s66
      %p70 = scmp.eq.s32.totalorder %s9, 0
      %p71 = por %p69, %p70
      %p72 = scmp.ne.s32.totalorder %s64, %s66
      %p73 = scmp.eq.s32.totalorder %s14, 1
      %p74 = por %p72, %p73
      %p75 = scmp.ne.s32.totalorder %s66, %s67
      %p76 = scmp.eq.s32.totalorder %s14, 0
      %p77 = por %p75, %p76
      %p78 = scmp.ne.s32.totalorder %s66, %s67
      %p79 = scmp.eq.s32.totalorder %s15, 1
      %p80 = por %p78, %p79
      %p82 = scmp.ne.s32.totalorder %s67, %s81
      %p83 = scmp.eq.s32.totalorder %s15, 0
      %p84 = por %p82, %p83
      %s85 = ssub.s32 %s9, %s16
      %p86 = scmp.eq.s32.totalorder %s85, 0
      %s88 = sadd.s32 %s87, 1
      %s89 = scalar_select %p86, %s87, %s88
      %p92 = pneg %p86
      %p93 = scmp.eq.s32.totalorder %s9, 1
      %p94 = por %p92, %p93
      %p95 = scmp.ne.s32.totalorder %s87, %s90
      %p96 = scmp.eq.s32.totalorder %s9, 0
      %p97 = por %p95, %p96
      %p98 = scmp.ne.s32.totalorder %s87, %s90
      %p99 = scmp.eq.s32.totalorder %s14, 1
      %p100 = por %p98, %p99
      %p101 = scmp.ne.s32.totalorder %s90, %s91
      %p102 = scmp.eq.s32.totalorder %s14, 0
      %p103 = por %p101, %p102
      %p104 = scmp.ne.s32.totalorder %s90, %s91
      %p105 = scmp.eq.s32.totalorder %s15, 1
      %p106 = por %p104, %p105
      %p108 = scmp.ne.s32.totalorder %s91, %s107
      %p109 = scmp.eq.s32.totalorder %s15, 0
      %p110 = por %p108, %p109
      %p111 = scmp.le.s32.totalorder 1, %s9
      %p112 = scmp.lt.s32.totalorder %s9, 3
      %p113 = pnand %p111, %p112
      %p114 = pneg %p113
      // Predicated region
      $region9: #{dqn_forward.5} parent=5 // pred_check
        _
      $region10: #{dqn_forward.5} parent=5 // pred_check_branch
        %116 = sbr.rel (%p113) target = $region12
      $region11: #{dqn_forward.5} parent=5 // pred_region
        %s117 = ssub.s32 %s9, 1
        // Predicated region
        $region13: #{dqn_forward.5} parent=11 // pred_check
          %p118 = pneg %p56
        $region14: #{dqn_forward.5} parent=11 // pred_check_branch
          %120 = sbr.rel (%p118) target = $region16
        $region15: #{dqn_forward.5} parent=11 // pred_region
          _
        $region16: #{dqn_forward.5} parent=11 // pred_fallthru
          _
        // Predicated region
        $region17: #{dqn_forward.5} parent=11 // pred_check
          %p121 = pneg %p77
        $region18: #{dqn_forward.5} parent=11 // pred_check_branch
          %123 = sbr.rel (%p121) target = $region20
        $region19: #{dqn_forward.5} parent=11 // pred_region
          _
        $region20: #{dqn_forward.5} parent=11 // pred_fallthru
          _
      $region12: #{dqn_forward.5} parent=5 // pred_fallthru
        _
      %p124 = scmp.lt.s32.totalorder %s9, 2
      // Predicated region
      $region21: #{dqn_forward.5} parent=5 // pred_check
        %p125 = pneg %p124
      $region22: #{dqn_forward.5} parent=5 // pred_check_branch
        %127 = sbr.rel (%p125) target = $region24
      $region23: #{dqn_forward.5} parent=5 // pred_region
        // Predicated region
        $region25: #{dqn_forward.5} parent=23 // pred_check
          %p128 = pneg %p29
        $region26: #{dqn_forward.5} parent=23 // pred_check_branch
          %130 = sbr.rel (%p128) target = $region28
        $region27: #{dqn_forward.5} parent=23 // pred_region
          %s131 = smul.u32 13, %s9
          %s132 = ssub.s32 25, %s131
          %p133 = scmp.lt.s32.totalorder %s132, 13
          %s134 = scalar_select %p133, %s132, 13
          %s135 = smul.u32 128, %s134
          %s136 = smul.u32 %s135, 4
          %p137 = scmp.lt.s32.totalorder %s131, 24
          %s138 = scalar_select %p137, %s131, 24
          %s139 = smul.addr %s138, 4
          %s140 = smul.addr %s139, 8
          %s141 = scalar_lea.vmem %s0, %s140
          %s142 = smul.u32 13, %s9
          %s143 = ssub.s32 25, %s142
          %p144 = scmp.lt.s32.totalorder %s143, 13
          %s145 = scalar_select %p144, %s143, 13
          %s146 = smul.u32 128, %s145
          %s147 = smul.u32 %s146, 4
        $region28: #{dqn_forward.5} parent=23 // pred_fallthru
          _
      $region24: #{dqn_forward.5} parent=5 // pred_fallthru
        _
      %p148 = scmp.le.s32.totalorder 1, %s9
      %p149 = scmp.lt.s32.totalorder %s9, 3
      %p150 = pnand %p148, %p149
      %p151 = pneg %p150
      // Predicated region
      $region29: #{dqn_forward.5} parent=5 // pred_check
        _
      $region30: #{dqn_forward.5} parent=5 // pred_check_branch
        %153 = sbr.rel (%p150) target = $region32
      $region31: #{dqn_forward.5} parent=5 // pred_region
        %s154 = ssub.s32 %s9, 1
        %s155 = smul.u32 13, %s14
        %s156 = ssub.s32 25, %s155
        %p157 = scmp.lt.s32.totalorder %s156, 13
        %s158 = scalar_select %p157, %s156, 13
        %s159 = smul.u32 128, %s158
        %s160 = smul.u32 %s159, 4
        %p161 = scmp.lt.s32.totalorder %s155, 24
        %s162 = scalar_select %p161, %s155, 24
        %s163 = smul.addr %s162, 4
        %s164 = smul.addr %s163, 8
        %s165 = scalar_lea.vmem %s0, %s164
        %p166 = pneg %p35
        %p167 = pneg %p32
        %p168 = pneg %p56
        %p169 = pneg %p53
        %p170 = pneg %p77
        %p171 = pneg %p74
        %p172 = pneg %p103
        %p173 = pneg %p100
        %s174 = sand.u32 %s90, 1
        %s175 = sand.u32 %s90, 1
        %s176 = smul.addr %s175, 104
        %s177 = scalar_lea.vmem [#allocation2], %s176
        %s178 = smul.u32 13, %s14
        %s179 = ssub.s32 25, %s178
        %p180 = scmp.lt.s32.totalorder %s179, 13
        %s181 = scalar_select %p180, %s179, 13
        %s182 = smul.u32 128, %s181
        %s183 = smul.u32 %s182, 4
        %p184 = scmp.lt.s32.totalorder %s178, 24
        %s185 = scalar_select %p184, %s178, 24
        %s186 = smul.addr %s185, 4
        %s187 = smul.addr %s186, 8
        %s188 = scalar_lea.vmem %s0, %s187
        %s189 = smul.u32 13, %s14
        %s190 = ssub.s32 25, %s189
        %p191 = scmp.lt.s32.totalorder %s190, 13
        %s192 = scalar_select %p191, %s190, 13
        %s193 = smul.u32 128, %s192
        %s194 = smul.u32 %s193, 4
        %s195 = smul.u32 13, %s14
        %s196 = ssub.s32 25, %s195
        %p197 = scmp.lt.s32.totalorder %s196, 13
        %s198 = scalar_select %p197, %s196, 13
        %s199 = smul.u32 128, %s198
        %v200 = vld [vmem:[%s188] sm:$0xff]
        %v201 = vld [vmem:[%s188 + $0x8] sm:$0xff]
        %v202 = vld [vmem:[%s188 + $0x10] sm:$0xff]
        %v203 = vld [vmem:[%s188 + $0x18] sm:$0xff]
        %v204 = vld [vmem:[%s188 + $0x20] sm:$0xff]
        %v205 = vld [vmem:[%s188 + $0x28] sm:$0xff]
        %v206 = vld [vmem:[%s188 + $0x30] sm:$0xff]
        %v207 = vld [vmem:[%s188 + $0x38] sm:$0xff]
        %v208 = vld [vmem:[%s188 + $0x40] sm:$0xff]
        %v209 = vld [vmem:[%s188 + $0x48] sm:$0xff]
        %v210 = vld [vmem:[%s188 + $0x50] sm:$0xff]
        %v211 = vld [vmem:[%s188 + $0x58] sm:$0xff]
        %v212 = vld [vmem:[%s188 + $0x60] sm:$0xff]
        %v213 = vld [vmem:[%s188 + $0x68] sm:$0xff]
        %v214 = vld [vmem:[%s188 + $0x70] sm:$0xff]
        %v215 = vld [vmem:[%s188 + $0x78] sm:$0xff]
        %v216 = vld [vmem:[%s188 + $0x80] sm:$0xff]
        %v217 = vld [vmem:[%s188 + $0x88] sm:$0xff]
        %v218 = vld [vmem:[%s188 + $0x90] sm:$0xff]
        %v219 = vld [vmem:[%s188 + $0x98] sm:$0xff]
        %v220 = vld [vmem:[%s188 + $0xa0] sm:$0xff]
        %v221 = vld [vmem:[%s188 + $0xa8] sm:$0xff]
        %v222 = vld [vmem:[%s188 + $0xb0] sm:$0xff]
        %v223 = vld [vmem:[%s188 + $0xb8] sm:$0xff]
        %v224 = vld [vmem:[%s188 + $0xc0] sm:$0xff]
        %v225 = vld [vmem:[%s188 + $0xc8] sm:$0xff]
        %v226 = vld [vmem:[%s188 + $0xd0] sm:$0xff]
        %v227 = vld [vmem:[%s188 + $0xd8] sm:$0xff]
        %v228 = vld [vmem:[%s188 + $0xe0] sm:$0xff]
        %v229 = vld [vmem:[%s188 + $0xe8] sm:$0xff]
        %v230 = vld [vmem:[%s188 + $0xf0] sm:$0xff]
        %v231 = vld [vmem:[%s188 + $0xf8] sm:$0xff]
        %v232 = vld [vmem:[%s188 + $0x100] sm:$0xff]
        %v233 = vld [vmem:[%s188 + $0x108] sm:$0xff]
        %v234 = vld [vmem:[%s188 + $0x110] sm:$0xff]
        %v235 = vld [vmem:[%s188 + $0x118] sm:$0xff]
        %v236 = vld [vmem:[%s188 + $0x120] sm:$0xff]
        %v237 = vld [vmem:[%s188 + $0x128] sm:$0xff]
        %v238 = vld [vmem:[%s188 + $0x130] sm:$0xff]
        %v239 = vld [vmem:[%s188 + $0x138] sm:$0xff]
        %v240 = vld [vmem:[%s188 + $0x140] sm:$0xff]
        %v241 = vld [vmem:[%s188 + $0x148] sm:$0xff]
        %v242 = vld [vmem:[%s188 + $0x150] sm:$0xff]
        %v243 = vld [vmem:[%s188 + $0x158] sm:$0xff]
        %v244 = vld [vmem:[%s188 + $0x160] sm:$0xff]
        %v245 = vld [vmem:[%s188 + $0x168] sm:$0xff]
        %v246 = vld [vmem:[%s188 + $0x170] sm:$0xff]
        %v247 = vld [vmem:[%s188 + $0x178] sm:$0xff]
        %v248 = vld [vmem:[%s188 + $0x180] sm:$0xff]
        %v249 = vld [vmem:[%s188 + $0x188] sm:$0xff]
        %v250 = vld [vmem:[%s188 + $0x190] sm:$0xff]
        %v251 = vld [vmem:[%s188 + $0x198] sm:$0xff]
        %v252 = vld [vmem:[%s1] sm:$0xff]
        %v253 = vld [vmem:[%s1 + $0x8] sm:$0xff]
        %v254 = vld [vmem:[%s1 + $0x10] sm:$0xff]
        %v255 = vld [vmem:[%s1 + $0x18] sm:$0xff]
        %v256 = vld [vmem:[%s1 + $0x20] sm:$0xff]
        %v257 = vld [vmem:[%s1 + $0x28] sm:$0xff]
        %v258 = vld [vmem:[%s1 + $0x30] sm:$0xff]
        %v259 = vld [vmem:[%s1 + $0x38] sm:$0xff]
        %v260 = vld [vmem:[%s1 + $0x40] sm:$0xff]
        %v261 = vld [vmem:[%s1 + $0x48] sm:$0xff]
        %v262 = vld [vmem:[%s1 + $0x50] sm:$0xff]
        %v263 = vld [vmem:[%s1 + $0x58] sm:$0xff]
        %v264 = vld [vmem:[%s1 + $0x60] sm:$0xff]
        %v265 = vld [vmem:[%s1 + $0x68] sm:$0xff]
        %v266 = vld [vmem:[%s1 + $0x70] sm:$0xff]
        %v267 = vld [vmem:[%s1 + $0x78] sm:$0xff]
        %v268 = vld [vmem:[%s1 + $0x80] sm:$0xff]
        %v269 = vld [vmem:[%s1 + $0x88] sm:$0xff]
        %v270 = vld [vmem:[%s1 + $0x90] sm:$0xff]
        %v271 = vld [vmem:[%s1 + $0x98] sm:$0xff]
        %v272 = vld [vmem:[%s1 + $0xa0] sm:$0xff]
        %v273 = vld [vmem:[%s1 + $0xa8] sm:$0xff]
        %v274 = vld [vmem:[%s1 + $0xb0] sm:$0xff]
        %v275 = vld [vmem:[%s1 + $0xb8] sm:$0xff]
        %v276 = vld [vmem:[%s1 + $0xc0] sm:$0xff]
        %v277 = vld [vmem:[%s1 + $0xc8] sm:$0xff]
        %v278 = vld [vmem:[%s1 + $0xd0] sm:$0xff]
        %v279 = vld [vmem:[%s1 + $0xd8] sm:$0xff]
        %v280 = vld [vmem:[%s1 + $0xe0] sm:$0xff]
        %v281 = vld [vmem:[%s1 + $0xe8] sm:$0xff]
        %v282 = vld [vmem:[%s1 + $0xf0] sm:$0xff]
        %v283 = vld [vmem:[%s1 + $0xf8] sm:$0xff]
        %v284 = vld [vmem:[%s1 + $0x100] sm:$0xff]
        %v285 = vld [vmem:[%s1 + $0x108] sm:$0xff]
        %v286 = vld [vmem:[%s1 + $0x110] sm:$0xff]
        %v287 = vld [vmem:[%s1 + $0x118] sm:$0xff]
        %v288 = vld [vmem:[%s1 + $0x120] sm:$0xff]
        %v289 = vld [vmem:[%s1 + $0x128] sm:$0xff]
        %v290 = vld [vmem:[%s1 + $0x130] sm:$0xff]
        %v291 = vld [vmem:[%s1 + $0x138] sm:$0xff]
        %v292 = vld [vmem:[%s1 + $0x140] sm:$0xff]
        %v293 = vld [vmem:[%s1 + $0x148] sm:$0xff]
        %v294 = vld [vmem:[%s1 + $0x150] sm:$0xff]
        %v295 = vld [vmem:[%s1 + $0x158] sm:$0xff]
        %v296 = vld [vmem:[%s1 + $0x160] sm:$0xff]
        %v297 = vld [vmem:[%s1 + $0x168] sm:$0xff]
        %v298 = vld [vmem:[%s1 + $0x170] sm:$0xff]
        %v299 = vld [vmem:[%s1 + $0x178] sm:$0xff]
        %v300 = vld [vmem:[%s1 + $0x180] sm:$0xff]
        %v301 = vld [vmem:[%s1 + $0x188] sm:$0xff]
        %v302 = vld [vmem:[%s1 + $0x190] sm:$0xff]
        %v303 = vld [vmem:[%s1 + $0x198] sm:$0xff]
        %v304 = vld [vmem:[%s1 + $0x1a0] sm:$0xff]
        %v305 = vld [vmem:[%s1 + $0x1a8] sm:$0xff]
        %v306 = vld [vmem:[%s1 + $0x1b0] sm:$0xff]
        %v307 = vld [vmem:[%s1 + $0x1b8] sm:$0xff]
        %v308 = vld [vmem:[%s1 + $0x1c0] sm:$0xff]
        %v309 = vld [vmem:[%s1 + $0x1c8] sm:$0xff]
        %v310 = vld [vmem:[%s1 + $0x1d0] sm:$0xff]
        %v311 = vld [vmem:[%s1 + $0x1d8] sm:$0xff]
        %v312 = vld [vmem:[%s1 + $0x1e0] sm:$0xff]
        %v313 = vld [vmem:[%s1 + $0x1e8] sm:$0xff]
        %v314 = vld [vmem:[%s1 + $0x1f0] sm:$0xff]
        %v315 = vld [vmem:[%s1 + $0x1f8] sm:$0xff]
        %v316 = vld [vmem:[%s2] sm:$0x1]
        %v318 = vlaneseq
        %v319 = vshrl.u32 %v318, 7
        %v320 = vsub.s32 0, %v319
        %v321 = vrot.slane %v316, %v320
        %323 = vmatprep.subr.mxu0 0.0
        %324 = vmatpush1.msra.mxu0 %v267
        %325 = vmatprep.subr.mxu0 0.0
        %326 = vmatpush1.msra.mxu0 %v266
        %327 = vmatprep.subr.mxu0 0.0
        %328 = vmatpush1.msra.mxu0 %v265
        %329 = vmatprep.subr.mxu0 0.0
        %330 = vmatpush1.msra.mxu0 %v264
        %331 = vmatprep.subr.mxu0 0.0
        %332 = vmatpush1.msra.mxu0 %v263
        %333 = vmatprep.subr.mxu0 0.0
        %334 = vmatpush1.msra.mxu0 %v262
        %335 = vmatprep.subr.mxu0 0.0
        %336 = vmatpush1.msra.mxu0 %v261
        %337 = vmatprep.subr.mxu0 0.0
        %338 = vmatpush1.msra.mxu0 %v260
        %339 = vmatprep.subr.mxu0 0.0
        %340 = vmatpush1.msra.mxu0 %v259
        %341 = vmatprep.subr.mxu0 0.0
        %342 = vmatpush1.msra.mxu0 %v258
        %343 = vmatprep.subr.mxu0 0.0
        %344 = vmatpush1.msra.mxu0 %v257
        %345 = vmatprep.subr.mxu0 0.0
        %346 = vmatpush1.msra.mxu0 %v256
        %347 = vmatprep.subr.mxu0 0.0
        %348 = vmatpush1.msra.mxu0 %v255
        %349 = vmatprep.subr.mxu0 0.0
        %350 = vmatpush1.msra.mxu0 %v254
        %351 = vmatprep.subr.mxu0 0.0
        %352 = vmatpush1.msra.mxu0 %v253
        %353 = vmatprep.subr.mxu0 0.0
        %354 = vmatpush1.msra.mxu0 %v252
        %355 = vmatprep.subr.mxu0 0.0
        %356 = vmatpush2.msra.mxu0 %v283
        %357 = vmatprep.subr.mxu0 0.0
        %358 = vmatpush2.msra.mxu0 %v282
        %359 = vmatprep.subr.mxu0 0.0
        %360 = vmatpush2.msra.mxu0 %v281
        %361 = vmatprep.subr.mxu0 0.0
        %362 = vmatpush2.msra.mxu0 %v280
        %363 = vmatprep.subr.mxu0 0.0
        %364 = vmatpush2.msra.mxu0 %v279
        %365 = vmatprep.subr.mxu0 0.0
        %366 = vmatpush2.msra.mxu0 %v278
        %367 = vmatprep.subr.mxu0 0.0
        %368 = vmatpush2.msra.mxu0 %v277
        %369 = vmatprep.subr.mxu0 0.0
        %370 = vmatpush2.msra.mxu0 %v276
        %371 = vmatprep.subr.mxu0 0.0
        %372 = vmatpush2.msra.mxu0 %v275
        %373 = vmatprep.subr.mxu0 0.0
        %374 = vmatpush2.msra.mxu0 %v274
        %375 = vmatprep.subr.mxu0 0.0
        %376 = vmatpush2.msra.mxu0 %v273
        %377 = vmatprep.subr.mxu0 0.0
        %378 = vmatpush2.msra.mxu0 %v272
        %379 = vmatprep.subr.mxu0 0.0
        %380 = vmatpush2.msra.mxu0 %v271
        %381 = vmatprep.subr.mxu0 0.0
        %382 = vmatpush2.msra.mxu0 %v270
        %383 = vmatprep.subr.mxu0 0.0
        %384 = vmatpush2.msra.mxu0 %v269
        %385 = vmatprep.subr.mxu0 0.0
        %386 = vmatpush2.msra.mxu0 %v268
        %387 = vmatprep.mubr.f32.mxu0 %v201
        %388 = vmatmul.mubr.f32.gmra.mxu0 %v200
        %v389 = vpop.f32.mrf.mxu0
        %v390 = vadd.f32 %v321, %v389
        %v391 = vpop.f32.mrf.mxu0
        %392 = vmatprep.mubr.f32.mxu0 %v205
        %393 = vmatmul.mubr.f32.gmra.mxu0 %v204
        %v394 = vpop.f32.mrf.mxu0
        %v395 = vadd.f32 %v321, %v394
        %v396 = vpop.f32.mrf.mxu0
        %397 = vmatprep.mubr.f32.mxu0 %v209
        %398 = vmatmul.mubr.f32.gmra.mxu0 %v208
        %v399 = vpop.f32.mrf.mxu0
        %v400 = vadd.f32 %v321, %v399
        %v401 = vpop.f32.mrf.mxu0
        %402 = vmatprep.mubr.f32.mxu0 %v213
        %403 = vmatmul.mubr.f32.gmra.mxu0 %v212
        %v404 = vpop.f32.mrf.mxu0
        %v405 = vadd.f32 %v321, %v404
        %v406 = vpop.f32.mrf.mxu0
        %407 = vmatprep.mubr.f32.mxu0 %v217
        %408 = vmatmul.mubr.f32.gmra.mxu0 %v216
        %v409 = vpop.f32.mrf.mxu0
        %v410 = vadd.f32 %v321, %v409
        %v411 = vpop.f32.mrf.mxu0
        %412 = vmatprep.mubr.f32.mxu0 %v221
        %413 = vmatmul.mubr.f32.gmra.mxu0 %v220
        %v414 = vpop.f32.mrf.mxu0
        %v415 = vadd.f32 %v321, %v414
        %v416 = vpop.f32.mrf.mxu0
        %417 = vmatprep.mubr.f32.mxu0 %v225
        %418 = vmatmul.mubr.f32.gmra.mxu0 %v224
        %v419 = vpop.f32.mrf.mxu0
        %v420 = vadd.f32 %v321, %v419
        %v421 = vpop.f32.mrf.mxu0
        %422 = vmatprep.mubr.f32.mxu0 %v229
        %423 = vmatmul.mubr.f32.gmra.mxu0 %v228
        %v424 = vpop.f32.mrf.mxu0
        %v425 = vadd.f32 %v321, %v424
        %v426 = vpop.f32.mrf.mxu0
        %427 = vmatprep.mubr.f32.mxu0 %v233
        %428 = vmatmul.mubr.f32.gmra.mxu0 %v232
        %v429 = vpop.f32.mrf.mxu0
        %v430 = vadd.f32 %v321, %v429
        %v431 = vpop.f32.mrf.mxu0
        %432 = vmatprep.mubr.f32.mxu0 %v237
        %433 = vmatmul.mubr.f32.gmra.mxu0 %v236
        %v434 = vpop.f32.mrf.mxu0
        %v435 = vadd.f32 %v321, %v434
        %v436 = vpop.f32.mrf.mxu0
        %437 = vmatprep.mubr.f32.mxu0 %v241
        %438 = vmatmul.mubr.f32.gmra.mxu0 %v240
        %v439 = vpop.f32.mrf.mxu0
        %v440 = vadd.f32 %v321, %v439
        %v441 = vpop.f32.mrf.mxu0
        %442 = vmatprep.mubr.f32.mxu0 %v245
        %443 = vmatmul.mubr.f32.gmra.mxu0 %v244
        %v444 = vpop.f32.mrf.mxu0
        %v445 = vadd.f32 %v321, %v444
        %v446 = vpop.f32.mrf.mxu0
        %447 = vmatprep.mubr.f32.mxu0 %v249
        %448 = vmatmul.mubr.f32.gmra.mxu0 %v248
        %v449 = vpop.f32.mrf.mxu0
        %v450 = vadd.f32 %v321, %v449
        %v451 = vpop.f32.mrf.mxu0
        %452 = vdwg.mxu0
        %453 = vmatprep.subr.mxu0 0.0
        %454 = vmatpush1.msra.mxu0 %v299
        %455 = vmatprep.subr.mxu0 0.0
        %456 = vmatpush1.msra.mxu0 %v298
        %457 = vmatprep.subr.mxu0 0.0
        %458 = vmatpush1.msra.mxu0 %v297
        %459 = vmatprep.subr.mxu0 0.0
        %460 = vmatpush1.msra.mxu0 %v296
        %461 = vmatprep.subr.mxu0 0.0
        %462 = vmatpush1.msra.mxu0 %v295
        %463 = vmatprep.subr.mxu0 0.0
        %464 = vmatpush1.msra.mxu0 %v294
        %465 = vmatprep.subr.mxu0 0.0
        %466 = vmatpush1.msra.mxu0 %v293
        %467 = vmatprep.subr.mxu0 0.0
        %468 = vmatpush1.msra.mxu0 %v292
        %469 = vmatprep.subr.mxu0 0.0
        %470 = vmatpush1.msra.mxu0 %v291
        %471 = vmatprep.subr.mxu0 0.0
        %472 = vmatpush1.msra.mxu0 %v290
        %473 = vmatprep.subr.mxu0 0.0
        %474 = vmatpush1.msra.mxu0 %v289
        %475 = vmatprep.subr.mxu0 0.0
        %476 = vmatpush1.msra.mxu0 %v288
        %477 = vmatprep.subr.mxu0 0.0
        %478 = vmatpush1.msra.mxu0 %v287
        %479 = vmatprep.subr.mxu0 0.0
        %480 = vmatpush1.msra.mxu0 %v286
        %481 = vmatprep.subr.mxu0 0.0
        %482 = vmatpush1.msra.mxu0 %v285
        %483 = vmatprep.subr.mxu0 0.0
        %484 = vmatpush1.msra.mxu0 %v284
        %485 = vmatprep.subr.mxu0 0.0
        %486 = vmatpush2.msra.mxu0 %v315
        %487 = vmatprep.subr.mxu0 0.0
        %488 = vmatpush2.msra.mxu0 %v314
        %489 = vmatprep.subr.mxu0 0.0
        %490 = vmatpush2.msra.mxu0 %v313
        %491 = vmatprep.subr.mxu0 0.0
        %492 = vmatpush2.msra.mxu0 %v312
        %493 = vmatprep.subr.mxu0 0.0
        %494 = vmatpush2.msra.mxu0 %v311
        %495 = vmatprep.subr.mxu0 0.0
        %496 = vmatpush2.msra.mxu0 %v310
        %497 = vmatprep.subr.mxu0 0.0
        %498 = vmatpush2.msra.mxu0 %v309
        %499 = vmatprep.subr.mxu0 0.0
        %500 = vmatpush2.msra.mxu0 %v308
        %501 = vmatprep.subr.mxu0 0.0
        %502 = vmatpush2.msra.mxu0 %v307
        %503 = vmatprep.subr.mxu0 0.0
        %504 = vmatpush2.msra.mxu0 %v306
        %505 = vmatprep.subr.mxu0 0.0
        %506 = vmatpush2.msra.mxu0 %v305
        %507 = vmatprep.subr.mxu0 0.0
        %508 = vmatpush2.msra.mxu0 %v304
        %509 = vmatprep.subr.mxu0 0.0
        %510 = vmatpush2.msra.mxu0 %v303
        %511 = vmatprep.subr.mxu0 0.0
        %512 = vmatpush2.msra.mxu0 %v302
        %513 = vmatprep.subr.mxu0 0.0
        %514 = vmatpush2.msra.mxu0 %v301
        %515 = vmatprep.subr.mxu0 0.0
        %516 = vmatpush2.msra.mxu0 %v300
        %517 = vmatprep.mubr.f32.mxu0 %v203
        %518 = vmatmul.mubr.f32.gmra.mxu0 %v202
        %v519 = vpop.f32.mrf.mxu0
        %v520 = vadd.f32 %v390, %v519
        %v521 = vpop.f32.mrf.mxu0
        %522 = vmatprep.mubr.f32.mxu0 %v207
        %523 = vmatmul.mubr.f32.gmra.mxu0 %v206
        %v524 = vpop.f32.mrf.mxu0
        %v525 = vadd.f32 %v395, %v524
        %v526 = vpop.f32.mrf.mxu0
        %527 = vmatprep.mubr.f32.mxu0 %v211
        %528 = vmatmul.mubr.f32.gmra.mxu0 %v210
        %v529 = vpop.f32.mrf.mxu0
        %v530 = vadd.f32 %v400, %v529
        %v531 = vpop.f32.mrf.mxu0
        %532 = vmatprep.mubr.f32.mxu0 %v215
        %533 = vmatmul.mubr.f32.gmra.mxu0 %v214
        %v534 = vpop.f32.mrf.mxu0
        %v535 = vadd.f32 %v405, %v534
        %v536 = vpop.f32.mrf.mxu0
        %537 = vmatprep.mubr.f32.mxu0 %v219
        %538 = vmatmul.mubr.f32.gmra.mxu0 %v218
        %v539 = vpop.f32.mrf.mxu0
        %v540 = vadd.f32 %v410, %v539
        %v541 = vpop.f32.mrf.mxu0
        %542 = vmatprep.mubr.f32.mxu0 %v223
        %543 = vmatmul.mubr.f32.gmra.mxu0 %v222
        %v544 = vpop.f32.mrf.mxu0
        %v545 = vadd.f32 %v415, %v544
        %v546 = vpop.f32.mrf.mxu0
        %547 = vmatprep.mubr.f32.mxu0 %v227
        %548 = vmatmul.mubr.f32.gmra.mxu0 %v226
        %v549 = vpop.f32.mrf.mxu0
        %v550 = vadd.f32 %v420, %v549
        %v551 = vpop.f32.mrf.mxu0
        %552 = vmatprep.mubr.f32.mxu0 %v231
        %553 = vmatmul.mubr.f32.gmra.mxu0 %v230
        %v554 = vpop.f32.mrf.mxu0
        %v555 = vadd.f32 %v425, %v554
        %v556 = vpop.f32.mrf.mxu0
        %557 = vmatprep.mubr.f32.mxu0 %v235
        %558 = vmatmul.mubr.f32.gmra.mxu0 %v234
        %v559 = vpop.f32.mrf.mxu0
        %v560 = vadd.f32 %v430, %v559
        %v561 = vpop.f32.mrf.mxu0
        %562 = vmatprep.mubr.f32.mxu0 %v239
        %563 = vmatmul.mubr.f32.gmra.mxu0 %v238
        %v564 = vpop.f32.mrf.mxu0
        %v565 = vadd.f32 %v435, %v564
        %v566 = vpop.f32.mrf.mxu0
        %567 = vmatprep.mubr.f32.mxu0 %v243
        %568 = vmatmul.mubr.f32.gmra.mxu0 %v242
        %v569 = vpop.f32.mrf.mxu0
        %v570 = vadd.f32 %v440, %v569
        %v571 = vpop.f32.mrf.mxu0
        %572 = vmatprep.mubr.f32.mxu0 %v247
        %573 = vmatmul.mubr.f32.gmra.mxu0 %v246
        %v574 = vpop.f32.mrf.mxu0
        %v575 = vadd.f32 %v445, %v574
        %v576 = vpop.f32.mrf.mxu0
        %577 = vmatprep.mubr.f32.mxu0 %v251
        %578 = vmatmul.mubr.f32.gmra.mxu0 %v250
        %v579 = vpop.f32.mrf.mxu0
        %v580 = vadd.f32 %v450, %v579
        %v581 = vpop.f32.mrf.mxu0
        %582 = vdwg.mxu0
        %v583 = vmax.f32 %v520, 0.0
        %v584 = vmax.f32 %v525, 0.0
        %v585 = vmax.f32 %v530, 0.0
        %v586 = vmax.f32 %v535, 0.0
        %v587 = vmax.f32 %v540, 0.0
        %v588 = vmax.f32 %v545, 0.0
        %v589 = vmax.f32 %v550, 0.0
        %v590 = vmax.f32 %v555, 0.0
        %v591 = vmax.f32 %v560, 0.0
        %v592 = vmax.f32 %v565, 0.0
        %v593 = vmax.f32 %v570, 0.0
        %v594 = vmax.f32 %v575, 0.0
        %v595 = vmax.f32 %v580, 0.0
        %vm596 = vcmask 523264
        %597 = vst.msk [vmem:[%s177] sm:$0xff] %vm596, %v583
        %598 = vst.msk [vmem:[%s177 + $0x8] sm:$0xff] %vm596, %v584
        %599 = vst.msk [vmem:[%s177 + $0x10] sm:$0xff] %vm596, %v585
        %600 = vst.msk [vmem:[%s177 + $0x18] sm:$0xff] %vm596, %v586
        %601 = vst.msk [vmem:[%s177 + $0x20] sm:$0xff] %vm596, %v587
        %602 = vst.msk [vmem:[%s177 + $0x28] sm:$0xff] %vm596, %v588
        %603 = vst.msk [vmem:[%s177 + $0x30] sm:$0xff] %vm596, %v589
        %604 = vst.msk [vmem:[%s177 + $0x38] sm:$0xff] %vm596, %v590
        %605 = vst.msk [vmem:[%s177 + $0x40] sm:$0xff] %vm596, %v591
        %606 = vst.msk [vmem:[%s177 + $0x48] sm:$0xff] %vm596, %v592
        %607 = vst.msk [vmem:[%s177 + $0x50] sm:$0xff] %vm596, %v593
        %608 = vst.msk [vmem:[%s177 + $0x58] sm:$0xff] %vm596, %v594
        %609 = vst.msk [vmem:[%s177 + $0x60] sm:$0xff] %vm596, %v595
        %s610 = sand.u32 %s90, 1
        %s611 = sand.u32 %s90, 1
        %s612 = smul.addr %s611, 104
        %s613 = scalar_lea.vmem [#allocation2], %s612
        // Predicated region
        $region33: #{dqn_forward.5} parent=31 // pred_check
          %p614 = pneg %p100
        $region34: #{dqn_forward.5} parent=31 // pred_check_branch
          %616 = sbr.rel (%p614) target = $region36
        $region35: #{dqn_forward.5} parent=31 // pred_region
          %s617 = smul.u32 13, %s14
          %s618 = ssub.s32 25, %s617
          %p619 = scmp.lt.s32.totalorder %s618, 13
          %s620 = scalar_select %p619, %s618, 13
          %s621 = smul.u32 128, %s620
          %p622 = scmp.ne.s32.totalorder 0, %s621
          %s623 = smul.addr %s617, 8
          %s624 = scalar_lea.vmem %s3, %s623
          // Predicated region
          $region37: #{dqn_forward.5} parent=35 // pred_check
            %p625 = pneg %p622
          $region38: #{dqn_forward.5} parent=35 // pred_check_branch
            %627 = sbr.rel (%p625) target = $region40
          $region39: #{dqn_forward.5} parent=35 // pred_region
            // Predicated region
            $region41: #{dqn_forward.5} parent=39 // pred_check
              _
            $region42: #{dqn_forward.5} parent=39 // pred_check_branch
              %629 = sbr.rel (0) target = $region44
            $region43: #{dqn_forward.5} parent=39 // pred_region
              // Predicated region
              $region63: #{dqn_forward.5} parent=43 // pred_check
                _
              $region64: #{dqn_forward.5} parent=43 // pred_check_branch
                %704 = sbr.rel (0) target = $region66
              $region65: #{dqn_forward.5} parent=43 // pred_region
                %s705 = sdiv.u32.pop %s620, 13
                %s706 = srem.u32.pop %s620, 13
                // While loop
                $region67: #{dqn_forward.5} parent=65 // loop_pre_header
                  _
                $region68: #{dqn_forward.5} parent=65 // loop_header
                  %s708 = sphi 0, %s710
                  %p709 = scmp.ge.s32.totalorder %s708, %s705
                  %s713 = sphi 0, %s744
                  %s714 = sphi %s613, %s747
                  %s715 = sphi %s624, %s748
                $region69: #{dqn_forward.5} parent=65 // loop_header_branch
                  %712 = sbr.rel (%p709) target = $region73
                $region70: #{dqn_forward.5} parent=65 // loop_body
                  %v716 = vld [vmem:[%s714] sm:$0xff]
                  %717 = vst [vmem:[%s715] sm:$0xff] %v716
                  %v718 = vld [vmem:[%s714 + $0x8] sm:$0xff]
                  %719 = vst [vmem:[%s715 + $0x8] sm:$0xff] %v718
                  %v720 = vld [vmem:[%s714 + $0x10] sm:$0xff]
                  %721 = vst [vmem:[%s715 + $0x10] sm:$0xff] %v720
                  %v722 = vld [vmem:[%s714 + $0x18] sm:$0xff]
                  %723 = vst [vmem:[%s715 + $0x18] sm:$0xff] %v722
                  %v724 = vld [vmem:[%s714 + $0x20] sm:$0xff]
                  %725 = vst [vmem:[%s715 + $0x20] sm:$0xff] %v724
                  %v726 = vld [vmem:[%s714 + $0x28] sm:$0xff]
                  %727 = vst [vmem:[%s715 + $0x28] sm:$0xff] %v726
                  %v728 = vld [vmem:[%s714 + $0x30] sm:$0xff]
                  %729 = vst [vmem:[%s715 + $0x30] sm:$0xff] %v728
                  %v730 = vld [vmem:[%s714 + $0x38] sm:$0xff]
                  %731 = vst [vmem:[%s715 + $0x38] sm:$0xff] %v730
                  %v732 = vld [vmem:[%s714 + $0x40] sm:$0xff]
                  %733 = vst [vmem:[%s715 + $0x40] sm:$0xff] %v732
                  %v734 = vld [vmem:[%s714 + $0x48] sm:$0xff]
                  %735 = vst [vmem:[%s715 + $0x48] sm:$0xff] %v734
                  %v736 = vld [vmem:[%s714 + $0x50] sm:$0xff]
                  %737 = vst [vmem:[%s715 + $0x50] sm:$0xff] %v736
                  %v738 = vld [vmem:[%s714 + $0x58] sm:$0xff]
                  %739 = vst [vmem:[%s715 + $0x58] sm:$0xff] %v738
                  %v740 = vld [vmem:[%s714 + $0x60] sm:$0xff]
                  %741 = vst [vmem:[%s715 + $0x60] sm:$0xff] %v740
                  %s742 = sadd.s32 1, %s713
                  %p743 = scmp.ge.s32.totalorder %s742, %s705
                  %s744 = scalar_select %p743, 0, %s742
                  %s745 = smul.u32 %s744, 104
                  %s746 = smul.u32 %s744, 104
                  %s747 = scalar_lea.vmem %s613, %s745 [#allocation2]
                  %s748 = scalar_lea.vmem %s624, %s746
                $region71: #{dqn_forward.5} parent=65 // loop_footer
                  %s710 = sadd.s32 %s708, 1
                $region72: #{dqn_forward.5} parent=65 // loop_footer_branch
                  %707 = sbr.rel target = $region68
                $region73: #{dqn_forward.5} parent=65 // loop_exit
                  _
                %s749 = sdiv.u32.pop %s620, 13
                %s750 = srem.u32.pop %s620, 13
                %s751 = smul.u32 %s749, 13
                %s752 = smul.u32 8, %s751
                %s753 = scalar_lea.vmem %s613, %s752 [#allocation2]
                %s754 = smul.u32 8, %s751
                %s755 = scalar_lea.vmem %s624, %s754
                // While loop
                $region74: #{dqn_forward.5} parent=65 // loop_pre_header
                  _
                $region75: #{dqn_forward.5} parent=65 // loop_header
                  %s757 = sphi 0, %s759
                  %p758 = scmp.ge.s32.totalorder %s757, %s750
                  %s762 = sphi 0, %s769
                  %s763 = sphi %s753, %s772
                  %s764 = sphi %s755, %s773
                $region76: #{dqn_forward.5} parent=65 // loop_header_branch
                  %761 = sbr.rel (%p758) target = $region80
                $region77: #{dqn_forward.5} parent=65 // loop_body
                  %v765 = vld [vmem:[%s763] sm:$0xff]
                  %766 = vst [vmem:[%s764] sm:$0xff] %v765
                  %s767 = sadd.s32 1, %s762
                  %p768 = scmp.ge.s32.totalorder %s767, %s750
                  %s769 = scalar_select %p768, 0, %s767
                  %s770 = smul.u32 %s769, 8
                  %s771 = smul.u32 %s769, 8
                  %s772 = scalar_lea.vmem %s753, %s770 [#allocation2]
                  %s773 = scalar_lea.vmem %s755, %s771
                $region78: #{dqn_forward.5} parent=65 // loop_footer
                  %s759 = sadd.s32 %s757, 1
                $region79: #{dqn_forward.5} parent=65 // loop_footer_branch
                  %756 = sbr.rel target = $region75
                $region80: #{dqn_forward.5} parent=65 // loop_exit
                  _
              $region66: #{dqn_forward.5} parent=43 // pred_fallthru
                _
              // Predicated region
              $region81: #{dqn_forward.5} parent=43 // pred_check
                _
              $region82: #{dqn_forward.5} parent=43 // pred_check_branch
                %775 = sbr.rel target = $region84
              $region83: #{dqn_forward.5} parent=43 // pred_region
                _
              $region84: #{dqn_forward.5} parent=43 // pred_fallthru
                _
            $region44: #{dqn_forward.5} parent=39 // pred_fallthru
              _
            // Predicated region
            $region45: #{dqn_forward.5} parent=39 // pred_check
              _
            $region46: #{dqn_forward.5} parent=39 // pred_check_branch
              %631 = sbr.rel target = $region48
            $region47: #{dqn_forward.5} parent=39 // pred_region
              %s633 = ssub.s32 256, 1
              %s634 = sdiv.u32.pop %s620, 13
              %s635 = srem.u32.pop %s620, 13
              // While loop
              $region49: #{dqn_forward.5} parent=47 // loop_pre_header
                _
              $region50: #{dqn_forward.5} parent=47 // loop_header
                %s637 = sphi 0, %s639
                %p638 = scmp.ge.s32.totalorder %s637, %s634
                %s642 = sphi 0, %s673
                %s643 = sphi %s613, %s676
                %s644 = sphi %s624, %s677
              $region51: #{dqn_forward.5} parent=47 // loop_header_branch
                %641 = sbr.rel (%p638) target = $region55
              $region52: #{dqn_forward.5} parent=47 // loop_body
                %v645 = vld [vmem:[%s643] sm:%s633]
                %646 = vst [vmem:[%s644] sm:%s633] %v645
                %v647 = vld [vmem:[%s643 + $0x8] sm:%s633]
                %648 = vst [vmem:[%s644 + $0x8] sm:%s633] %v647
                %v649 = vld [vmem:[%s643 + $0x10] sm:%s633]
                %650 = vst [vmem:[%s644 + $0x10] sm:%s633] %v649
                %v651 = vld [vmem:[%s643 + $0x18] sm:%s633]
                %652 = vst [vmem:[%s644 + $0x18] sm:%s633] %v651
                %v653 = vld [vmem:[%s643 + $0x20] sm:%s633]
                %654 = vst [vmem:[%s644 + $0x20] sm:%s633] %v653
                %v655 = vld [vmem:[%s643 + $0x28] sm:%s633]
                %656 = vst [vmem:[%s644 + $0x28] sm:%s633] %v655
                %v657 = vld [vmem:[%s643 + $0x30] sm:%s633]
                %658 = vst [vmem:[%s644 + $0x30] sm:%s633] %v657
                %v659 = vld [vmem:[%s643 + $0x38] sm:%s633]
                %660 = vst [vmem:[%s644 + $0x38] sm:%s633] %v659
                %v661 = vld [vmem:[%s643 + $0x40] sm:%s633]
                %662 = vst [vmem:[%s644 + $0x40] sm:%s633] %v661
                %v663 = vld [vmem:[%s643 + $0x48] sm:%s633]
                %664 = vst [vmem:[%s644 + $0x48] sm:%s633] %v663
                %v665 = vld [vmem:[%s643 + $0x50] sm:%s633]
                %666 = vst [vmem:[%s644 + $0x50] sm:%s633] %v665
                %v667 = vld [vmem:[%s643 + $0x58] sm:%s633]
                %668 = vst [vmem:[%s644 + $0x58] sm:%s633] %v667
                %v669 = vld [vmem:[%s643 + $0x60] sm:%s633]
                %670 = vst [vmem:[%s644 + $0x60] sm:%s633] %v669
                %s671 = sadd.s32 1, %s642
                %p672 = scmp.ge.s32.totalorder %s671, %s634
                %s673 = scalar_select %p672, 0, %s671
                %s674 = smul.u32 %s673, 104
                %s675 = smul.u32 %s673, 104
                %s676 = scalar_lea.vmem %s613, %s674 [#allocation2]
                %s677 = scalar_lea.vmem %s624, %s675
              $region53: #{dqn_forward.5} parent=47 // loop_footer
                %s639 = sadd.s32 %s637, 1
              $region54: #{dqn_forward.5} parent=47 // loop_footer_branch
                %636 = sbr.rel target = $region50
              $region55: #{dqn_forward.5} parent=47 // loop_exit
                _
              %s678 = sdiv.u32.pop %s620, 13
              %s679 = srem.u32.pop %s620, 13
              %s680 = smul.u32 %s678, 13
              %s681 = smul.u32 8, %s680
              %s682 = scalar_lea.vmem %s613, %s681 [#allocation2]
              %s683 = smul.u32 8, %s680
              %s684 = scalar_lea.vmem %s624, %s683
              // While loop
              $region56: #{dqn_forward.5} parent=47 // loop_pre_header
                _
              $region57: #{dqn_forward.5} parent=47 // loop_header
                %s686 = sphi 0, %s688
                %p687 = scmp.ge.s32.totalorder %s686, %s679
                %s691 = sphi 0, %s698
                %s692 = sphi %s682, %s701
                %s693 = sphi %s684, %s702
              $region58: #{dqn_forward.5} parent=47 // loop_header_branch
                %690 = sbr.rel (%p687) target = $region62
              $region59: #{dqn_forward.5} parent=47 // loop_body
                %v694 = vld [vmem:[%s692] sm:%s633]
                %695 = vst [vmem:[%s693] sm:%s633] %v694
                %s696 = sadd.s32 1, %s691
                %p697 = scmp.ge.s32.totalorder %s696, %s679
                %s698 = scalar_select %p697, 0, %s696
                %s699 = smul.u32 %s698, 8
                %s700 = smul.u32 %s698, 8
                %s701 = scalar_lea.vmem %s682, %s699 [#allocation2]
                %s702 = scalar_lea.vmem %s684, %s700
              $region60: #{dqn_forward.5} parent=47 // loop_footer
                %s688 = sadd.s32 %s686, 1
              $region61: #{dqn_forward.5} parent=47 // loop_footer_branch
                %685 = sbr.rel target = $region57
              $region62: #{dqn_forward.5} parent=47 // loop_exit
                _
            $region48: #{dqn_forward.5} parent=39 // pred_fallthru
              _
          $region40: #{dqn_forward.5} parent=35 // pred_fallthru
            _
          %776 = vnop
        $region36: #{dqn_forward.5} parent=31 // pred_fallthru
          _
      $region32: #{dqn_forward.5} parent=5 // pred_fallthru
        _
      %p777 = scmp.le.s32.totalorder 2, %s9
      // Predicated region
      $region85: #{dqn_forward.5} parent=5 // pred_check
        %p778 = pneg %p777
      $region86: #{dqn_forward.5} parent=5 // pred_check_branch
        %780 = sbr.rel (%p778) target = $region88
      $region87: #{dqn_forward.5} parent=5 // pred_region
        %s781 = ssub.s32 %s9, 2
        // Predicated region
        $region89: #{dqn_forward.5} parent=87 // pred_check
          %p782 = pneg %p106
        $region90: #{dqn_forward.5} parent=87 // pred_check_branch
          %784 = sbr.rel (%p782) target = $region92
        $region91: #{dqn_forward.5} parent=87 // pred_region
          %s785 = sand.u32 %s91, 1
          %s786 = sand.u32 %s91, 1
          %s787 = smul.addr %s786, 104
          %s788 = scalar_lea.vmem [#allocation2], %s787
        $region92: #{dqn_forward.5} parent=87 // pred_fallthru
          _
      $region88: #{dqn_forward.5} parent=5 // pred_fallthru
        _
    $region6: #{dqn_forward.5} parent=1 // loop_footer
      %s13 = sadd.s32 1, %s9
    $region7: #{dqn_forward.5} parent=1 // loop_footer_branch
      %8 = sbr.rel target = $region3
    $region8: #{dqn_forward.5} parent=1 // loop_exit
      _

// kernel: dqn_forward.6
$region0: #{dqn_forward.6}
  #allocation0 [shape = 'u32[]', space=smem, size = 0x4, offset = 0x4, fixed_abs, tag = 'smem constant byte address 0x4 - core index']
  #allocation1 [shape = 'u32[144,128]{1,0:T(1,128)}', space=vmem, size = 0x12000, scoped, tag = 'internal scratch']
  %s0 = inlined_call_operand.vmem [shape: f32[128,576], index: 0, kind: input, shape index: {}]
  %s1 = inlined_call_operand.vmem [shape: f32[576,64], index: 1, kind: input, shape index: {}]
  %s2 = inlined_call_operand.vmem [shape: f32[1,64], index: 2, kind: input, shape index: {}]
  %s3 = inlined_call_operand.vmem [shape: f32[128,64], index: 3, kind: output, shape index: {}]
  %s4 = sld [smem:[#allocation0]]
  $region45: #{dqn_forward.6} parent=0
    _
  %s6 = ssub.s32 1, %s4
  %s7 = scalar_select 0, %s6, %s4
  loop: start=0, step=1, limit=4
  $region2: #{dqn_forward.6} parent=0 // loop_pre_header
    _
  $region3: #{dqn_forward.6} parent=0 // loop_header
    %s9 = sphi 0, %s13
    %p10 = scmp.ge.s32.totalorder %s9, 4
    %s19 = sphi 0, %s21
    %s22 = sphi 0, %s19
    %s23 = sphi 0, %s22
    %s39 = sphi 0, %s23
    %s43 = sphi 0, %s43
    %s45 = sphi 0, %s43
    %s46 = sphi 0, %s45
    %s60 = sphi 0, %s46
    %s64 = sphi 0, %s64
    %s66 = sphi 0, %s64
    %s67 = sphi 0, %s66
    %s81 = sphi 0, %s67
    %s87 = sphi 0, %s89
    %s90 = sphi 0, %s87
    %s91 = sphi 0, %s90
    %s107 = sphi 0, %s91
  $region4: #{dqn_forward.6} parent=0 // loop_header_branch
    %12 = sbr.rel (%p10) target = $region8
  $region5: #{dqn_forward.6} parent=0 // loop_body
    %s14 = ssub.s32 %s9, 1
    %s15 = ssub.s32 %s9, 2
    %s16 = sadd.s32 %s9, 1
    %s17 = ssub.s32 %s9, %s16
    %p18 = scmp.eq.s32.totalorder %s17, 0
    %s20 = sadd.s32 %s19, 1
    %s21 = scalar_select %p18, %s19, %s20
    %p24 = pneg %p18
    %p25 = scmp.eq.s32.totalorder %s9, 1
    %p26 = por %p24, %p25
    %p27 = scmp.ne.s32.totalorder %s19, %s22
    %p28 = scmp.eq.s32.totalorder %s9, 0
    %p29 = por %p27, %p28
    %p30 = scmp.ne.s32.totalorder %s19, %s22
    %p31 = scmp.eq.s32.totalorder %s14, 1
    %p32 = por %p30, %p31
    %p33 = scmp.ne.s32.totalorder %s22, %s23
    %p34 = scmp.eq.s32.totalorder %s14, 0
    %p35 = por %p33, %p34
    %p36 = scmp.ne.s32.totalorder %s22, %s23
    %p37 = scmp.eq.s32.totalorder %s15, 1
    %p38 = por %p36, %p37
    %p40 = scmp.ne.s32.totalorder %s23, %s39
    %p41 = scmp.eq.s32.totalorder %s15, 0
    %p42 = por %p40, %p41
    %s44 = sadd.s32 %s43, 1
    %p47 = scmp.eq.s32.totalorder %s9, 1
    %p48 = scmp.ne.s32.totalorder %s43, %s45
    %p49 = scmp.eq.s32.totalorder %s9, 0
    %p50 = por %p48, %p49
    %p51 = scmp.ne.s32.totalorder %s43, %s45
    %p52 = scmp.eq.s32.totalorder %s14, 1
    %p53 = por %p51, %p52
    %p54 = scmp.ne.s32.totalorder %s45, %s46
    %p55 = scmp.eq.s32.totalorder %s14, 0
    %p56 = por %p54, %p55
    %p57 = scmp.ne.s32.totalorder %s45, %s46
    %p58 = scmp.eq.s32.totalorder %s15, 1
    %p59 = por %p57, %p58
    %p61 = scmp.ne.s32.totalorder %s46, %s60
    %p62 = scmp.eq.s32.totalorder %s15, 0
    %p63 = por %p61, %p62
    %s65 = sadd.s32 %s64, 1
    %p68 = scmp.eq.s32.totalorder %s9, 1
    %p69 = scmp.ne.s32.totalorder %s64, %s66
    %p70 = scmp.eq.s32.totalorder %s9, 0
    %p71 = por %p69, %p70
    %p72 = scmp.ne.s32.totalorder %s64, %s66
    %p73 = scmp.eq.s32.totalorder %s14, 1
    %p74 = por %p72, %p73
    %p75 = scmp.ne.s32.totalorder %s66, %s67
    %p76 = scmp.eq.s32.totalorder %s14, 0
    %p77 = por %p75, %p76
    %p78 = scmp.ne.s32.totalorder %s66, %s67
    %p79 = scmp.eq.s32.totalorder %s15, 1
    %p80 = por %p78, %p79
    %p82 = scmp.ne.s32.totalorder %s67, %s81
    %p83 = scmp.eq.s32.totalorder %s15, 0
    %p84 = por %p82, %p83
    %s85 = ssub.s32 %s9, %s16
    %p86 = scmp.eq.s32.totalorder %s85, 0
    %s88 = sadd.s32 %s87, 1
    %s89 = scalar_select %p86, %s87, %s88
    %p92 = pneg %p86
    %p93 = scmp.eq.s32.totalorder %s9, 1
    %p94 = por %p92, %p93
    %p95 = scmp.ne.s32.totalorder %s87, %s90
    %p96 = scmp.eq.s32.totalorder %s9, 0
    %p97 = por %p95, %p96
    %p98 = scmp.ne.s32.totalorder %s87, %s90
    %p99 = scmp.eq.s32.totalorder %s14, 1
    %p100 = por %p98, %p99
    %p101 = scmp.ne.s32.totalorder %s90, %s91
    %p102 = scmp.eq.s32.totalorder %s14, 0
    %p103 = por %p101, %p102
    %p104 = scmp.ne.s32.totalorder %s90, %s91
    %p105 = scmp.eq.s32.totalorder %s15, 1
    %p106 = por %p104, %p105
    %p108 = scmp.ne.s32.totalorder %s91, %s107
    %p109 = scmp.eq.s32.totalorder %s15, 0
    %p110 = por %p108, %p109
    %p111 = scmp.le.s32.totalorder 1, %s9
    %p112 = scmp.lt.s32.totalorder %s9, 3
    %p113 = pnand %p111, %p112
    %p114 = pneg %p113
    // Predicated region
    $region9: #{dqn_forward.6} parent=5 // pred_check
      _
    $region10: #{dqn_forward.6} parent=5 // pred_check_branch
      %116 = sbr.rel (%p113) target = $region12
    $region11: #{dqn_forward.6} parent=5 // pred_region
      %s117 = ssub.s32 %s9, 1
      // Predicated region
      $region13: #{dqn_forward.6} parent=11 // pred_check
        %p118 = pneg %p56
      $region14: #{dqn_forward.6} parent=11 // pred_check_branch
        %120 = sbr.rel (%p118) target = $region16
      $region15: #{dqn_forward.6} parent=11 // pred_region
        _
      $region16: #{dqn_forward.6} parent=11 // pred_fallthru
        _
      // Predicated region
      $region17: #{dqn_forward.6} parent=11 // pred_check
        %p121 = pneg %p77
      $region18: #{dqn_forward.6} parent=11 // pred_check_branch
        %123 = sbr.rel (%p121) target = $region20
      $region19: #{dqn_forward.6} parent=11 // pred_region
        _
      $region20: #{dqn_forward.6} parent=11 // pred_fallthru
        _
    $region12: #{dqn_forward.6} parent=5 // pred_fallthru
      _
    %p124 = scmp.lt.s32.totalorder %s9, 2
    // Predicated region
    $region21: #{dqn_forward.6} parent=5 // pred_check
      %p125 = pneg %p124
    $region22: #{dqn_forward.6} parent=5 // pred_check_branch
      %127 = sbr.rel (%p125) target = $region24
    $region23: #{dqn_forward.6} parent=5 // pred_region
      // Predicated region
      $region25: #{dqn_forward.6} parent=23 // pred_check
        %p128 = pneg %p29
      $region26: #{dqn_forward.6} parent=23 // pred_check_branch
        %130 = sbr.rel (%p128) target = $region28
      $region27: #{dqn_forward.6} parent=23 // pred_region
        %s131 = smul.u32 8, %s9
        %p132 = scmp.lt.s32.totalorder %s131, 15
        %s133 = scalar_select %p132, %s131, 15
        %s134 = smul.addr %s133, 5
        %s135 = smul.addr %s134, 8
        %s136 = scalar_lea.vmem %s0, %s135
        %s137 = smul.u32 8, %s9
      $region28: #{dqn_forward.6} parent=23 // pred_fallthru
        _
    $region24: #{dqn_forward.6} parent=5 // pred_fallthru
      _
    %p138 = scmp.le.s32.totalorder 1, %s9
    %p139 = scmp.lt.s32.totalorder %s9, 3
    %p140 = pnand %p138, %p139
    %p141 = pneg %p140
    // Predicated region
    $region29: #{dqn_forward.6} parent=5 // pred_check
      _
    $region30: #{dqn_forward.6} parent=5 // pred_check_branch
      %143 = sbr.rel (%p140) target = $region32
    $region31: #{dqn_forward.6} parent=5 // pred_region
      %s144 = ssub.s32 %s9, 1
      %s145 = smul.u32 8, %s14
      %p146 = scmp.lt.s32.totalorder %s145, 15
      %s147 = scalar_select %p146, %s145, 15
      %s148 = smul.addr %s147, 5
      %s149 = smul.addr %s148, 8
      %s150 = scalar_lea.vmem %s0, %s149
      %p151 = pneg %p35
      %p152 = pneg %p32
      %p153 = pneg %p56
      %p154 = pneg %p53
      %p155 = pneg %p77
      %p156 = pneg %p74
      %p157 = pneg %p103
      %p158 = pneg %p100
      %s159 = smul.u32 8, %s14
      %p160 = scmp.lt.s32.totalorder %s159, 15
      %s161 = scalar_select %p160, %s159, 15
      %s162 = smul.addr %s161, 8
      %s163 = scalar_lea.vmem %s3, %s162
      %s164 = smul.u32 8, %s14
      %p165 = scmp.lt.s32.totalorder %s164, 15
      %s166 = scalar_select %p165, %s164, 15
      %s167 = smul.addr %s166, 5
      %s168 = smul.addr %s167, 8
      %s169 = scalar_lea.vmem %s0, %s168
      %s170 = smul.u32 8, %s14
      %s171 = smul.u32 8, %s14
      %p172 = scmp.lt.s32.totalorder %s171, 15
      %s173 = scalar_select %p172, %s171, 15
      %s174 = smul.addr %s173, 8
      %s175 = scalar_lea.vmem %s3, %s174
      %s176 = smul.u32 8, %s14
      %v177 = vld [vmem:[%s169] sm:$0xff]
      %v178 = vld [vmem:[%s169 + $0x8] sm:$0xff]
      %v179 = vld [vmem:[%s169 + $0x10] sm:$0xff]
      %v180 = vld [vmem:[%s169 + $0x18] sm:$0xff]
      %v181 = vld [vmem:[%s169 + $0x20] sm:$0xff]
      %v182 = vld [vmem:[%s169 + $0x28] sm:$0xff]
      %v183 = vld [vmem:[%s169 + $0x30] sm:$0xff]
      %v184 = vld [vmem:[%s169 + $0x38] sm:$0xff]
      %v185 = vld [vmem:[%s169 + $0x40] sm:$0xff]
      %v186 = vld [vmem:[%s169 + $0x48] sm:$0xff]
      %v187 = vld [vmem:[%s169 + $0x50] sm:$0xff]
      %v188 = vld [vmem:[%s169 + $0x58] sm:$0xff]
      %v189 = vld [vmem:[%s169 + $0x60] sm:$0xff]
      %v190 = vld [vmem:[%s169 + $0x68] sm:$0xff]
      %v191 = vld [vmem:[%s169 + $0x70] sm:$0xff]
      %v192 = vld [vmem:[%s169 + $0x78] sm:$0xff]
      %v193 = vld [vmem:[%s169 + $0x80] sm:$0xff]
      %v194 = vld [vmem:[%s169 + $0x88] sm:$0xff]
      %v195 = vld [vmem:[%s169 + $0x90] sm:$0xff]
      %v196 = vld [vmem:[%s169 + $0x98] sm:$0xff]
      %v197 = vld [vmem:[%s169 + $0xa0] sm:$0xff]
      %v198 = vld [vmem:[%s169 + $0xa8] sm:$0xff]
      %v199 = vld [vmem:[%s169 + $0xb0] sm:$0xff]
      %v200 = vld [vmem:[%s169 + $0xb8] sm:$0xff]
      %v201 = vld [vmem:[%s169 + $0xc0] sm:$0xff]
      %v202 = vld [vmem:[%s169 + $0xc8] sm:$0xff]
      %v203 = vld [vmem:[%s169 + $0xd0] sm:$0xff]
      %v204 = vld [vmem:[%s169 + $0xd8] sm:$0xff]
      %v205 = vld [vmem:[%s169 + $0xe0] sm:$0xff]
      %v206 = vld [vmem:[%s169 + $0xe8] sm:$0xff]
      %v207 = vld [vmem:[%s169 + $0xf0] sm:$0xff]
      %v208 = vld [vmem:[%s169 + $0xf8] sm:$0xff]
      %v209 = vld [vmem:[%s169 + $0x100] sm:$0xff]
      %v210 = vld [vmem:[%s169 + $0x108] sm:$0xff]
      %v211 = vld [vmem:[%s169 + $0x110] sm:$0xff]
      %v212 = vld [vmem:[%s169 + $0x118] sm:$0xff]
      %v213 = vld [vmem:[%s169 + $0x120] sm:$0xff]
      %v214 = vld [vmem:[%s169 + $0x128] sm:$0xff]
      %v215 = vld [vmem:[%s169 + $0x130] sm:$0xff]
      %v216 = vld [vmem:[%s169 + $0x138] sm:$0xff]
      %v217 = vld [vmem:[%s1] sm:$0xff]
      %v218 = vld [vmem:[%s1 + $0x8] sm:$0xff]
      %v219 = vld [vmem:[%s1 + $0x10] sm:$0xff]
      %v220 = vld [vmem:[%s1 + $0x18] sm:$0xff]
      %v221 = vld [vmem:[%s1 + $0x20] sm:$0xff]
      %v222 = vld [vmem:[%s1 + $0x28] sm:$0xff]
      %v223 = vld [vmem:[%s1 + $0x30] sm:$0xff]
      %v224 = vld [vmem:[%s1 + $0x38] sm:$0xff]
      %v225 = vld [vmem:[%s1 + $0x40] sm:$0xff]
      %v226 = vld [vmem:[%s1 + $0x48] sm:$0xff]
      %v227 = vld [vmem:[%s1 + $0x50] sm:$0xff]
      %v228 = vld [vmem:[%s1 + $0x58] sm:$0xff]
      %v229 = vld [vmem:[%s1 + $0x60] sm:$0xff]
      %v230 = vld [vmem:[%s1 + $0x68] sm:$0xff]
      %v231 = vld [vmem:[%s1 + $0x70] sm:$0xff]
      %v232 = vld [vmem:[%s1 + $0x78] sm:$0xff]
      %v233 = vld [vmem:[%s1 + $0x80] sm:$0xff]
      %v234 = vld [vmem:[%s1 + $0x88] sm:$0xff]
      %v235 = vld [vmem:[%s1 + $0x90] sm:$0xff]
      %v236 = vld [vmem:[%s1 + $0x98] sm:$0xff]
      %v237 = vld [vmem:[%s1 + $0xa0] sm:$0xff]
      %v238 = vld [vmem:[%s1 + $0xa8] sm:$0xff]
      %v239 = vld [vmem:[%s1 + $0xb0] sm:$0xff]
      %v240 = vld [vmem:[%s1 + $0xb8] sm:$0xff]
      %v241 = vld [vmem:[%s1 + $0xc0] sm:$0xff]
      %v242 = vld [vmem:[%s1 + $0xc8] sm:$0xff]
      %v243 = vld [vmem:[%s1 + $0xd0] sm:$0xff]
      %v244 = vld [vmem:[%s1 + $0xd8] sm:$0xff]
      %v245 = vld [vmem:[%s1 + $0xe0] sm:$0xff]
      %v246 = vld [vmem:[%s1 + $0xe8] sm:$0xff]
      %v247 = vld [vmem:[%s1 + $0xf0] sm:$0xff]
      %v248 = vld [vmem:[%s1 + $0xf8] sm:$0xff]
      %v249 = vld [vmem:[%s1 + $0x100] sm:$0xff]
      %v250 = vld [vmem:[%s1 + $0x108] sm:$0xff]
      %v251 = vld [vmem:[%s1 + $0x110] sm:$0xff]
      %v252 = vld [vmem:[%s1 + $0x118] sm:$0xff]
      %v253 = vld [vmem:[%s1 + $0x120] sm:$0xff]
      %v254 = vld [vmem:[%s1 + $0x128] sm:$0xff]
      %v255 = vld [vmem:[%s1 + $0x130] sm:$0xff]
      %v256 = vld [vmem:[%s1 + $0x138] sm:$0xff]
      %v257 = vld [vmem:[%s1 + $0x140] sm:$0xff]
      %v258 = vld [vmem:[%s1 + $0x148] sm:$0xff]
      %v259 = vld [vmem:[%s1 + $0x150] sm:$0xff]
      %v260 = vld [vmem:[%s1 + $0x158] sm:$0xff]
      %v261 = vld [vmem:[%s1 + $0x160] sm:$0xff]
      %v262 = vld [vmem:[%s1 + $0x168] sm:$0xff]
      %v263 = vld [vmem:[%s1 + $0x170] sm:$0xff]
      %v264 = vld [vmem:[%s1 + $0x178] sm:$0xff]
      %v265 = vld [vmem:[%s1 + $0x180] sm:$0xff]
      %v266 = vld [vmem:[%s1 + $0x188] sm:$0xff]
      %v267 = vld [vmem:[%s1 + $0x190] sm:$0xff]
      %v268 = vld [vmem:[%s1 + $0x198] sm:$0xff]
      %v269 = vld [vmem:[%s1 + $0x1a0] sm:$0xff]
      %v270 = vld [vmem:[%s1 + $0x1a8] sm:$0xff]
      %v271 = vld [vmem:[%s1 + $0x1b0] sm:$0xff]
      %v272 = vld [vmem:[%s1 + $0x1b8] sm:$0xff]
      %v273 = vld [vmem:[%s1 + $0x1c0] sm:$0xff]
      %v274 = vld [vmem:[%s1 + $0x1c8] sm:$0xff]
      %v275 = vld [vmem:[%s1 + $0x1d0] sm:$0xff]
      %v276 = vld [vmem:[%s1 + $0x1d8] sm:$0xff]
      %v277 = vld [vmem:[%s1 + $0x1e0] sm:$0xff]
      %v278 = vld [vmem:[%s1 + $0x1e8] sm:$0xff]
      %v279 = vld [vmem:[%s1 + $0x1f0] sm:$0xff]
      %v280 = vld [vmem:[%s1 + $0x1f8] sm:$0xff]
      %v281 = vld [vmem:[%s1 + $0x200] sm:$0xff]
      %v282 = vld [vmem:[%s1 + $0x208] sm:$0xff]
      %v283 = vld [vmem:[%s1 + $0x210] sm:$0xff]
      %v284 = vld [vmem:[%s1 + $0x218] sm:$0xff]
      %v285 = vld [vmem:[%s1 + $0x220] sm:$0xff]
      %v286 = vld [vmem:[%s1 + $0x228] sm:$0xff]
      %v287 = vld [vmem:[%s1 + $0x230] sm:$0xff]
      %v288 = vld [vmem:[%s1 + $0x238] sm:$0xff]
      %v289 = vld [vmem:[%s2] sm:$0x1]
      %v291 = vlaneseq
      %v292 = vshrl.u32 %v291, 7
      %v293 = vsub.s32 0, %v292
      %v294 = vrot.slane %v289, %v293
      %vm296 = vcmask 523264
      %v298 = vsel %vm296, %v181, 0
      %v301 = vsel %vm296, %v186, 0
      %v304 = vsel %vm296, %v191, 0
      %v307 = vsel %vm296, %v196, 0
      %v310 = vsel %vm296, %v201, 0
      %v313 = vsel %vm296, %v206, 0
      %v316 = vsel %vm296, %v211, 0
      %v319 = vsel %vm296, %v216, 0
      %321 = vmatprep.subr.mxu0 0.0
      %322 = vmatpush1.msra.mxu0 %v232
      %323 = vmatprep.subr.mxu0 0.0
      %324 = vmatpush1.msra.mxu0 %v231
      %325 = vmatprep.subr.mxu0 0.0
      %326 = vmatpush1.msra.mxu0 %v230
      %327 = vmatprep.subr.mxu0 0.0
      %328 = vmatpush1.msra.mxu0 %v229
      %329 = vmatprep.subr.mxu0 0.0
      %330 = vmatpush1.msra.mxu0 %v228
      %331 = vmatprep.subr.mxu0 0.0
      %332 = vmatpush1.msra.mxu0 %v227
      %333 = vmatprep.subr.mxu0 0.0
      %334 = vmatpush1.msra.mxu0 %v226
      %335 = vmatprep.subr.mxu0 0.0
      %336 = vmatpush1.msra.mxu0 %v225
      %337 = vmatprep.subr.mxu0 0.0
      %338 = vmatpush1.msra.mxu0 %v224
      %339 = vmatprep.subr.mxu0 0.0
      %340 = vmatpush1.msra.mxu0 %v223
      %341 = vmatprep.subr.mxu0 0.0
      %342 = vmatpush1.msra.mxu0 %v222
      %343 = vmatprep.subr.mxu0 0.0
      %344 = vmatpush1.msra.mxu0 %v221
      %345 = vmatprep.subr.mxu0 0.0
      %346 = vmatpush1.msra.mxu0 %v220
      %347 = vmatprep.subr.mxu0 0.0
      %348 = vmatpush1.msra.mxu0 %v219
      %349 = vmatprep.subr.mxu0 0.0
      %350 = vmatpush1.msra.mxu0 %v218
      %351 = vmatprep.subr.mxu0 0.0
      %352 = vmatpush1.msra.mxu0 %v217
      %353 = vmatprep.subr.mxu0 0.0
      %354 = vmatpush2.msra.mxu0 %v248
      %355 = vmatprep.subr.mxu0 0.0
      %356 = vmatpush2.msra.mxu0 %v247
      %357 = vmatprep.subr.mxu0 0.0
      %358 = vmatpush2.msra.mxu0 %v246
      %359 = vmatprep.subr.mxu0 0.0
      %360 = vmatpush2.msra.mxu0 %v245
      %361 = vmatprep.subr.mxu0 0.0
      %362 = vmatpush2.msra.mxu0 %v244
      %363 = vmatprep.subr.mxu0 0.0
      %364 = vmatpush2.msra.mxu0 %v243
      %365 = vmatprep.subr.mxu0 0.0
      %366 = vmatpush2.msra.mxu0 %v242
      %367 = vmatprep.subr.mxu0 0.0
      %368 = vmatpush2.msra.mxu0 %v241
      %369 = vmatprep.subr.mxu0 0.0
      %370 = vmatpush2.msra.mxu0 %v240
      %371 = vmatprep.subr.mxu0 0.0
      %372 = vmatpush2.msra.mxu0 %v239
      %373 = vmatprep.subr.mxu0 0.0
      %374 = vmatpush2.msra.mxu0 %v238
      %375 = vmatprep.subr.mxu0 0.0
      %376 = vmatpush2.msra.mxu0 %v237
      %377 = vmatprep.subr.mxu0 0.0
      %378 = vmatpush2.msra.mxu0 %v236
      %379 = vmatprep.subr.mxu0 0.0
      %380 = vmatpush2.msra.mxu0 %v235
      %381 = vmatprep.subr.mxu0 0.0
      %382 = vmatpush2.msra.mxu0 %v234
      %383 = vmatprep.subr.mxu0 0.0
      %384 = vmatpush2.msra.mxu0 %v233
      %385 = vmatprep.mubr.f32.mxu0 %v178
      %386 = vmatmul.mubr.f32.gmra.mxu0 %v177
      %v387 = vpop.f32.mrf.mxu0
      %v388 = vadd.f32 %v294, %v387
      %v389 = vpop.f32.mrf.mxu0
      %390 = vmatprep.mubr.f32.mxu0 %v183
      %391 = vmatmul.mubr.f32.gmra.mxu0 %v182
      %v392 = vpop.f32.mrf.mxu0
      %v393 = vadd.f32 %v294, %v392
      %v394 = vpop.f32.mrf.mxu0
      %395 = vmatprep.mubr.f32.mxu0 %v188
      %396 = vmatmul.mubr.f32.gmra.mxu0 %v187
      %v397 = vpop.f32.mrf.mxu0
      %v398 = vadd.f32 %v294, %v397
      %v399 = vpop.f32.mrf.mxu0
      %400 = vmatprep.mubr.f32.mxu0 %v193
      %401 = vmatmul.mubr.f32.gmra.mxu0 %v192
      %v402 = vpop.f32.mrf.mxu0
      %v403 = vadd.f32 %v294, %v402
      %v404 = vpop.f32.mrf.mxu0
      %405 = vmatprep.mubr.f32.mxu0 %v198
      %406 = vmatmul.mubr.f32.gmra.mxu0 %v197
      %v407 = vpop.f32.mrf.mxu0
      %v408 = vadd.f32 %v294, %v407
      %v409 = vpop.f32.mrf.mxu0
      %410 = vmatprep.mubr.f32.mxu0 %v203
      %411 = vmatmul.mubr.f32.gmra.mxu0 %v202
      %v412 = vpop.f32.mrf.mxu0
      %v413 = vadd.f32 %v294, %v412
      %v414 = vpop.f32.mrf.mxu0
      %415 = vmatprep.mubr.f32.mxu0 %v208
      %416 = vmatmul.mubr.f32.gmra.mxu0 %v207
      %v417 = vpop.f32.mrf.mxu0
      %v418 = vadd.f32 %v294, %v417
      %v419 = vpop.f32.mrf.mxu0
      %420 = vmatprep.mubr.f32.mxu0 %v213
      %421 = vmatmul.mubr.f32.gmra.mxu0 %v212
      %v422 = vpop.f32.mrf.mxu0
      %v423 = vadd.f32 %v294, %v422
      %v424 = vpop.f32.mrf.mxu0
      %425 = vdwg.mxu0
      %426 = vmatprep.subr.mxu0 0.0
      %427 = vmatpush1.msra.mxu0 %v264
      %428 = vmatprep.subr.mxu0 0.0
      %429 = vmatpush1.msra.mxu0 %v263
      %430 = vmatprep.subr.mxu0 0.0
      %431 = vmatpush1.msra.mxu0 %v262
      %432 = vmatprep.subr.mxu0 0.0
      %433 = vmatpush1.msra.mxu0 %v261
      %434 = vmatprep.subr.mxu0 0.0
      %435 = vmatpush1.msra.mxu0 %v260
      %436 = vmatprep.subr.mxu0 0.0
      %437 = vmatpush1.msra.mxu0 %v259
      %438 = vmatprep.subr.mxu0 0.0
      %439 = vmatpush1.msra.mxu0 %v258
      %440 = vmatprep.subr.mxu0 0.0
      %441 = vmatpush1.msra.mxu0 %v257
      %442 = vmatprep.subr.mxu0 0.0
      %443 = vmatpush1.msra.mxu0 %v256
      %444 = vmatprep.subr.mxu0 0.0
      %445 = vmatpush1.msra.mxu0 %v255
      %446 = vmatprep.subr.mxu0 0.0
      %447 = vmatpush1.msra.mxu0 %v254
      %448 = vmatprep.subr.mxu0 0.0
      %449 = vmatpush1.msra.mxu0 %v253
      %450 = vmatprep.subr.mxu0 0.0
      %451 = vmatpush1.msra.mxu0 %v252
      %452 = vmatprep.subr.mxu0 0.0
      %453 = vmatpush1.msra.mxu0 %v251
      %454 = vmatprep.subr.mxu0 0.0
      %455 = vmatpush1.msra.mxu0 %v250
      %456 = vmatprep.subr.mxu0 0.0
      %457 = vmatpush1.msra.mxu0 %v249
      %458 = vmatprep.subr.mxu0 0.0
      %459 = vmatpush2.msra.mxu0 %v280
      %460 = vmatprep.subr.mxu0 0.0
      %461 = vmatpush2.msra.mxu0 %v279
      %462 = vmatprep.subr.mxu0 0.0
      %463 = vmatpush2.msra.mxu0 %v278
      %464 = vmatprep.subr.mxu0 0.0
      %465 = vmatpush2.msra.mxu0 %v277
      %466 = vmatprep.subr.mxu0 0.0
      %467 = vmatpush2.msra.mxu0 %v276
      %468 = vmatprep.subr.mxu0 0.0
      %469 = vmatpush2.msra.mxu0 %v275
      %470 = vmatprep.subr.mxu0 0.0
      %471 = vmatpush2.msra.mxu0 %v274
      %472 = vmatprep.subr.mxu0 0.0
      %473 = vmatpush2.msra.mxu0 %v273
      %474 = vmatprep.subr.mxu0 0.0
      %475 = vmatpush2.msra.mxu0 %v272
      %476 = vmatprep.subr.mxu0 0.0
      %477 = vmatpush2.msra.mxu0 %v271
      %478 = vmatprep.subr.mxu0 0.0
      %479 = vmatpush2.msra.mxu0 %v270
      %480 = vmatprep.subr.mxu0 0.0
      %481 = vmatpush2.msra.mxu0 %v269
      %482 = vmatprep.subr.mxu0 0.0
      %483 = vmatpush2.msra.mxu0 %v268
      %484 = vmatprep.subr.mxu0 0.0
      %485 = vmatpush2.msra.mxu0 %v267
      %486 = vmatprep.subr.mxu0 0.0
      %487 = vmatpush2.msra.mxu0 %v266
      %488 = vmatprep.subr.mxu0 0.0
      %489 = vmatpush2.msra.mxu0 %v265
      %490 = vmatprep.mubr.f32.mxu0 %v180
      %491 = vmatmul.mubr.f32.gmra.mxu0 %v179
      %v492 = vpop.f32.mrf.mxu0
      %v493 = vadd.f32 %v388, %v492
      %v494 = vpop.f32.mrf.mxu0
      %495 = vmatprep.mubr.f32.mxu0 %v185
      %496 = vmatmul.mubr.f32.gmra.mxu0 %v184
      %v497 = vpop.f32.mrf.mxu0
      %v498 = vadd.f32 %v393, %v497
      %v499 = vpop.f32.mrf.mxu0
      %500 = vmatprep.mubr.f32.mxu0 %v190
      %501 = vmatmul.mubr.f32.gmra.mxu0 %v189
      %v502 = vpop.f32.mrf.mxu0
      %v503 = vadd.f32 %v398, %v502
      %v504 = vpop.f32.mrf.mxu0
      %505 = vmatprep.mubr.f32.mxu0 %v195
      %506 = vmatmul.mubr.f32.gmra.mxu0 %v194
      %v507 = vpop.f32.mrf.mxu0
      %v508 = vadd.f32 %v403, %v507
      %v509 = vpop.f32.mrf.mxu0
      %510 = vmatprep.mubr.f32.mxu0 %v200
      %511 = vmatmul.mubr.f32.gmra.mxu0 %v199
      %v512 = vpop.f32.mrf.mxu0
      %v513 = vadd.f32 %v408, %v512
      %v514 = vpop.f32.mrf.mxu0
      %515 = vmatprep.mubr.f32.mxu0 %v205
      %516 = vmatmul.mubr.f32.gmra.mxu0 %v204
      %v517 = vpop.f32.mrf.mxu0
      %v518 = vadd.f32 %v413, %v517
      %v519 = vpop.f32.mrf.mxu0
      %520 = vmatprep.mubr.f32.mxu0 %v210
      %521 = vmatmul.mubr.f32.gmra.mxu0 %v209
      %v522 = vpop.f32.mrf.mxu0
      %v523 = vadd.f32 %v418, %v522
      %v524 = vpop.f32.mrf.mxu0
      %525 = vmatprep.mubr.f32.mxu0 %v215
      %526 = vmatmul.mubr.f32.gmra.mxu0 %v214
      %v527 = vpop.f32.mrf.mxu0
      %v528 = vadd.f32 %v423, %v527
      %v529 = vpop.f32.mrf.mxu0
      %530 = vdwg.mxu0
      %531 = vmatprep.subr.mxu0 0.0
      %532 = vmatpush1.msra.mxu0 0.0
      %533 = vmatprep.subr.mxu0 0.0
      %534 = vmatpush1.msra.mxu0 0.0
      %535 = vmatprep.subr.mxu0 0.0
      %536 = vmatpush1.msra.mxu0 0.0
      %537 = vmatprep.subr.mxu0 0.0
      %538 = vmatpush1.msra.mxu0 0.0
      %539 = vmatprep.subr.mxu0 0.0
      %540 = vmatpush1.msra.mxu0 0.0
      %541 = vmatprep.subr.mxu0 0.0
      %542 = vmatpush1.msra.mxu0 0.0
      %543 = vmatprep.subr.mxu0 0.0
      %544 = vmatpush1.msra.mxu0 0.0
      %545 = vmatprep.subr.mxu0 0.0
      %546 = vmatpush1.msra.mxu0 0.0
      %547 = vmatprep.subr.mxu0 0.0
      %548 = vmatpush1.msra.mxu0 %v288
      %549 = vmatprep.subr.mxu0 0.0
      %550 = vmatpush1.msra.mxu0 %v287
      %551 = vmatprep.subr.mxu0 0.0
      %552 = vmatpush1.msra.mxu0 %v286
      %553 = vmatprep.subr.mxu0 0.0
      %554 = vmatpush1.msra.mxu0 %v285
      %555 = vmatprep.subr.mxu0 0.0
      %556 = vmatpush1.msra.mxu0 %v284
      %557 = vmatprep.subr.mxu0 0.0
      %558 = vmatpush1.msra.mxu0 %v283
      %559 = vmatprep.subr.mxu0 0.0
      %560 = vmatpush1.msra.mxu0 %v282
      %561 = vmatprep.subr.mxu0 0.0
      %562 = vmatpush1.msra.mxu0 %v281
      %563 = vmatprep.subr.mxu0 0.0
      %564 = vmatpush2.msra.mxu0 0.0
      %565 = vmatprep.subr.mxu0 0.0
      %566 = vmatpush2.msra.mxu0 0.0
      %567 = vmatprep.subr.mxu0 0.0
      %568 = vmatpush2.msra.mxu0 0.0
      %569 = vmatprep.subr.mxu0 0.0
      %570 = vmatpush2.msra.mxu0 0.0
      %571 = vmatprep.subr.mxu0 0.0
      %572 = vmatpush2.msra.mxu0 0.0
      %573 = vmatprep.subr.mxu0 0.0
      %574 = vmatpush2.msra.mxu0 0.0
      %575 = vmatprep.subr.mxu0 0.0
      %576 = vmatpush2.msra.mxu0 0.0
      %577 = vmatprep.subr.mxu0 0.0
      %578 = vmatpush2.msra.mxu0 0.0
      %579 = vmatprep.subr.mxu0 0.0
      %580 = vmatpush2.msra.mxu0 0.0
      %581 = vmatprep.subr.mxu0 0.0
      %582 = vmatpush2.msra.mxu0 0.0
      %583 = vmatprep.subr.mxu0 0.0
      %584 = vmatpush2.msra.mxu0 0.0
      %585 = vmatprep.subr.mxu0 0.0
      %586 = vmatpush2.msra.mxu0 0.0
      %587 = vmatprep.subr.mxu0 0.0
      %588 = vmatpush2.msra.mxu0 0.0
      %589 = vmatprep.subr.mxu0 0.0
      %590 = vmatpush2.msra.mxu0 0.0
      %591 = vmatprep.subr.mxu0 0.0
      %592 = vmatpush2.msra.mxu0 0.0
      %593 = vmatprep.subr.mxu0 0.0
      %594 = vmatpush2.msra.mxu0 0.0
      %595 = vmatprep.mubr.f32.mxu0 0.0
      %596 = vmatmul.mubr.f32.gmra.mxu0 %v298
      %v597 = vpop.f32.mrf.mxu0
      %v598 = vadd.f32 %v493, %v597
      %v599 = vpop.f32.mrf.mxu0
      %600 = vmatprep.mubr.f32.mxu0 0.0
      %601 = vmatmul.mubr.f32.gmra.mxu0 %v301
      %v602 = vpop.f32.mrf.mxu0
      %v603 = vadd.f32 %v498, %v602
      %v604 = vpop.f32.mrf.mxu0
      %605 = vmatprep.mubr.f32.mxu0 0.0
      %606 = vmatmul.mubr.f32.gmra.mxu0 %v304
      %v607 = vpop.f32.mrf.mxu0
      %v608 = vadd.f32 %v503, %v607
      %v609 = vpop.f32.mrf.mxu0
      %610 = vmatprep.mubr.f32.mxu0 0.0
      %611 = vmatmul.mubr.f32.gmra.mxu0 %v307
      %v612 = vpop.f32.mrf.mxu0
      %v613 = vadd.f32 %v508, %v612
      %v614 = vpop.f32.mrf.mxu0
      %615 = vmatprep.mubr.f32.mxu0 0.0
      %616 = vmatmul.mubr.f32.gmra.mxu0 %v310
      %v617 = vpop.f32.mrf.mxu0
      %v618 = vadd.f32 %v513, %v617
      %v619 = vpop.f32.mrf.mxu0
      %620 = vmatprep.mubr.f32.mxu0 0.0
      %621 = vmatmul.mubr.f32.gmra.mxu0 %v313
      %v622 = vpop.f32.mrf.mxu0
      %v623 = vadd.f32 %v518, %v622
      %v624 = vpop.f32.mrf.mxu0
      %625 = vmatprep.mubr.f32.mxu0 0.0
      %626 = vmatmul.mubr.f32.gmra.mxu0 %v316
      %v627 = vpop.f32.mrf.mxu0
      %v628 = vadd.f32 %v523, %v627
      %v629 = vpop.f32.mrf.mxu0
      %630 = vmatprep.mubr.f32.mxu0 0.0
      %631 = vmatmul.mubr.f32.gmra.mxu0 %v319
      %v632 = vpop.f32.mrf.mxu0
      %v633 = vadd.f32 %v528, %v632
      %v634 = vpop.f32.mrf.mxu0
      %635 = vdwg.mxu0
      %v636 = vmax.f32 %v598, 0.0
      %v637 = vmax.f32 %v603, 0.0
      %v638 = vmax.f32 %v608, 0.0
      %v639 = vmax.f32 %v613, 0.0
      %v640 = vmax.f32 %v618, 0.0
      %v641 = vmax.f32 %v623, 0.0
      %v642 = vmax.f32 %v628, 0.0
      %v643 = vmax.f32 %v633, 0.0
      %644 = vst.msk [vmem:[%s175] sm:$0xff] %vm296, %v636
      %645 = vst.msk [vmem:[%s175 + $0x8] sm:$0xff] %vm296, %v637
      %646 = vst.msk [vmem:[%s175 + $0x10] sm:$0xff] %vm296, %v638
      %647 = vst.msk [vmem:[%s175 + $0x18] sm:$0xff] %vm296, %v639
      %648 = vst.msk [vmem:[%s175 + $0x20] sm:$0xff] %vm296, %v640
      %649 = vst.msk [vmem:[%s175 + $0x28] sm:$0xff] %vm296, %v641
      %650 = vst.msk [vmem:[%s175 + $0x30] sm:$0xff] %vm296, %v642
      %651 = vst.msk [vmem:[%s175 + $0x38] sm:$0xff] %vm296, %v643
      %s652 = smul.u32 8, %s14
      %p653 = scmp.lt.s32.totalorder %s652, 15
      %s654 = scalar_select %p653, %s652, 15
      %s655 = smul.addr %s654, 8
      %s656 = scalar_lea.vmem %s3, %s655
      // Predicated region
      $region33: #{dqn_forward.6} parent=31 // pred_check
        %p657 = pneg %p100
      $region34: #{dqn_forward.6} parent=31 // pred_check_branch
        %659 = sbr.rel (%p657) target = $region36
      $region35: #{dqn_forward.6} parent=31 // pred_region
        %s660 = smul.u32 8, %s14
      $region36: #{dqn_forward.6} parent=31 // pred_fallthru
        _
    $region32: #{dqn_forward.6} parent=5 // pred_fallthru
      _
    %p661 = scmp.le.s32.totalorder 2, %s9
    // Predicated region
    $region37: #{dqn_forward.6} parent=5 // pred_check
      %p662 = pneg %p661
    $region38: #{dqn_forward.6} parent=5 // pred_check_branch
      %664 = sbr.rel (%p662) target = $region40
    $region39: #{dqn_forward.6} parent=5 // pred_region
      %s665 = ssub.s32 %s9, 2
      // Predicated region
      $region41: #{dqn_forward.6} parent=39 // pred_check
        %p666 = pneg %p106
      $region42: #{dqn_forward.6} parent=39 // pred_check_branch
        %668 = sbr.rel (%p666) target = $region44
      $region43: #{dqn_forward.6} parent=39 // pred_region
        %s669 = smul.u32 8, %s15
        %p670 = scmp.lt.s32.totalorder %s669, 15
        %s671 = scalar_select %p670, %s669, 15
        %s672 = smul.addr %s671, 8
        %s673 = scalar_lea.vmem %s3, %s672
      $region44: #{dqn_forward.6} parent=39 // pred_fallthru
        _
    $region40: #{dqn_forward.6} parent=5 // pred_fallthru
      _
  $region6: #{dqn_forward.6} parent=0 // loop_footer
    %s13 = sadd.s32 1, %s9
  $region7: #{dqn_forward.6} parent=0 // loop_footer_branch
    %8 = sbr.rel target = $region3
  $region8: #{dqn_forward.6} parent=0 // loop_exit
    _

// kernel: dqn_forward.7
$region0: #{dqn_forward.7}
  #allocation0 [shape = 'u32[]', space=smem, size = 0x4, offset = 0x4, fixed_abs, tag = 'smem constant byte address 0x4 - core index']
  #allocation1 [shape = 'u32[144,128]{1,0:T(1,128)}', space=vmem, size = 0x12000, scoped, tag = 'internal scratch']
  %s0 = inlined_call_operand.vmem [shape: f32[2,4096], index: 0, kind: input, shape index: {}]
  %s1 = inlined_call_operand.vmem [shape: f32[4096,256], index: 1, kind: input, shape index: {}]
  %s2 = inlined_call_operand.vmem [shape: f32[1,256], index: 2, kind: input, shape index: {}]
  %s3 = inlined_call_operand.vmem [shape: f32[256,128], index: 3, kind: input, shape index: {}]
  %s4 = inlined_call_operand.vmem [shape: f32[1,128], index: 4, kind: input, shape index: {}]
  %s5 = inlined_call_operand.hbm [shape: f32[2,128], index: 5, kind: output, shape index: {}]
  %s6 = sld [smem:[#allocation0]]
  $region30: #{dqn_forward.7} parent=0
    _
  %s8 = ssub.s32 1, %s6
  %s9 = scalar_select 0, %s8, %s6
  $region1: #{dqn_forward.7} parent=0
    #allocation2 [shape = 'u8[1024]{0}', space=vmem, size = 0x400, scoped, tag = 'output window, operand 0, single buffered']
    #allocation3 [shape = 's32[1]{0}', space=sflag, size = 0x4, scoped, tag = 'scoped memory for dqn_forward.7']
    %10 = vsyncpa [#allocation3], 0
    // Predicated region
    $region2: #{dqn_forward.7} parent=1 // pred_check
      _
    $region3: #{dqn_forward.7} parent=1 // pred_check_branch
      %12 = sbr.rel (0) target = $region5
    $region4: #{dqn_forward.7} parent=1 // pred_region
      _
    $region5: #{dqn_forward.7} parent=1 // pred_fallthru
      _
    // Predicated region
    $region6: #{dqn_forward.7} parent=1 // pred_check
      _
    $region7: #{dqn_forward.7} parent=1 // pred_check_branch
      %14 = sbr.rel (0) target = $region9
    $region8: #{dqn_forward.7} parent=1 // pred_region
      _
    $region9: #{dqn_forward.7} parent=1 // pred_fallthru
      _
    // Predicated region
    $region10: #{dqn_forward.7} parent=1 // pred_check
      _
    $region11: #{dqn_forward.7} parent=1 // pred_check_branch
      %16 = sbr.rel (0) target = $region13
    $region12: #{dqn_forward.7} parent=1 // pred_region
      _
    $region13: #{dqn_forward.7} parent=1 // pred_fallthru
      _
    // Predicated region
    $region14: #{dqn_forward.7} parent=1 // pred_check
      _
    $region15: #{dqn_forward.7} parent=1 // pred_check_branch
      %18 = sbr.rel (0) target = $region17
    $region16: #{dqn_forward.7} parent=1 // pred_region
      _
    $region17: #{dqn_forward.7} parent=1 // pred_fallthru
      _
    // Predicated region
    $region18: #{dqn_forward.7} parent=1 // pred_check
      _
    $region19: #{dqn_forward.7} parent=1 // pred_check_branch
      %20 = sbr.rel (0) target = $region21
    $region20: #{dqn_forward.7} parent=1 // pred_region
      _
    $region21: #{dqn_forward.7} parent=1 // pred_fallthru
      _
    %v21 = vld [vmem:[%s0] sm:$0xff]
    %v22 = vld [vmem:[%s0 + $0x8] sm:$0xff]
    %v23 = vld [vmem:[%s0 + $0x10] sm:$0xff]
    %v24 = vld [vmem:[%s0 + $0x18] sm:$0xff]
    %v25 = vld [vmem:[%s0 + $0x20] sm:$0xff]
    %v26 = vld [vmem:[%s0 + $0x28] sm:$0xff]
    %v27 = vld [vmem:[%s0 + $0x30] sm:$0xff]
    %v28 = vld [vmem:[%s0 + $0x38] sm:$0xff]
    %v29 = vld [vmem:[%s1] sm:$0xff]
    %v30 = vld [vmem:[%s1 + $0x8] sm:$0xff]
    %v31 = vld [vmem:[%s1 + $0x10] sm:$0xff]
    %v32 = vld [vmem:[%s1 + $0x18] sm:$0xff]
    %v33 = vld [vmem:[%s1 + $0x20] sm:$0xff]
    %v34 = vld [vmem:[%s1 + $0x28] sm:$0xff]
    %v35 = vld [vmem:[%s1 + $0x30] sm:$0xff]
    %v36 = vld [vmem:[%s1 + $0x38] sm:$0xff]
    %v37 = vld [vmem:[%s1 + $0x40] sm:$0xff]
    %v38 = vld [vmem:[%s1 + $0x48] sm:$0xff]
    %v39 = vld [vmem:[%s1 + $0x50] sm:$0xff]
    %v40 = vld [vmem:[%s1 + $0x58] sm:$0xff]
    %v41 = vld [vmem:[%s1 + $0x60] sm:$0xff]
    %v42 = vld [vmem:[%s1 + $0x68] sm:$0xff]
    %v43 = vld [vmem:[%s1 + $0x70] sm:$0xff]
    %v44 = vld [vmem:[%s1 + $0x78] sm:$0xff]
    %v45 = vld [vmem:[%s1 + $0x80] sm:$0xff]
    %v46 = vld [vmem:[%s1 + $0x88] sm:$0xff]
    %v47 = vld [vmem:[%s1 + $0x90] sm:$0xff]
    %v48 = vld [vmem:[%s1 + $0x98] sm:$0xff]
    %v49 = vld [vmem:[%s1 + $0xa0] sm:$0xff]
    %v50 = vld [vmem:[%s1 + $0xa8] sm:$0xff]
    %v51 = vld [vmem:[%s1 + $0xb0] sm:$0xff]
    %v52 = vld [vmem:[%s1 + $0xb8] sm:$0xff]
    %v53 = vld [vmem:[%s1 + $0xc0] sm:$0xff]
    %v54 = vld [vmem:[%s1 + $0xc8] sm:$0xff]
    %v55 = vld [vmem:[%s1 + $0xd0] sm:$0xff]
    %v56 = vld [vmem:[%s1 + $0xd8] sm:$0xff]
    %v57 = vld [vmem:[%s1 + $0xe0] sm:$0xff]
    %v58 = vld [vmem:[%s1 + $0xe8] sm:$0xff]
    %v59 = vld [vmem:[%s1 + $0xf0] sm:$0xff]
    %v60 = vld [vmem:[%s1 + $0xf8] sm:$0xff]
    %v61 = vld [vmem:[%s1 + $0x100] sm:$0xff]
    %v62 = vld [vmem:[%s1 + $0x108] sm:$0xff]
    %v63 = vld [vmem:[%s1 + $0x110] sm:$0xff]
    %v64 = vld [vmem:[%s1 + $0x118] sm:$0xff]
    %v65 = vld [vmem:[%s1 + $0x120] sm:$0xff]
    %v66 = vld [vmem:[%s1 + $0x128] sm:$0xff]
    %v67 = vld [vmem:[%s1 + $0x130] sm:$0xff]
    %v68 = vld [vmem:[%s1 + $0x138] sm:$0xff]
    %v69 = vld [vmem:[%s1 + $0x140] sm:$0xff]
    %v70 = vld [vmem:[%s1 + $0x148] sm:$0xff]
    %v71 = vld [vmem:[%s1 + $0x150] sm:$0xff]
    %v72 = vld [vmem:[%s1 + $0x158] sm:$0xff]
    %v73 = vld [vmem:[%s1 + $0x160] sm:$0xff]
    %v74 = vld [vmem:[%s1 + $0x168] sm:$0xff]
    %v75 = vld [vmem:[%s1 + $0x170] sm:$0xff]
    %v76 = vld [vmem:[%s1 + $0x178] sm:$0xff]
    %v77 = vld [vmem:[%s1 + $0x180] sm:$0xff]
    %v78 = vld [vmem:[%s1 + $0x188] sm:$0xff]
    %v79 = vld [vmem:[%s1 + $0x190] sm:$0xff]
    %v80 = vld [vmem:[%s1 + $0x198] sm:$0xff]
    %v81 = vld [vmem:[%s1 + $0x1a0] sm:$0xff]
    %v82 = vld [vmem:[%s1 + $0x1a8] sm:$0xff]
    %v83 = vld [vmem:[%s1 + $0x1b0] sm:$0xff]
    %v84 = vld [vmem:[%s1 + $0x1b8] sm:$0xff]
    %v85 = vld [vmem:[%s1 + $0x1c0] sm:$0xff]
    %v86 = vld [vmem:[%s1 + $0x1c8] sm:$0xff]
    %v87 = vld [vmem:[%s1 + $0x1d0] sm:$0xff]
    %v88 = vld [vmem:[%s1 + $0x1d8] sm:$0xff]
    %v89 = vld [vmem:[%s1 + $0x1e0] sm:$0xff]
    %v90 = vld [vmem:[%s1 + $0x1e8] sm:$0xff]
    %v91 = vld [vmem:[%s1 + $0x1f0] sm:$0xff]
    %v92 = vld [vmem:[%s1 + $0x1f8] sm:$0xff]
    %v93 = vld [vmem:[%s1 + $0x200] sm:$0xff]
    %v94 = vld [vmem:[%s1 + $0x208] sm:$0xff]
    %v95 = vld [vmem:[%s1 + $0x210] sm:$0xff]
    %v96 = vld [vmem:[%s1 + $0x218] sm:$0xff]
    %v97 = vld [vmem:[%s1 + $0x220] sm:$0xff]
    %v98 = vld [vmem:[%s1 + $0x228] sm:$0xff]
    %v99 = vld [vmem:[%s1 + $0x230] sm:$0xff]
    %v100 = vld [vmem:[%s1 + $0x238] sm:$0xff]
    %v101 = vld [vmem:[%s1 + $0x240] sm:$0xff]
    %v102 = vld [vmem:[%s1 + $0x248] sm:$0xff]
    %v103 = vld [vmem:[%s1 + $0x250] sm:$0xff]
    %v104 = vld [vmem:[%s1 + $0x258] sm:$0xff]
    %v105 = vld [vmem:[%s1 + $0x260] sm:$0xff]
    %v106 = vld [vmem:[%s1 + $0x268] sm:$0xff]
    %v107 = vld [vmem:[%s1 + $0x270] sm:$0xff]
    %v108 = vld [vmem:[%s1 + $0x278] sm:$0xff]
    %v109 = vld [vmem:[%s1 + $0x280] sm:$0xff]
    %v110 = vld [vmem:[%s1 + $0x288] sm:$0xff]
    %v111 = vld [vmem:[%s1 + $0x290] sm:$0xff]
    %v112 = vld [vmem:[%s1 + $0x298] sm:$0xff]
    %v113 = vld [vmem:[%s1 + $0x2a0] sm:$0xff]
    %v114 = vld [vmem:[%s1 + $0x2a8] sm:$0xff]
    %v115 = vld [vmem:[%s1 + $0x2b0] sm:$0xff]
    %v116 = vld [vmem:[%s1 + $0x2b8] sm:$0xff]
    %v117 = vld [vmem:[%s1 + $0x2c0] sm:$0xff]
    %v118 = vld [vmem:[%s1 + $0x2c8] sm:$0xff]
    %v119 = vld [vmem:[%s1 + $0x2d0] sm:$0xff]
    %v120 = vld [vmem:[%s1 + $0x2d8] sm:$0xff]
    %v121 = vld [vmem:[%s1 + $0x2e0] sm:$0xff]
    %v122 = vld [vmem:[%s1 + $0x2e8] sm:$0xff]
    %v123 = vld [vmem:[%s1 + $0x2f0] sm:$0xff]
    %v124 = vld [vmem:[%s1 + $0x2f8] sm:$0xff]
    %v125 = vld [vmem:[%s1 + $0x300] sm:$0xff]
    %v126 = vld [vmem:[%s1 + $0x308] sm:$0xff]
    %v127 = vld [vmem:[%s1 + $0x310] sm:$0xff]
    %v128 = vld [vmem:[%s1 + $0x318] sm:$0xff]
    %v129 = vld [vmem:[%s1 + $0x320] sm:$0xff]
    %v130 = vld [vmem:[%s1 + $0x328] sm:$0xff]
    %v131 = vld [vmem:[%s1 + $0x330] sm:$0xff]
    %v132 = vld [vmem:[%s1 + $0x338] sm:$0xff]
    %v133 = vld [vmem:[%s1 + $0x340] sm:$0xff]
    %v134 = vld [vmem:[%s1 + $0x348] sm:$0xff]
    %v135 = vld [vmem:[%s1 + $0x350] sm:$0xff]
    %v136 = vld [vmem:[%s1 + $0x358] sm:$0xff]
    %v137 = vld [vmem:[%s1 + $0x360] sm:$0xff]
    %v138 = vld [vmem:[%s1 + $0x368] sm:$0xff]
    %v139 = vld [vmem:[%s1 + $0x370] sm:$0xff]
    %v140 = vld [vmem:[%s1 + $0x378] sm:$0xff]
    %v141 = vld [vmem:[%s1 + $0x380] sm:$0xff]
    %v142 = vld [vmem:[%s1 + $0x388] sm:$0xff]
    %v143 = vld [vmem:[%s1 + $0x390] sm:$0xff]
    %v144 = vld [vmem:[%s1 + $0x398] sm:$0xff]
    %v145 = vld [vmem:[%s1 + $0x3a0] sm:$0xff]
    %v146 = vld [vmem:[%s1 + $0x3a8] sm:$0xff]
    %v147 = vld [vmem:[%s1 + $0x3b0] sm:$0xff]
    %v148 = vld [vmem:[%s1 + $0x3b8] sm:$0xff]
    %v149 = vld [vmem:[%s1 + $0x3c0] sm:$0xff]
    %v150 = vld [vmem:[%s1 + $0x3c8] sm:$0xff]
    %v151 = vld [vmem:[%s1 + $0x3d0] sm:$0xff]
    %v152 = vld [vmem:[%s1 + $0x3d8] sm:$0xff]
    %v153 = vld [vmem:[%s1 + $0x3e0] sm:$0xff]
    %v154 = vld [vmem:[%s1 + $0x3e8] sm:$0xff]
    %v155 = vld [vmem:[%s1 + $0x3f0] sm:$0xff]
    %v156 = vld [vmem:[%s1 + $0x3f8] sm:$0xff]
    %v157 = vld [vmem:[%s1 + $0x400] sm:$0xff]
    %v158 = vld [vmem:[%s1 + $0x408] sm:$0xff]
    %v159 = vld [vmem:[%s1 + $0x410] sm:$0xff]
    %v160 = vld [vmem:[%s1 + $0x418] sm:$0xff]
    %v161 = vld [vmem:[%s1 + $0x420] sm:$0xff]
    %v162 = vld [vmem:[%s1 + $0x428] sm:$0xff]
    %v163 = vld [vmem:[%s1 + $0x430] sm:$0xff]
    %v164 = vld [vmem:[%s1 + $0x438] sm:$0xff]
    %v165 = vld [vmem:[%s1 + $0x440] sm:$0xff]
    %v166 = vld [vmem:[%s1 + $0x448] sm:$0xff]
    %v167 = vld [vmem:[%s1 + $0x450] sm:$0xff]
    %v168 = vld [vmem:[%s1 + $0x458] sm:$0xff]
    %v169 = vld [vmem:[%s1 + $0x460] sm:$0xff]
    %v170 = vld [vmem:[%s1 + $0x468] sm:$0xff]
    %v171 = vld [vmem:[%s1 + $0x470] sm:$0xff]
    %v172 = vld [vmem:[%s1 + $0x478] sm:$0xff]
    %v173 = vld [vmem:[%s1 + $0x480] sm:$0xff]
    %v174 = vld [vmem:[%s1 + $0x488] sm:$0xff]
    %v175 = vld [vmem:[%s1 + $0x490] sm:$0xff]
    %v176 = vld [vmem:[%s1 + $0x498] sm:$0xff]
    %v177 = vld [vmem:[%s1 + $0x4a0] sm:$0xff]
    %v178 = vld [vmem:[%s1 + $0x4a8] sm:$0xff]
    %v179 = vld [vmem:[%s1 + $0x4b0] sm:$0xff]
    %v180 = vld [vmem:[%s1 + $0x4b8] sm:$0xff]
    %v181 = vld [vmem:[%s1 + $0x4c0] sm:$0xff]
    %v182 = vld [vmem:[%s1 + $0x4c8] sm:$0xff]
    %v183 = vld [vmem:[%s1 + $0x4d0] sm:$0xff]
    %v184 = vld [vmem:[%s1 + $0x4d8] sm:$0xff]
    %v185 = vld [vmem:[%s1 + $0x4e0] sm:$0xff]
    %v186 = vld [vmem:[%s1 + $0x4e8] sm:$0xff]
    %v187 = vld [vmem:[%s1 + $0x4f0] sm:$0xff]
    %v188 = vld [vmem:[%s1 + $0x4f8] sm:$0xff]
    %v189 = vld [vmem:[%s1 + $0x500] sm:$0xff]
    %v190 = vld [vmem:[%s1 + $0x508] sm:$0xff]
    %v191 = vld [vmem:[%s1 + $0x510] sm:$0xff]
    %v192 = vld [vmem:[%s1 + $0x518] sm:$0xff]
    %v193 = vld [vmem:[%s1 + $0x520] sm:$0xff]
    %v194 = vld [vmem:[%s1 + $0x528] sm:$0xff]
    %v195 = vld [vmem:[%s1 + $0x530] sm:$0xff]
    %v196 = vld [vmem:[%s1 + $0x538] sm:$0xff]
    %v197 = vld [vmem:[%s1 + $0x540] sm:$0xff]
    %v198 = vld [vmem:[%s1 + $0x548] sm:$0xff]
    %v199 = vld [vmem:[%s1 + $0x550] sm:$0xff]
    %v200 = vld [vmem:[%s1 + $0x558] sm:$0xff]
    %v201 = vld [vmem:[%s1 + $0x560] sm:$0xff]
    %v202 = vld [vmem:[%s1 + $0x568] sm:$0xff]
    %v203 = vld [vmem:[%s1 + $0x570] sm:$0xff]
    %v204 = vld [vmem:[%s1 + $0x578] sm:$0xff]
    %v205 = vld [vmem:[%s1 + $0x580] sm:$0xff]
    %v206 = vld [vmem:[%s1 + $0x588] sm:$0xff]
    %v207 = vld [vmem:[%s1 + $0x590] sm:$0xff]
    %v208 = vld [vmem:[%s1 + $0x598] sm:$0xff]
    %v209 = vld [vmem:[%s1 + $0x5a0] sm:$0xff]
    %v210 = vld [vmem:[%s1 + $0x5a8] sm:$0xff]
    %v211 = vld [vmem:[%s1 + $0x5b0] sm:$0xff]
    %v212 = vld [vmem:[%s1 + $0x5b8] sm:$0xff]
    %v213 = vld [vmem:[%s1 + $0x5c0] sm:$0xff]
    %v214 = vld [vmem:[%s1 + $0x5c8] sm:$0xff]
    %v215 = vld [vmem:[%s1 + $0x5d0] sm:$0xff]
    %v216 = vld [vmem:[%s1 + $0x5d8] sm:$0xff]
    %v217 = vld [vmem:[%s1 + $0x5e0] sm:$0xff]
    %v218 = vld [vmem:[%s1 + $0x5e8] sm:$0xff]
    %v219 = vld [vmem:[%s1 + $0x5f0] sm:$0xff]
    %v220 = vld [vmem:[%s1 + $0x5f8] sm:$0xff]
    %v221 = vld [vmem:[%s1 + $0x600] sm:$0xff]
    %v222 = vld [vmem:[%s1 + $0x608] sm:$0xff]
    %v223 = vld [vmem:[%s1 + $0x610] sm:$0xff]
    %v224 = vld [vmem:[%s1 + $0x618] sm:$0xff]
    %v225 = vld [vmem:[%s1 + $0x620] sm:$0xff]
    %v226 = vld [vmem:[%s1 + $0x628] sm:$0xff]
    %v227 = vld [vmem:[%s1 + $0x630] sm:$0xff]
    %v228 = vld [vmem:[%s1 + $0x638] sm:$0xff]
    %v229 = vld [vmem:[%s1 + $0x640] sm:$0xff]
    %v230 = vld [vmem:[%s1 + $0x648] sm:$0xff]
    %v231 = vld [vmem:[%s1 + $0x650] sm:$0xff]
    %v232 = vld [vmem:[%s1 + $0x658] sm:$0xff]
    %v233 = vld [vmem:[%s1 + $0x660] sm:$0xff]
    %v234 = vld [vmem:[%s1 + $0x668] sm:$0xff]
    %v235 = vld [vmem:[%s1 + $0x670] sm:$0xff]
    %v236 = vld [vmem:[%s1 + $0x678] sm:$0xff]
    %v237 = vld [vmem:[%s1 + $0x680] sm:$0xff]
    %v238 = vld [vmem:[%s1 + $0x688] sm:$0xff]
    %v239 = vld [vmem:[%s1 + $0x690] sm:$0xff]
    %v240 = vld [vmem:[%s1 + $0x698] sm:$0xff]
    %v241 = vld [vmem:[%s1 + $0x6a0] sm:$0xff]
    %v242 = vld [vmem:[%s1 + $0x6a8] sm:$0xff]
    %v243 = vld [vmem:[%s1 + $0x6b0] sm:$0xff]
    %v244 = vld [vmem:[%s1 + $0x6b8] sm:$0xff]
    %v245 = vld [vmem:[%s1 + $0x6c0] sm:$0xff]
    %v246 = vld [vmem:[%s1 + $0x6c8] sm:$0xff]
    %v247 = vld [vmem:[%s1 + $0x6d0] sm:$0xff]
    %v248 = vld [vmem:[%s1 + $0x6d8] sm:$0xff]
    %v249 = vld [vmem:[%s1 + $0x6e0] sm:$0xff]
    %v250 = vld [vmem:[%s1 + $0x6e8] sm:$0xff]
    %v251 = vld [vmem:[%s1 + $0x6f0] sm:$0xff]
    %v252 = vld [vmem:[%s1 + $0x6f8] sm:$0xff]
    %v253 = vld [vmem:[%s1 + $0x700] sm:$0xff]
    %v254 = vld [vmem:[%s1 + $0x708] sm:$0xff]
    %v255 = vld [vmem:[%s1 + $0x710] sm:$0xff]
    %v256 = vld [vmem:[%s1 + $0x718] sm:$0xff]
    %v257 = vld [vmem:[%s1 + $0x720] sm:$0xff]
    %v258 = vld [vmem:[%s1 + $0x728] sm:$0xff]
    %v259 = vld [vmem:[%s1 + $0x730] sm:$0xff]
    %v260 = vld [vmem:[%s1 + $0x738] sm:$0xff]
    %v261 = vld [vmem:[%s1 + $0x740] sm:$0xff]
    %v262 = vld [vmem:[%s1 + $0x748] sm:$0xff]
    %v263 = vld [vmem:[%s1 + $0x750] sm:$0xff]
    %v264 = vld [vmem:[%s1 + $0x758] sm:$0xff]
    %v265 = vld [vmem:[%s1 + $0x760] sm:$0xff]
    %v266 = vld [vmem:[%s1 + $0x768] sm:$0xff]
    %v267 = vld [vmem:[%s1 + $0x770] sm:$0xff]
    %v268 = vld [vmem:[%s1 + $0x778] sm:$0xff]
    %v269 = vld [vmem:[%s1 + $0x780] sm:$0xff]
    %v270 = vld [vmem:[%s1 + $0x788] sm:$0xff]
    %v271 = vld [vmem:[%s1 + $0x790] sm:$0xff]
    %v272 = vld [vmem:[%s1 + $0x798] sm:$0xff]
    %v273 = vld [vmem:[%s1 + $0x7a0] sm:$0xff]
    %v274 = vld [vmem:[%s1 + $0x7a8] sm:$0xff]
    %v275 = vld [vmem:[%s1 + $0x7b0] sm:$0xff]
    %v276 = vld [vmem:[%s1 + $0x7b8] sm:$0xff]
    %v277 = vld [vmem:[%s1 + $0x7c0] sm:$0xff]
    %v278 = vld [vmem:[%s1 + $0x7c8] sm:$0xff]
    %v279 = vld [vmem:[%s1 + $0x7d0] sm:$0xff]
    %v280 = vld [vmem:[%s1 + $0x7d8] sm:$0xff]
    %v281 = vld [vmem:[%s1 + $0x7e0] sm:$0xff]
    %v282 = vld [vmem:[%s1 + $0x7e8] sm:$0xff]
    %v283 = vld [vmem:[%s1 + $0x7f0] sm:$0xff]
    %v284 = vld [vmem:[%s1 + $0x7f8] sm:$0xff]
    %v285 = vld [vmem:[%s1 + $0x800] sm:$0xff]
    %v286 = vld [vmem:[%s1 + $0x808] sm:$0xff]
    %v287 = vld [vmem:[%s1 + $0x810] sm:$0xff]
    %v288 = vld [vmem:[%s1 + $0x818] sm:$0xff]
    %v289 = vld [vmem:[%s1 + $0x820] sm:$0xff]
    %v290 = vld [vmem:[%s1 + $0x828] sm:$0xff]
    %v291 = vld [vmem:[%s1 + $0x830] sm:$0xff]
    %v292 = vld [vmem:[%s1 + $0x838] sm:$0xff]
    %v293 = vld [vmem:[%s1 + $0x840] sm:$0xff]
    %v294 = vld [vmem:[%s1 + $0x848] sm:$0xff]
    %v295 = vld [vmem:[%s1 + $0x850] sm:$0xff]
    %v296 = vld [vmem:[%s1 + $0x858] sm:$0xff]
    %v297 = vld [vmem:[%s1 + $0x860] sm:$0xff]
    %v298 = vld [vmem:[%s1 + $0x868] sm:$0xff]
    %v299 = vld [vmem:[%s1 + $0x870] sm:$0xff]
    %v300 = vld [vmem:[%s1 + $0x878] sm:$0xff]
    %v301 = vld [vmem:[%s1 + $0x880] sm:$0xff]
    %v302 = vld [vmem:[%s1 + $0x888] sm:$0xff]
    %v303 = vld [vmem:[%s1 + $0x890] sm:$0xff]
    %v304 = vld [vmem:[%s1 + $0x898] sm:$0xff]
    %v305 = vld [vmem:[%s1 + $0x8a0] sm:$0xff]
    %v306 = vld [vmem:[%s1 + $0x8a8] sm:$0xff]
    %v307 = vld [vmem:[%s1 + $0x8b0] sm:$0xff]
    %v308 = vld [vmem:[%s1 + $0x8b8] sm:$0xff]
    %v309 = vld [vmem:[%s1 + $0x8c0] sm:$0xff]
    %v310 = vld [vmem:[%s1 + $0x8c8] sm:$0xff]
    %v311 = vld [vmem:[%s1 + $0x8d0] sm:$0xff]
    %v312 = vld [vmem:[%s1 + $0x8d8] sm:$0xff]
    %v313 = vld [vmem:[%s1 + $0x8e0] sm:$0xff]
    %v314 = vld [vmem:[%s1 + $0x8e8] sm:$0xff]
    %v315 = vld [vmem:[%s1 + $0x8f0] sm:$0xff]
    %v316 = vld [vmem:[%s1 + $0x8f8] sm:$0xff]
    %v317 = vld [vmem:[%s1 + $0x900] sm:$0xff]
    %v318 = vld [vmem:[%s1 + $0x908] sm:$0xff]
    %v319 = vld [vmem:[%s1 + $0x910] sm:$0xff]
    %v320 = vld [vmem:[%s1 + $0x918] sm:$0xff]
    %v321 = vld [vmem:[%s1 + $0x920] sm:$0xff]
    %v322 = vld [vmem:[%s1 + $0x928] sm:$0xff]
    %v323 = vld [vmem:[%s1 + $0x930] sm:$0xff]
    %v324 = vld [vmem:[%s1 + $0x938] sm:$0xff]
    %v325 = vld [vmem:[%s1 + $0x940] sm:$0xff]
    %v326 = vld [vmem:[%s1 + $0x948] sm:$0xff]
    %v327 = vld [vmem:[%s1 + $0x950] sm:$0xff]
    %v328 = vld [vmem:[%s1 + $0x958] sm:$0xff]
    %v329 = vld [vmem:[%s1 + $0x960] sm:$0xff]
    %v330 = vld [vmem:[%s1 + $0x968] sm:$0xff]
    %v331 = vld [vmem:[%s1 + $0x970] sm:$0xff]
    %v332 = vld [vmem:[%s1 + $0x978] sm:$0xff]
    %v333 = vld [vmem:[%s1 + $0x980] sm:$0xff]
    %v334 = vld [vmem:[%s1 + $0x988] sm:$0xff]
    %v335 = vld [vmem:[%s1 + $0x990] sm:$0xff]
    %v336 = vld [vmem:[%s1 + $0x998] sm:$0xff]
    %v337 = vld [vmem:[%s1 + $0x9a0] sm:$0xff]
    %v338 = vld [vmem:[%s1 + $0x9a8] sm:$0xff]
    %v339 = vld [vmem:[%s1 + $0x9b0] sm:$0xff]
    %v340 = vld [vmem:[%s1 + $0x9b8] sm:$0xff]
    %v341 = vld [vmem:[%s1 + $0x9c0] sm:$0xff]
    %v342 = vld [vmem:[%s1 + $0x9c8] sm:$0xff]
    %v343 = vld [vmem:[%s1 + $0x9d0] sm:$0xff]
    %v344 = vld [vmem:[%s1 + $0x9d8] sm:$0xff]
    %v345 = vld [vmem:[%s1 + $0x9e0] sm:$0xff]
    %v346 = vld [vmem:[%s1 + $0x9e8] sm:$0xff]
    %v347 = vld [vmem:[%s1 + $0x9f0] sm:$0xff]
    %v348 = vld [vmem:[%s1 + $0x9f8] sm:$0xff]
    %v349 = vld [vmem:[%s1 + $0xa00] sm:$0xff]
    %v350 = vld [vmem:[%s1 + $0xa08] sm:$0xff]
    %v351 = vld [vmem:[%s1 + $0xa10] sm:$0xff]
    %v352 = vld [vmem:[%s1 + $0xa18] sm:$0xff]
    %v353 = vld [vmem:[%s1 + $0xa20] sm:$0xff]
    %v354 = vld [vmem:[%s1 + $0xa28] sm:$0xff]
    %v355 = vld [vmem:[%s1 + $0xa30] sm:$0xff]
    %v356 = vld [vmem:[%s1 + $0xa38] sm:$0xff]
    %v357 = vld [vmem:[%s1 + $0xa40] sm:$0xff]
    %v358 = vld [vmem:[%s1 + $0xa48] sm:$0xff]
    %v359 = vld [vmem:[%s1 + $0xa50] sm:$0xff]
    %v360 = vld [vmem:[%s1 + $0xa58] sm:$0xff]
    %v361 = vld [vmem:[%s1 + $0xa60] sm:$0xff]
    %v362 = vld [vmem:[%s1 + $0xa68] sm:$0xff]
    %v363 = vld [vmem:[%s1 + $0xa70] sm:$0xff]
    %v364 = vld [vmem:[%s1 + $0xa78] sm:$0xff]
    %v365 = vld [vmem:[%s1 + $0xa80] sm:$0xff]
    %v366 = vld [vmem:[%s1 + $0xa88] sm:$0xff]
    %v367 = vld [vmem:[%s1 + $0xa90] sm:$0xff]
    %v368 = vld [vmem:[%s1 + $0xa98] sm:$0xff]
    %v369 = vld [vmem:[%s1 + $0xaa0] sm:$0xff]
    %v370 = vld [vmem:[%s1 + $0xaa8] sm:$0xff]
    %v371 = vld [vmem:[%s1 + $0xab0] sm:$0xff]
    %v372 = vld [vmem:[%s1 + $0xab8] sm:$0xff]
    %v373 = vld [vmem:[%s1 + $0xac0] sm:$0xff]
    %v374 = vld [vmem:[%s1 + $0xac8] sm:$0xff]
    %v375 = vld [vmem:[%s1 + $0xad0] sm:$0xff]
    %v376 = vld [vmem:[%s1 + $0xad8] sm:$0xff]
    %v377 = vld [vmem:[%s1 + $0xae0] sm:$0xff]
    %v378 = vld [vmem:[%s1 + $0xae8] sm:$0xff]
    %v379 = vld [vmem:[%s1 + $0xaf0] sm:$0xff]
    %v380 = vld [vmem:[%s1 + $0xaf8] sm:$0xff]
    %v381 = vld [vmem:[%s1 + $0xb00] sm:$0xff]
    %v382 = vld [vmem:[%s1 + $0xb08] sm:$0xff]
    %v383 = vld [vmem:[%s1 + $0xb10] sm:$0xff]
    %v384 = vld [vmem:[%s1 + $0xb18] sm:$0xff]
    %v385 = vld [vmem:[%s1 + $0xb20] sm:$0xff]
    %v386 = vld [vmem:[%s1 + $0xb28] sm:$0xff]
    %v387 = vld [vmem:[%s1 + $0xb30] sm:$0xff]
    %v388 = vld [vmem:[%s1 + $0xb38] sm:$0xff]
    %v389 = vld [vmem:[%s1 + $0xb40] sm:$0xff]
    %v390 = vld [vmem:[%s1 + $0xb48] sm:$0xff]
    %v391 = vld [vmem:[%s1 + $0xb50] sm:$0xff]
    %v392 = vld [vmem:[%s1 + $0xb58] sm:$0xff]
    %v393 = vld [vmem:[%s1 + $0xb60] sm:$0xff]
    %v394 = vld [vmem:[%s1 + $0xb68] sm:$0xff]
    %v395 = vld [vmem:[%s1 + $0xb70] sm:$0xff]
    %v396 = vld [vmem:[%s1 + $0xb78] sm:$0xff]
    %v397 = vld [vmem:[%s1 + $0xb80] sm:$0xff]
    %v398 = vld [vmem:[%s1 + $0xb88] sm:$0xff]
    %v399 = vld [vmem:[%s1 + $0xb90] sm:$0xff]
    %v400 = vld [vmem:[%s1 + $0xb98] sm:$0xff]
    %v401 = vld [vmem:[%s1 + $0xba0] sm:$0xff]
    %v402 = vld [vmem:[%s1 + $0xba8] sm:$0xff]
    %v403 = vld [vmem:[%s1 + $0xbb0] sm:$0xff]
    %v404 = vld [vmem:[%s1 + $0xbb8] sm:$0xff]
    %v405 = vld [vmem:[%s1 + $0xbc0] sm:$0xff]
    %v406 = vld [vmem:[%s1 + $0xbc8] sm:$0xff]
    %v407 = vld [vmem:[%s1 + $0xbd0] sm:$0xff]
    %v408 = vld [vmem:[%s1 + $0xbd8] sm:$0xff]
    %v409 = vld [vmem:[%s1 + $0xbe0] sm:$0xff]
    %v410 = vld [vmem:[%s1 + $0xbe8] sm:$0xff]
    %v411 = vld [vmem:[%s1 + $0xbf0] sm:$0xff]
    %v412 = vld [vmem:[%s1 + $0xbf8] sm:$0xff]
    %v413 = vld [vmem:[%s1 + $0xc00] sm:$0xff]
    %v414 = vld [vmem:[%s1 + $0xc08] sm:$0xff]
    %v415 = vld [vmem:[%s1 + $0xc10] sm:$0xff]
    %v416 = vld [vmem:[%s1 + $0xc18] sm:$0xff]
    %v417 = vld [vmem:[%s1 + $0xc20] sm:$0xff]
    %v418 = vld [vmem:[%s1 + $0xc28] sm:$0xff]
    %v419 = vld [vmem:[%s1 + $0xc30] sm:$0xff]
    %v420 = vld [vmem:[%s1 + $0xc38] sm:$0xff]
    %v421 = vld [vmem:[%s1 + $0xc40] sm:$0xff]
    %v422 = vld [vmem:[%s1 + $0xc48] sm:$0xff]
    %v423 = vld [vmem:[%s1 + $0xc50] sm:$0xff]
    %v424 = vld [vmem:[%s1 + $0xc58] sm:$0xff]
    %v425 = vld [vmem:[%s1 + $0xc60] sm:$0xff]
    %v426 = vld [vmem:[%s1 + $0xc68] sm:$0xff]
    %v427 = vld [vmem:[%s1 + $0xc70] sm:$0xff]
    %v428 = vld [vmem:[%s1 + $0xc78] sm:$0xff]
    %v429 = vld [vmem:[%s1 + $0xc80] sm:$0xff]
    %v430 = vld [vmem:[%s1 + $0xc88] sm:$0xff]
    %v431 = vld [vmem:[%s1 + $0xc90] sm:$0xff]
    %v432 = vld [vmem:[%s1 + $0xc98] sm:$0xff]
    %v433 = vld [vmem:[%s1 + $0xca0] sm:$0xff]
    %v434 = vld [vmem:[%s1 + $0xca8] sm:$0xff]
    %v435 = vld [vmem:[%s1 + $0xcb0] sm:$0xff]
    %v436 = vld [vmem:[%s1 + $0xcb8] sm:$0xff]
    %v437 = vld [vmem:[%s1 + $0xcc0] sm:$0xff]
    %v438 = vld [vmem:[%s1 + $0xcc8] sm:$0xff]
    %v439 = vld [vmem:[%s1 + $0xcd0] sm:$0xff]
    %v440 = vld [vmem:[%s1 + $0xcd8] sm:$0xff]
    %v441 = vld [vmem:[%s1 + $0xce0] sm:$0xff]
    %v442 = vld [vmem:[%s1 + $0xce8] sm:$0xff]
    %v443 = vld [vmem:[%s1 + $0xcf0] sm:$0xff]
    %v444 = vld [vmem:[%s1 + $0xcf8] sm:$0xff]
    %v445 = vld [vmem:[%s1 + $0xd00] sm:$0xff]
    %v446 = vld [vmem:[%s1 + $0xd08] sm:$0xff]
    %v447 = vld [vmem:[%s1 + $0xd10] sm:$0xff]
    %v448 = vld [vmem:[%s1 + $0xd18] sm:$0xff]
    %v449 = vld [vmem:[%s1 + $0xd20] sm:$0xff]
    %v450 = vld [vmem:[%s1 + $0xd28] sm:$0xff]
    %v451 = vld [vmem:[%s1 + $0xd30] sm:$0xff]
    %v452 = vld [vmem:[%s1 + $0xd38] sm:$0xff]
    %v453 = vld [vmem:[%s1 + $0xd40] sm:$0xff]
    %v454 = vld [vmem:[%s1 + $0xd48] sm:$0xff]
    %v455 = vld [vmem:[%s1 + $0xd50] sm:$0xff]
    %v456 = vld [vmem:[%s1 + $0xd58] sm:$0xff]
    %v457 = vld [vmem:[%s1 + $0xd60] sm:$0xff]
    %v458 = vld [vmem:[%s1 + $0xd68] sm:$0xff]
    %v459 = vld [vmem:[%s1 + $0xd70] sm:$0xff]
    %v460 = vld [vmem:[%s1 + $0xd78] sm:$0xff]
    %v461 = vld [vmem:[%s1 + $0xd80] sm:$0xff]
    %v462 = vld [vmem:[%s1 + $0xd88] sm:$0xff]
    %v463 = vld [vmem:[%s1 + $0xd90] sm:$0xff]
    %v464 = vld [vmem:[%s1 + $0xd98] sm:$0xff]
    %v465 = vld [vmem:[%s1 + $0xda0] sm:$0xff]
    %v466 = vld [vmem:[%s1 + $0xda8] sm:$0xff]
    %v467 = vld [vmem:[%s1 + $0xdb0] sm:$0xff]
    %v468 = vld [vmem:[%s1 + $0xdb8] sm:$0xff]
    %v469 = vld [vmem:[%s1 + $0xdc0] sm:$0xff]
    %v470 = vld [vmem:[%s1 + $0xdc8] sm:$0xff]
    %v471 = vld [vmem:[%s1 + $0xdd0] sm:$0xff]
    %v472 = vld [vmem:[%s1 + $0xdd8] sm:$0xff]
    %v473 = vld [vmem:[%s1 + $0xde0] sm:$0xff]
    %v474 = vld [vmem:[%s1 + $0xde8] sm:$0xff]
    %v475 = vld [vmem:[%s1 + $0xdf0] sm:$0xff]
    %v476 = vld [vmem:[%s1 + $0xdf8] sm:$0xff]
    %v477 = vld [vmem:[%s1 + $0xe00] sm:$0xff]
    %v478 = vld [vmem:[%s1 + $0xe08] sm:$0xff]
    %v479 = vld [vmem:[%s1 + $0xe10] sm:$0xff]
    %v480 = vld [vmem:[%s1 + $0xe18] sm:$0xff]
    %v481 = vld [vmem:[%s1 + $0xe20] sm:$0xff]
    %v482 = vld [vmem:[%s1 + $0xe28] sm:$0xff]
    %v483 = vld [vmem:[%s1 + $0xe30] sm:$0xff]
    %v484 = vld [vmem:[%s1 + $0xe38] sm:$0xff]
    %v485 = vld [vmem:[%s1 + $0xe40] sm:$0xff]
    %v486 = vld [vmem:[%s1 + $0xe48] sm:$0xff]
    %v487 = vld [vmem:[%s1 + $0xe50] sm:$0xff]
    %v488 = vld [vmem:[%s1 + $0xe58] sm:$0xff]
    %v489 = vld [vmem:[%s1 + $0xe60] sm:$0xff]
    %v490 = vld [vmem:[%s1 + $0xe68] sm:$0xff]
    %v491 = vld [vmem:[%s1 + $0xe70] sm:$0xff]
    %v492 = vld [vmem:[%s1 + $0xe78] sm:$0xff]
    %v493 = vld [vmem:[%s1 + $0xe80] sm:$0xff]
    %v494 = vld [vmem:[%s1 + $0xe88] sm:$0xff]
    %v495 = vld [vmem:[%s1 + $0xe90] sm:$0xff]
    %v496 = vld [vmem:[%s1 + $0xe98] sm:$0xff]
    %v497 = vld [vmem:[%s1 + $0xea0] sm:$0xff]
    %v498 = vld [vmem:[%s1 + $0xea8] sm:$0xff]
    %v499 = vld [vmem:[%s1 + $0xeb0] sm:$0xff]
    %v500 = vld [vmem:[%s1 + $0xeb8] sm:$0xff]
    %v501 = vld [vmem:[%s1 + $0xec0] sm:$0xff]
    %v502 = vld [vmem:[%s1 + $0xec8] sm:$0xff]
    %v503 = vld [vmem:[%s1 + $0xed0] sm:$0xff]
    %v504 = vld [vmem:[%s1 + $0xed8] sm:$0xff]
    %v505 = vld [vmem:[%s1 + $0xee0] sm:$0xff]
    %v506 = vld [vmem:[%s1 + $0xee8] sm:$0xff]
    %v507 = vld [vmem:[%s1 + $0xef0] sm:$0xff]
    %v508 = vld [vmem:[%s1 + $0xef8] sm:$0xff]
    %v509 = vld [vmem:[%s1 + $0xf00] sm:$0xff]
    %v510 = vld [vmem:[%s1 + $0xf08] sm:$0xff]
    %v511 = vld [vmem:[%s1 + $0xf10] sm:$0xff]
    %v512 = vld [vmem:[%s1 + $0xf18] sm:$0xff]
    %v513 = vld [vmem:[%s1 + $0xf20] sm:$0xff]
    %v514 = vld [vmem:[%s1 + $0xf28] sm:$0xff]
    %v515 = vld [vmem:[%s1 + $0xf30] sm:$0xff]
    %v516 = vld [vmem:[%s1 + $0xf38] sm:$0xff]
    %v517 = vld [vmem:[%s1 + $0xf40] sm:$0xff]
    %v518 = vld [vmem:[%s1 + $0xf48] sm:$0xff]
    %v519 = vld [vmem:[%s1 + $0xf50] sm:$0xff]
    %v520 = vld [vmem:[%s1 + $0xf58] sm:$0xff]
    %v521 = vld [vmem:[%s1 + $0xf60] sm:$0xff]
    %v522 = vld [vmem:[%s1 + $0xf68] sm:$0xff]
    %v523 = vld [vmem:[%s1 + $0xf70] sm:$0xff]
    %v524 = vld [vmem:[%s1 + $0xf78] sm:$0xff]
    %v525 = vld [vmem:[%s1 + $0xf80] sm:$0xff]
    %v526 = vld [vmem:[%s1 + $0xf88] sm:$0xff]
    %v527 = vld [vmem:[%s1 + $0xf90] sm:$0xff]
    %v528 = vld [vmem:[%s1 + $0xf98] sm:$0xff]
    %v529 = vld [vmem:[%s1 + $0xfa0] sm:$0xff]
    %v530 = vld [vmem:[%s1 + $0xfa8] sm:$0xff]
    %v531 = vld [vmem:[%s1 + $0xfb0] sm:$0xff]
    %v532 = vld [vmem:[%s1 + $0xfb8] sm:$0xff]
    %v533 = vld [vmem:[%s1 + $0xfc0] sm:$0xff]
    %v534 = vld [vmem:[%s1 + $0xfc8] sm:$0xff]
    %v535 = vld [vmem:[%s1 + $0xfd0] sm:$0xff]
    %v536 = vld [vmem:[%s1 + $0xfd8] sm:$0xff]
    %v537 = vld [vmem:[%s1 + $0xfe0] sm:$0xff]
    %v538 = vld [vmem:[%s1 + $0xfe8] sm:$0xff]
    %v539 = vld [vmem:[%s1 + $0xff0] sm:$0xff]
    %v540 = vld [vmem:[%s1 + $0xff8] sm:$0xff]
    %v541 = vld [vmem:[%s1 + $0x1000] sm:$0xff]
    %v542 = vld [vmem:[%s1 + $0x1008] sm:$0xff]
    %v543 = vld [vmem:[%s1 + $0x1010] sm:$0xff]
    %v544 = vld [vmem:[%s1 + $0x1018] sm:$0xff]
    %v545 = vld [vmem:[%s1 + $0x1020] sm:$0xff]
    %v546 = vld [vmem:[%s1 + $0x1028] sm:$0xff]
    %v547 = vld [vmem:[%s1 + $0x1030] sm:$0xff]
    %v548 = vld [vmem:[%s1 + $0x1038] sm:$0xff]
    %v549 = vld [vmem:[%s1 + $0x1040] sm:$0xff]
    %v550 = vld [vmem:[%s1 + $0x1048] sm:$0xff]
    %v551 = vld [vmem:[%s1 + $0x1050] sm:$0xff]
    %v552 = vld [vmem:[%s1 + $0x1058] sm:$0xff]
    %v553 = vld [vmem:[%s1 + $0x1060] sm:$0xff]
    %v554 = vld [vmem:[%s1 + $0x1068] sm:$0xff]
    %v555 = vld [vmem:[%s1 + $0x1070] sm:$0xff]
    %v556 = vld [vmem:[%s1 + $0x1078] sm:$0xff]
    %v557 = vld [vmem:[%s1 + $0x1080] sm:$0xff]
    %v558 = vld [vmem:[%s1 + $0x1088] sm:$0xff]
    %v559 = vld [vmem:[%s1 + $0x1090] sm:$0xff]
    %v560 = vld [vmem:[%s1 + $0x1098] sm:$0xff]
    %v561 = vld [vmem:[%s1 + $0x10a0] sm:$0xff]
    %v562 = vld [vmem:[%s1 + $0x10a8] sm:$0xff]
    %v563 = vld [vmem:[%s1 + $0x10b0] sm:$0xff]
    %v564 = vld [vmem:[%s1 + $0x10b8] sm:$0xff]
    %v565 = vld [vmem:[%s1 + $0x10c0] sm:$0xff]
    %v566 = vld [vmem:[%s1 + $0x10c8] sm:$0xff]
    %v567 = vld [vmem:[%s1 + $0x10d0] sm:$0xff]
    %v568 = vld [vmem:[%s1 + $0x10d8] sm:$0xff]
    %v569 = vld [vmem:[%s1 + $0x10e0] sm:$0xff]
    %v570 = vld [vmem:[%s1 + $0x10e8] sm:$0xff]
    %v571 = vld [vmem:[%s1 + $0x10f0] sm:$0xff]
    %v572 = vld [vmem:[%s1 + $0x10f8] sm:$0xff]
    %v573 = vld [vmem:[%s1 + $0x1100] sm:$0xff]
    %v574 = vld [vmem:[%s1 + $0x1108] sm:$0xff]
    %v575 = vld [vmem:[%s1 + $0x1110] sm:$0xff]
    %v576 = vld [vmem:[%s1 + $0x1118] sm:$0xff]
    %v577 = vld [vmem:[%s1 + $0x1120] sm:$0xff]
    %v578 = vld [vmem:[%s1 + $0x1128] sm:$0xff]
    %v579 = vld [vmem:[%s1 + $0x1130] sm:$0xff]
    %v580 = vld [vmem:[%s1 + $0x1138] sm:$0xff]
    %v581 = vld [vmem:[%s1 + $0x1140] sm:$0xff]
    %v582 = vld [vmem:[%s1 + $0x1148] sm:$0xff]
    %v583 = vld [vmem:[%s1 + $0x1150] sm:$0xff]
    %v584 = vld [vmem:[%s1 + $0x1158] sm:$0xff]
    %v585 = vld [vmem:[%s1 + $0x1160] sm:$0xff]
    %v586 = vld [vmem:[%s1 + $0x1168] sm:$0xff]
    %v587 = vld [vmem:[%s1 + $0x1170] sm:$0xff]
    %v588 = vld [vmem:[%s1 + $0x1178] sm:$0xff]
    %v589 = vld [vmem:[%s1 + $0x1180] sm:$0xff]
    %v590 = vld [vmem:[%s1 + $0x1188] sm:$0xff]
    %v591 = vld [vmem:[%s1 + $0x1190] sm:$0xff]
    %v592 = vld [vmem:[%s1 + $0x1198] sm:$0xff]
    %v593 = vld [vmem:[%s1 + $0x11a0] sm:$0xff]
    %v594 = vld [vmem:[%s1 + $0x11a8] sm:$0xff]
    %v595 = vld [vmem:[%s1 + $0x11b0] sm:$0xff]
    %v596 = vld [vmem:[%s1 + $0x11b8] sm:$0xff]
    %v597 = vld [vmem:[%s1 + $0x11c0] sm:$0xff]
    %v598 = vld [vmem:[%s1 + $0x11c8] sm:$0xff]
    %v599 = vld [vmem:[%s1 + $0x11d0] sm:$0xff]
    %v600 = vld [vmem:[%s1 + $0x11d8] sm:$0xff]
    %v601 = vld [vmem:[%s1 + $0x11e0] sm:$0xff]
    %v602 = vld [vmem:[%s1 + $0x11e8] sm:$0xff]
    %v603 = vld [vmem:[%s1 + $0x11f0] sm:$0xff]
    %v604 = vld [vmem:[%s1 + $0x11f8] sm:$0xff]
    %v605 = vld [vmem:[%s1 + $0x1200] sm:$0xff]
    %v606 = vld [vmem:[%s1 + $0x1208] sm:$0xff]
    %v607 = vld [vmem:[%s1 + $0x1210] sm:$0xff]
    %v608 = vld [vmem:[%s1 + $0x1218] sm:$0xff]
    %v609 = vld [vmem:[%s1 + $0x1220] sm:$0xff]
    %v610 = vld [vmem:[%s1 + $0x1228] sm:$0xff]
    %v611 = vld [vmem:[%s1 + $0x1230] sm:$0xff]
    %v612 = vld [vmem:[%s1 + $0x1238] sm:$0xff]
    %v613 = vld [vmem:[%s1 + $0x1240] sm:$0xff]
    %v614 = vld [vmem:[%s1 + $0x1248] sm:$0xff]
    %v615 = vld [vmem:[%s1 + $0x1250] sm:$0xff]
    %v616 = vld [vmem:[%s1 + $0x1258] sm:$0xff]
    %v617 = vld [vmem:[%s1 + $0x1260] sm:$0xff]
    %v618 = vld [vmem:[%s1 + $0x1268] sm:$0xff]
    %v619 = vld [vmem:[%s1 + $0x1270] sm:$0xff]
    %v620 = vld [vmem:[%s1 + $0x1278] sm:$0xff]
    %v621 = vld [vmem:[%s1 + $0x1280] sm:$0xff]
    %v622 = vld [vmem:[%s1 + $0x1288] sm:$0xff]
    %v623 = vld [vmem:[%s1 + $0x1290] sm:$0xff]
    %v624 = vld [vmem:[%s1 + $0x1298] sm:$0xff]
    %v625 = vld [vmem:[%s1 + $0x12a0] sm:$0xff]
    %v626 = vld [vmem:[%s1 + $0x12a8] sm:$0xff]
    %v627 = vld [vmem:[%s1 + $0x12b0] sm:$0xff]
    %v628 = vld [vmem:[%s1 + $0x12b8] sm:$0xff]
    %v629 = vld [vmem:[%s1 + $0x12c0] sm:$0xff]
    %v630 = vld [vmem:[%s1 + $0x12c8] sm:$0xff]
    %v631 = vld [vmem:[%s1 + $0x12d0] sm:$0xff]
    %v632 = vld [vmem:[%s1 + $0x12d8] sm:$0xff]
    %v633 = vld [vmem:[%s1 + $0x12e0] sm:$0xff]
    %v634 = vld [vmem:[%s1 + $0x12e8] sm:$0xff]
    %v635 = vld [vmem:[%s1 + $0x12f0] sm:$0xff]
    %v636 = vld [vmem:[%s1 + $0x12f8] sm:$0xff]
    %v637 = vld [vmem:[%s1 + $0x1300] sm:$0xff]
    %v638 = vld [vmem:[%s1 + $0x1308] sm:$0xff]
    %v639 = vld [vmem:[%s1 + $0x1310] sm:$0xff]
    %v640 = vld [vmem:[%s1 + $0x1318] sm:$0xff]
    %v641 = vld [vmem:[%s1 + $0x1320] sm:$0xff]
    %v642 = vld [vmem:[%s1 + $0x1328] sm:$0xff]
    %v643 = vld [vmem:[%s1 + $0x1330] sm:$0xff]
    %v644 = vld [vmem:[%s1 + $0x1338] sm:$0xff]
    %v645 = vld [vmem:[%s1 + $0x1340] sm:$0xff]
    %v646 = vld [vmem:[%s1 + $0x1348] sm:$0xff]
    %v647 = vld [vmem:[%s1 + $0x1350] sm:$0xff]
    %v648 = vld [vmem:[%s1 + $0x1358] sm:$0xff]
    %v649 = vld [vmem:[%s1 + $0x1360] sm:$0xff]
    %v650 = vld [vmem:[%s1 + $0x1368] sm:$0xff]
    %v651 = vld [vmem:[%s1 + $0x1370] sm:$0xff]
    %v652 = vld [vmem:[%s1 + $0x1378] sm:$0xff]
    %v653 = vld [vmem:[%s1 + $0x1380] sm:$0xff]
    %v654 = vld [vmem:[%s1 + $0x1388] sm:$0xff]
    %v655 = vld [vmem:[%s1 + $0x1390] sm:$0xff]
    %v656 = vld [vmem:[%s1 + $0x1398] sm:$0xff]
    %v657 = vld [vmem:[%s1 + $0x13a0] sm:$0xff]
    %v658 = vld [vmem:[%s1 + $0x13a8] sm:$0xff]
    %v659 = vld [vmem:[%s1 + $0x13b0] sm:$0xff]
    %v660 = vld [vmem:[%s1 + $0x13b8] sm:$0xff]
    %v661 = vld [vmem:[%s1 + $0x13c0] sm:$0xff]
    %v662 = vld [vmem:[%s1 + $0x13c8] sm:$0xff]
    %v663 = vld [vmem:[%s1 + $0x13d0] sm:$0xff]
    %v664 = vld [vmem:[%s1 + $0x13d8] sm:$0xff]
    %v665 = vld [vmem:[%s1 + $0x13e0] sm:$0xff]
    %v666 = vld [vmem:[%s1 + $0x13e8] sm:$0xff]
    %v667 = vld [vmem:[%s1 + $0x13f0] sm:$0xff]
    %v668 = vld [vmem:[%s1 + $0x13f8] sm:$0xff]
    %v669 = vld [vmem:[%s1 + $0x1400] sm:$0xff]
    %v670 = vld [vmem:[%s1 + $0x1408] sm:$0xff]
    %v671 = vld [vmem:[%s1 + $0x1410] sm:$0xff]
    %v672 = vld [vmem:[%s1 + $0x1418] sm:$0xff]
    %v673 = vld [vmem:[%s1 + $0x1420] sm:$0xff]
    %v674 = vld [vmem:[%s1 + $0x1428] sm:$0xff]
    %v675 = vld [vmem:[%s1 + $0x1430] sm:$0xff]
    %v676 = vld [vmem:[%s1 + $0x1438] sm:$0xff]
    %v677 = vld [vmem:[%s1 + $0x1440] sm:$0xff]
    %v678 = vld [vmem:[%s1 + $0x1448] sm:$0xff]
    %v679 = vld [vmem:[%s1 + $0x1450] sm:$0xff]
    %v680 = vld [vmem:[%s1 + $0x1458] sm:$0xff]
    %v681 = vld [vmem:[%s1 + $0x1460] sm:$0xff]
    %v682 = vld [vmem:[%s1 + $0x1468] sm:$0xff]
    %v683 = vld [vmem:[%s1 + $0x1470] sm:$0xff]
    %v684 = vld [vmem:[%s1 + $0x1478] sm:$0xff]
    %v685 = vld [vmem:[%s1 + $0x1480] sm:$0xff]
    %v686 = vld [vmem:[%s1 + $0x1488] sm:$0xff]
    %v687 = vld [vmem:[%s1 + $0x1490] sm:$0xff]
    %v688 = vld [vmem:[%s1 + $0x1498] sm:$0xff]
    %v689 = vld [vmem:[%s1 + $0x14a0] sm:$0xff]
    %v690 = vld [vmem:[%s1 + $0x14a8] sm:$0xff]
    %v691 = vld [vmem:[%s1 + $0x14b0] sm:$0xff]
    %v692 = vld [vmem:[%s1 + $0x14b8] sm:$0xff]
    %v693 = vld [vmem:[%s1 + $0x14c0] sm:$0xff]
    %v694 = vld [vmem:[%s1 + $0x14c8] sm:$0xff]
    %v695 = vld [vmem:[%s1 + $0x14d0] sm:$0xff]
    %v696 = vld [vmem:[%s1 + $0x14d8] sm:$0xff]
    %v697 = vld [vmem:[%s1 + $0x14e0] sm:$0xff]
    %v698 = vld [vmem:[%s1 + $0x14e8] sm:$0xff]
    %v699 = vld [vmem:[%s1 + $0x14f0] sm:$0xff]
    %v700 = vld [vmem:[%s1 + $0x14f8] sm:$0xff]
    %v701 = vld [vmem:[%s1 + $0x1500] sm:$0xff]
    %v702 = vld [vmem:[%s1 + $0x1508] sm:$0xff]
    %v703 = vld [vmem:[%s1 + $0x1510] sm:$0xff]
    %v704 = vld [vmem:[%s1 + $0x1518] sm:$0xff]
    %v705 = vld [vmem:[%s1 + $0x1520] sm:$0xff]
    %v706 = vld [vmem:[%s1 + $0x1528] sm:$0xff]
    %v707 = vld [vmem:[%s1 + $0x1530] sm:$0xff]
    %v708 = vld [vmem:[%s1 + $0x1538] sm:$0xff]
    %v709 = vld [vmem:[%s1 + $0x1540] sm:$0xff]
    %v710 = vld [vmem:[%s1 + $0x1548] sm:$0xff]
    %v711 = vld [vmem:[%s1 + $0x1550] sm:$0xff]
    %v712 = vld [vmem:[%s1 + $0x1558] sm:$0xff]
    %v713 = vld [vmem:[%s1 + $0x1560] sm:$0xff]
    %v714 = vld [vmem:[%s1 + $0x1568] sm:$0xff]
    %v715 = vld [vmem:[%s1 + $0x1570] sm:$0xff]
    %v716 = vld [vmem:[%s1 + $0x1578] sm:$0xff]
    %v717 = vld [vmem:[%s1 + $0x1580] sm:$0xff]
    %v718 = vld [vmem:[%s1 + $0x1588] sm:$0xff]
    %v719 = vld [vmem:[%s1 + $0x1590] sm:$0xff]
    %v720 = vld [vmem:[%s1 + $0x1598] sm:$0xff]
    %v721 = vld [vmem:[%s1 + $0x15a0] sm:$0xff]
    %v722 = vld [vmem:[%s1 + $0x15a8] sm:$0xff]
    %v723 = vld [vmem:[%s1 + $0x15b0] sm:$0xff]
    %v724 = vld [vmem:[%s1 + $0x15b8] sm:$0xff]
    %v725 = vld [vmem:[%s1 + $0x15c0] sm:$0xff]
    %v726 = vld [vmem:[%s1 + $0x15c8] sm:$0xff]
    %v727 = vld [vmem:[%s1 + $0x15d0] sm:$0xff]
    %v728 = vld [vmem:[%s1 + $0x15d8] sm:$0xff]
    %v729 = vld [vmem:[%s1 + $0x15e0] sm:$0xff]
    %v730 = vld [vmem:[%s1 + $0x15e8] sm:$0xff]
    %v731 = vld [vmem:[%s1 + $0x15f0] sm:$0xff]
    %v732 = vld [vmem:[%s1 + $0x15f8] sm:$0xff]
    %v733 = vld [vmem:[%s1 + $0x1600] sm:$0xff]
    %v734 = vld [vmem:[%s1 + $0x1608] sm:$0xff]
    %v735 = vld [vmem:[%s1 + $0x1610] sm:$0xff]
    %v736 = vld [vmem:[%s1 + $0x1618] sm:$0xff]
    %v737 = vld [vmem:[%s1 + $0x1620] sm:$0xff]
    %v738 = vld [vmem:[%s1 + $0x1628] sm:$0xff]
    %v739 = vld [vmem:[%s1 + $0x1630] sm:$0xff]
    %v740 = vld [vmem:[%s1 + $0x1638] sm:$0xff]
    %v741 = vld [vmem:[%s1 + $0x1640] sm:$0xff]
    %v742 = vld [vmem:[%s1 + $0x1648] sm:$0xff]
    %v743 = vld [vmem:[%s1 + $0x1650] sm:$0xff]
    %v744 = vld [vmem:[%s1 + $0x1658] sm:$0xff]
    %v745 = vld [vmem:[%s1 + $0x1660] sm:$0xff]
    %v746 = vld [vmem:[%s1 + $0x1668] sm:$0xff]
    %v747 = vld [vmem:[%s1 + $0x1670] sm:$0xff]
    %v748 = vld [vmem:[%s1 + $0x1678] sm:$0xff]
    %v749 = vld [vmem:[%s1 + $0x1680] sm:$0xff]
    %v750 = vld [vmem:[%s1 + $0x1688] sm:$0xff]
    %v751 = vld [vmem:[%s1 + $0x1690] sm:$0xff]
    %v752 = vld [vmem:[%s1 + $0x1698] sm:$0xff]
    %v753 = vld [vmem:[%s1 + $0x16a0] sm:$0xff]
    %v754 = vld [vmem:[%s1 + $0x16a8] sm:$0xff]
    %v755 = vld [vmem:[%s1 + $0x16b0] sm:$0xff]
    %v756 = vld [vmem:[%s1 + $0x16b8] sm:$0xff]
    %v757 = vld [vmem:[%s1 + $0x16c0] sm:$0xff]
    %v758 = vld [vmem:[%s1 + $0x16c8] sm:$0xff]
    %v759 = vld [vmem:[%s1 + $0x16d0] sm:$0xff]
    %v760 = vld [vmem:[%s1 + $0x16d8] sm:$0xff]
    %v761 = vld [vmem:[%s1 + $0x16e0] sm:$0xff]
    %v762 = vld [vmem:[%s1 + $0x16e8] sm:$0xff]
    %v763 = vld [vmem:[%s1 + $0x16f0] sm:$0xff]
    %v764 = vld [vmem:[%s1 + $0x16f8] sm:$0xff]
    %v765 = vld [vmem:[%s1 + $0x1700] sm:$0xff]
    %v766 = vld [vmem:[%s1 + $0x1708] sm:$0xff]
    %v767 = vld [vmem:[%s1 + $0x1710] sm:$0xff]
    %v768 = vld [vmem:[%s1 + $0x1718] sm:$0xff]
    %v769 = vld [vmem:[%s1 + $0x1720] sm:$0xff]
    %v770 = vld [vmem:[%s1 + $0x1728] sm:$0xff]
    %v771 = vld [vmem:[%s1 + $0x1730] sm:$0xff]
    %v772 = vld [vmem:[%s1 + $0x1738] sm:$0xff]
    %v773 = vld [vmem:[%s1 + $0x1740] sm:$0xff]
    %v774 = vld [vmem:[%s1 + $0x1748] sm:$0xff]
    %v775 = vld [vmem:[%s1 + $0x1750] sm:$0xff]
    %v776 = vld [vmem:[%s1 + $0x1758] sm:$0xff]
    %v777 = vld [vmem:[%s1 + $0x1760] sm:$0xff]
    %v778 = vld [vmem:[%s1 + $0x1768] sm:$0xff]
    %v779 = vld [vmem:[%s1 + $0x1770] sm:$0xff]
    %v780 = vld [vmem:[%s1 + $0x1778] sm:$0xff]
    %v781 = vld [vmem:[%s1 + $0x1780] sm:$0xff]
    %v782 = vld [vmem:[%s1 + $0x1788] sm:$0xff]
    %v783 = vld [vmem:[%s1 + $0x1790] sm:$0xff]
    %v784 = vld [vmem:[%s1 + $0x1798] sm:$0xff]
    %v785 = vld [vmem:[%s1 + $0x17a0] sm:$0xff]
    %v786 = vld [vmem:[%s1 + $0x17a8] sm:$0xff]
    %v787 = vld [vmem:[%s1 + $0x17b0] sm:$0xff]
    %v788 = vld [vmem:[%s1 + $0x17b8] sm:$0xff]
    %v789 = vld [vmem:[%s1 + $0x17c0] sm:$0xff]
    %v790 = vld [vmem:[%s1 + $0x17c8] sm:$0xff]
    %v791 = vld [vmem:[%s1 + $0x17d0] sm:$0xff]
    %v792 = vld [vmem:[%s1 + $0x17d8] sm:$0xff]
    %v793 = vld [vmem:[%s1 + $0x17e0] sm:$0xff]
    %v794 = vld [vmem:[%s1 + $0x17e8] sm:$0xff]
    %v795 = vld [vmem:[%s1 + $0x17f0] sm:$0xff]
    %v796 = vld [vmem:[%s1 + $0x17f8] sm:$0xff]
    %v797 = vld [vmem:[%s1 + $0x1800] sm:$0xff]
    %v798 = vld [vmem:[%s1 + $0x1808] sm:$0xff]
    %v799 = vld [vmem:[%s1 + $0x1810] sm:$0xff]
    %v800 = vld [vmem:[%s1 + $0x1818] sm:$0xff]
    %v801 = vld [vmem:[%s1 + $0x1820] sm:$0xff]
    %v802 = vld [vmem:[%s1 + $0x1828] sm:$0xff]
    %v803 = vld [vmem:[%s1 + $0x1830] sm:$0xff]
    %v804 = vld [vmem:[%s1 + $0x1838] sm:$0xff]
    %v805 = vld [vmem:[%s1 + $0x1840] sm:$0xff]
    %v806 = vld [vmem:[%s1 + $0x1848] sm:$0xff]
    %v807 = vld [vmem:[%s1 + $0x1850] sm:$0xff]
    %v808 = vld [vmem:[%s1 + $0x1858] sm:$0xff]
    %v809 = vld [vmem:[%s1 + $0x1860] sm:$0xff]
    %v810 = vld [vmem:[%s1 + $0x1868] sm:$0xff]
    %v811 = vld [vmem:[%s1 + $0x1870] sm:$0xff]
    %v812 = vld [vmem:[%s1 + $0x1878] sm:$0xff]
    %v813 = vld [vmem:[%s1 + $0x1880] sm:$0xff]
    %v814 = vld [vmem:[%s1 + $0x1888] sm:$0xff]
    %v815 = vld [vmem:[%s1 + $0x1890] sm:$0xff]
    %v816 = vld [vmem:[%s1 + $0x1898] sm:$0xff]
    %v817 = vld [vmem:[%s1 + $0x18a0] sm:$0xff]
    %v818 = vld [vmem:[%s1 + $0x18a8] sm:$0xff]
    %v819 = vld [vmem:[%s1 + $0x18b0] sm:$0xff]
    %v820 = vld [vmem:[%s1 + $0x18b8] sm:$0xff]
    %v821 = vld [vmem:[%s1 + $0x18c0] sm:$0xff]
    %v822 = vld [vmem:[%s1 + $0x18c8] sm:$0xff]
    %v823 = vld [vmem:[%s1 + $0x18d0] sm:$0xff]
    %v824 = vld [vmem:[%s1 + $0x18d8] sm:$0xff]
    %v825 = vld [vmem:[%s1 + $0x18e0] sm:$0xff]
    %v826 = vld [vmem:[%s1 + $0x18e8] sm:$0xff]
    %v827 = vld [vmem:[%s1 + $0x18f0] sm:$0xff]
    %v828 = vld [vmem:[%s1 + $0x18f8] sm:$0xff]
    %v829 = vld [vmem:[%s1 + $0x1900] sm:$0xff]
    %v830 = vld [vmem:[%s1 + $0x1908] sm:$0xff]
    %v831 = vld [vmem:[%s1 + $0x1910] sm:$0xff]
    %v832 = vld [vmem:[%s1 + $0x1918] sm:$0xff]
    %v833 = vld [vmem:[%s1 + $0x1920] sm:$0xff]
    %v834 = vld [vmem:[%s1 + $0x1928] sm:$0xff]
    %v835 = vld [vmem:[%s1 + $0x1930] sm:$0xff]
    %v836 = vld [vmem:[%s1 + $0x1938] sm:$0xff]
    %v837 = vld [vmem:[%s1 + $0x1940] sm:$0xff]
    %v838 = vld [vmem:[%s1 + $0x1948] sm:$0xff]
    %v839 = vld [vmem:[%s1 + $0x1950] sm:$0xff]
    %v840 = vld [vmem:[%s1 + $0x1958] sm:$0xff]
    %v841 = vld [vmem:[%s1 + $0x1960] sm:$0xff]
    %v842 = vld [vmem:[%s1 + $0x1968] sm:$0xff]
    %v843 = vld [vmem:[%s1 + $0x1970] sm:$0xff]
    %v844 = vld [vmem:[%s1 + $0x1978] sm:$0xff]
    %v845 = vld [vmem:[%s1 + $0x1980] sm:$0xff]
    %v846 = vld [vmem:[%s1 + $0x1988] sm:$0xff]
    %v847 = vld [vmem:[%s1 + $0x1990] sm:$0xff]
    %v848 = vld [vmem:[%s1 + $0x1998] sm:$0xff]
    %v849 = vld [vmem:[%s1 + $0x19a0] sm:$0xff]
    %v850 = vld [vmem:[%s1 + $0x19a8] sm:$0xff]
    %v851 = vld [vmem:[%s1 + $0x19b0] sm:$0xff]
    %v852 = vld [vmem:[%s1 + $0x19b8] sm:$0xff]
    %v853 = vld [vmem:[%s1 + $0x19c0] sm:$0xff]
    %v854 = vld [vmem:[%s1 + $0x19c8] sm:$0xff]
    %v855 = vld [vmem:[%s1 + $0x19d0] sm:$0xff]
    %v856 = vld [vmem:[%s1 + $0x19d8] sm:$0xff]
    %v857 = vld [vmem:[%s1 + $0x19e0] sm:$0xff]
    %v858 = vld [vmem:[%s1 + $0x19e8] sm:$0xff]
    %v859 = vld [vmem:[%s1 + $0x19f0] sm:$0xff]
    %v860 = vld [vmem:[%s1 + $0x19f8] sm:$0xff]
    %v861 = vld [vmem:[%s1 + $0x1a00] sm:$0xff]
    %v862 = vld [vmem:[%s1 + $0x1a08] sm:$0xff]
    %v863 = vld [vmem:[%s1 + $0x1a10] sm:$0xff]
    %v864 = vld [vmem:[%s1 + $0x1a18] sm:$0xff]
    %v865 = vld [vmem:[%s1 + $0x1a20] sm:$0xff]
    %v866 = vld [vmem:[%s1 + $0x1a28] sm:$0xff]
    %v867 = vld [vmem:[%s1 + $0x1a30] sm:$0xff]
    %v868 = vld [vmem:[%s1 + $0x1a38] sm:$0xff]
    %v869 = vld [vmem:[%s1 + $0x1a40] sm:$0xff]
    %v870 = vld [vmem:[%s1 + $0x1a48] sm:$0xff]
    %v871 = vld [vmem:[%s1 + $0x1a50] sm:$0xff]
    %v872 = vld [vmem:[%s1 + $0x1a58] sm:$0xff]
    %v873 = vld [vmem:[%s1 + $0x1a60] sm:$0xff]
    %v874 = vld [vmem:[%s1 + $0x1a68] sm:$0xff]
    %v875 = vld [vmem:[%s1 + $0x1a70] sm:$0xff]
    %v876 = vld [vmem:[%s1 + $0x1a78] sm:$0xff]
    %v877 = vld [vmem:[%s1 + $0x1a80] sm:$0xff]
    %v878 = vld [vmem:[%s1 + $0x1a88] sm:$0xff]
    %v879 = vld [vmem:[%s1 + $0x1a90] sm:$0xff]
    %v880 = vld [vmem:[%s1 + $0x1a98] sm:$0xff]
    %v881 = vld [vmem:[%s1 + $0x1aa0] sm:$0xff]
    %v882 = vld [vmem:[%s1 + $0x1aa8] sm:$0xff]
    %v883 = vld [vmem:[%s1 + $0x1ab0] sm:$0xff]
    %v884 = vld [vmem:[%s1 + $0x1ab8] sm:$0xff]
    %v885 = vld [vmem:[%s1 + $0x1ac0] sm:$0xff]
    %v886 = vld [vmem:[%s1 + $0x1ac8] sm:$0xff]
    %v887 = vld [vmem:[%s1 + $0x1ad0] sm:$0xff]
    %v888 = vld [vmem:[%s1 + $0x1ad8] sm:$0xff]
    %v889 = vld [vmem:[%s1 + $0x1ae0] sm:$0xff]
    %v890 = vld [vmem:[%s1 + $0x1ae8] sm:$0xff]
    %v891 = vld [vmem:[%s1 + $0x1af0] sm:$0xff]
    %v892 = vld [vmem:[%s1 + $0x1af8] sm:$0xff]
    %v893 = vld [vmem:[%s1 + $0x1b00] sm:$0xff]
    %v894 = vld [vmem:[%s1 + $0x1b08] sm:$0xff]
    %v895 = vld [vmem:[%s1 + $0x1b10] sm:$0xff]
    %v896 = vld [vmem:[%s1 + $0x1b18] sm:$0xff]
    %v897 = vld [vmem:[%s1 + $0x1b20] sm:$0xff]
    %v898 = vld [vmem:[%s1 + $0x1b28] sm:$0xff]
    %v899 = vld [vmem:[%s1 + $0x1b30] sm:$0xff]
    %v900 = vld [vmem:[%s1 + $0x1b38] sm:$0xff]
    %v901 = vld [vmem:[%s1 + $0x1b40] sm:$0xff]
    %v902 = vld [vmem:[%s1 + $0x1b48] sm:$0xff]
    %v903 = vld [vmem:[%s1 + $0x1b50] sm:$0xff]
    %v904 = vld [vmem:[%s1 + $0x1b58] sm:$0xff]
    %v905 = vld [vmem:[%s1 + $0x1b60] sm:$0xff]
    %v906 = vld [vmem:[%s1 + $0x1b68] sm:$0xff]
    %v907 = vld [vmem:[%s1 + $0x1b70] sm:$0xff]
    %v908 = vld [vmem:[%s1 + $0x1b78] sm:$0xff]
    %v909 = vld [vmem:[%s1 + $0x1b80] sm:$0xff]
    %v910 = vld [vmem:[%s1 + $0x1b88] sm:$0xff]
    %v911 = vld [vmem:[%s1 + $0x1b90] sm:$0xff]
    %v912 = vld [vmem:[%s1 + $0x1b98] sm:$0xff]
    %v913 = vld [vmem:[%s1 + $0x1ba0] sm:$0xff]
    %v914 = vld [vmem:[%s1 + $0x1ba8] sm:$0xff]
    %v915 = vld [vmem:[%s1 + $0x1bb0] sm:$0xff]
    %v916 = vld [vmem:[%s1 + $0x1bb8] sm:$0xff]
    %v917 = vld [vmem:[%s1 + $0x1bc0] sm:$0xff]
    %v918 = vld [vmem:[%s1 + $0x1bc8] sm:$0xff]
    %v919 = vld [vmem:[%s1 + $0x1bd0] sm:$0xff]
    %v920 = vld [vmem:[%s1 + $0x1bd8] sm:$0xff]
    %v921 = vld [vmem:[%s1 + $0x1be0] sm:$0xff]
    %v922 = vld [vmem:[%s1 + $0x1be8] sm:$0xff]
    %v923 = vld [vmem:[%s1 + $0x1bf0] sm:$0xff]
    %v924 = vld [vmem:[%s1 + $0x1bf8] sm:$0xff]
    %v925 = vld [vmem:[%s1 + $0x1c00] sm:$0xff]
    %v926 = vld [vmem:[%s1 + $0x1c08] sm:$0xff]
    %v927 = vld [vmem:[%s1 + $0x1c10] sm:$0xff]
    %v928 = vld [vmem:[%s1 + $0x1c18] sm:$0xff]
    %v929 = vld [vmem:[%s1 + $0x1c20] sm:$0xff]
    %v930 = vld [vmem:[%s1 + $0x1c28] sm:$0xff]
    %v931 = vld [vmem:[%s1 + $0x1c30] sm:$0xff]
    %v932 = vld [vmem:[%s1 + $0x1c38] sm:$0xff]
    %v933 = vld [vmem:[%s1 + $0x1c40] sm:$0xff]
    %v934 = vld [vmem:[%s1 + $0x1c48] sm:$0xff]
    %v935 = vld [vmem:[%s1 + $0x1c50] sm:$0xff]
    %v936 = vld [vmem:[%s1 + $0x1c58] sm:$0xff]
    %v937 = vld [vmem:[%s1 + $0x1c60] sm:$0xff]
    %v938 = vld [vmem:[%s1 + $0x1c68] sm:$0xff]
    %v939 = vld [vmem:[%s1 + $0x1c70] sm:$0xff]
    %v940 = vld [vmem:[%s1 + $0x1c78] sm:$0xff]
    %v941 = vld [vmem:[%s1 + $0x1c80] sm:$0xff]
    %v942 = vld [vmem:[%s1 + $0x1c88] sm:$0xff]
    %v943 = vld [vmem:[%s1 + $0x1c90] sm:$0xff]
    %v944 = vld [vmem:[%s1 + $0x1c98] sm:$0xff]
    %v945 = vld [vmem:[%s1 + $0x1ca0] sm:$0xff]
    %v946 = vld [vmem:[%s1 + $0x1ca8] sm:$0xff]
    %v947 = vld [vmem:[%s1 + $0x1cb0] sm:$0xff]
    %v948 = vld [vmem:[%s1 + $0x1cb8] sm:$0xff]
    %v949 = vld [vmem:[%s1 + $0x1cc0] sm:$0xff]
    %v950 = vld [vmem:[%s1 + $0x1cc8] sm:$0xff]
    %v951 = vld [vmem:[%s1 + $0x1cd0] sm:$0xff]
    %v952 = vld [vmem:[%s1 + $0x1cd8] sm:$0xff]
    %v953 = vld [vmem:[%s1 + $0x1ce0] sm:$0xff]
    %v954 = vld [vmem:[%s1 + $0x1ce8] sm:$0xff]
    %v955 = vld [vmem:[%s1 + $0x1cf0] sm:$0xff]
    %v956 = vld [vmem:[%s1 + $0x1cf8] sm:$0xff]
    %v957 = vld [vmem:[%s1 + $0x1d00] sm:$0xff]
    %v958 = vld [vmem:[%s1 + $0x1d08] sm:$0xff]
    %v959 = vld [vmem:[%s1 + $0x1d10] sm:$0xff]
    %v960 = vld [vmem:[%s1 + $0x1d18] sm:$0xff]
    %v961 = vld [vmem:[%s1 + $0x1d20] sm:$0xff]
    %v962 = vld [vmem:[%s1 + $0x1d28] sm:$0xff]
    %v963 = vld [vmem:[%s1 + $0x1d30] sm:$0xff]
    %v964 = vld [vmem:[%s1 + $0x1d38] sm:$0xff]
    %v965 = vld [vmem:[%s1 + $0x1d40] sm:$0xff]
    %v966 = vld [vmem:[%s1 + $0x1d48] sm:$0xff]
    %v967 = vld [vmem:[%s1 + $0x1d50] sm:$0xff]
    %v968 = vld [vmem:[%s1 + $0x1d58] sm:$0xff]
    %v969 = vld [vmem:[%s1 + $0x1d60] sm:$0xff]
    %v970 = vld [vmem:[%s1 + $0x1d68] sm:$0xff]
    %v971 = vld [vmem:[%s1 + $0x1d70] sm:$0xff]
    %v972 = vld [vmem:[%s1 + $0x1d78] sm:$0xff]
    %v973 = vld [vmem:[%s1 + $0x1d80] sm:$0xff]
    %v974 = vld [vmem:[%s1 + $0x1d88] sm:$0xff]
    %v975 = vld [vmem:[%s1 + $0x1d90] sm:$0xff]
    %v976 = vld [vmem:[%s1 + $0x1d98] sm:$0xff]
    %v977 = vld [vmem:[%s1 + $0x1da0] sm:$0xff]
    %v978 = vld [vmem:[%s1 + $0x1da8] sm:$0xff]
    %v979 = vld [vmem:[%s1 + $0x1db0] sm:$0xff]
    %v980 = vld [vmem:[%s1 + $0x1db8] sm:$0xff]
    %v981 = vld [vmem:[%s1 + $0x1dc0] sm:$0xff]
    %v982 = vld [vmem:[%s1 + $0x1dc8] sm:$0xff]
    %v983 = vld [vmem:[%s1 + $0x1dd0] sm:$0xff]
    %v984 = vld [vmem:[%s1 + $0x1dd8] sm:$0xff]
    %v985 = vld [vmem:[%s1 + $0x1de0] sm:$0xff]
    %v986 = vld [vmem:[%s1 + $0x1de8] sm:$0xff]
    %v987 = vld [vmem:[%s1 + $0x1df0] sm:$0xff]
    %v988 = vld [vmem:[%s1 + $0x1df8] sm:$0xff]
    %v989 = vld [vmem:[%s1 + $0x1e00] sm:$0xff]
    %v990 = vld [vmem:[%s1 + $0x1e08] sm:$0xff]
    %v991 = vld [vmem:[%s1 + $0x1e10] sm:$0xff]
    %v992 = vld [vmem:[%s1 + $0x1e18] sm:$0xff]
    %v993 = vld [vmem:[%s1 + $0x1e20] sm:$0xff]
    %v994 = vld [vmem:[%s1 + $0x1e28] sm:$0xff]
    %v995 = vld [vmem:[%s1 + $0x1e30] sm:$0xff]
    %v996 = vld [vmem:[%s1 + $0x1e38] sm:$0xff]
    %v997 = vld [vmem:[%s1 + $0x1e40] sm:$0xff]
    %v998 = vld [vmem:[%s1 + $0x1e48] sm:$0xff]
    %v999 = vld [vmem:[%s1 + $0x1e50] sm:$0xff]
    %v1000 = vld [vmem:[%s1 + $0x1e58] sm:$0xff]
    %v1001 = vld [vmem:[%s1 + $0x1e60] sm:$0xff]
    %v1002 = vld [vmem:[%s1 + $0x1e68] sm:$0xff]
    %v1003 = vld [vmem:[%s1 + $0x1e70] sm:$0xff]
    %v1004 = vld [vmem:[%s1 + $0x1e78] sm:$0xff]
    %v1005 = vld [vmem:[%s1 + $0x1e80] sm:$0xff]
    %v1006 = vld [vmem:[%s1 + $0x1e88] sm:$0xff]
    %v1007 = vld [vmem:[%s1 + $0x1e90] sm:$0xff]
    %v1008 = vld [vmem:[%s1 + $0x1e98] sm:$0xff]
    %v1009 = vld [vmem:[%s1 + $0x1ea0] sm:$0xff]
    %v1010 = vld [vmem:[%s1 + $0x1ea8] sm:$0xff]
    %v1011 = vld [vmem:[%s1 + $0x1eb0] sm:$0xff]
    %v1012 = vld [vmem:[%s1 + $0x1eb8] sm:$0xff]
    %v1013 = vld [vmem:[%s1 + $0x1ec0] sm:$0xff]
    %v1014 = vld [vmem:[%s1 + $0x1ec8] sm:$0xff]
    %v1015 = vld [vmem:[%s1 + $0x1ed0] sm:$0xff]
    %v1016 = vld [vmem:[%s1 + $0x1ed8] sm:$0xff]
    %v1017 = vld [vmem:[%s1 + $0x1ee0] sm:$0xff]
    %v1018 = vld [vmem:[%s1 + $0x1ee8] sm:$0xff]
    %v1019 = vld [vmem:[%s1 + $0x1ef0] sm:$0xff]
    %v1020 = vld [vmem:[%s1 + $0x1ef8] sm:$0xff]
    %v1021 = vld [vmem:[%s1 + $0x1f00] sm:$0xff]
    %v1022 = vld [vmem:[%s1 + $0x1f08] sm:$0xff]
    %v1023 = vld [vmem:[%s1 + $0x1f10] sm:$0xff]
    %v1024 = vld [vmem:[%s1 + $0x1f18] sm:$0xff]
    %v1025 = vld [vmem:[%s1 + $0x1f20] sm:$0xff]
    %v1026 = vld [vmem:[%s1 + $0x1f28] sm:$0xff]
    %v1027 = vld [vmem:[%s1 + $0x1f30] sm:$0xff]
    %v1028 = vld [vmem:[%s1 + $0x1f38] sm:$0xff]
    %v1029 = vld [vmem:[%s1 + $0x1f40] sm:$0xff]
    %v1030 = vld [vmem:[%s1 + $0x1f48] sm:$0xff]
    %v1031 = vld [vmem:[%s1 + $0x1f50] sm:$0xff]
    %v1032 = vld [vmem:[%s1 + $0x1f58] sm:$0xff]
    %v1033 = vld [vmem:[%s1 + $0x1f60] sm:$0xff]
    %v1034 = vld [vmem:[%s1 + $0x1f68] sm:$0xff]
    %v1035 = vld [vmem:[%s1 + $0x1f70] sm:$0xff]
    %v1036 = vld [vmem:[%s1 + $0x1f78] sm:$0xff]
    %v1037 = vld [vmem:[%s1 + $0x1f80] sm:$0xff]
    %v1038 = vld [vmem:[%s1 + $0x1f88] sm:$0xff]
    %v1039 = vld [vmem:[%s1 + $0x1f90] sm:$0xff]
    %v1040 = vld [vmem:[%s1 + $0x1f98] sm:$0xff]
    %v1041 = vld [vmem:[%s1 + $0x1fa0] sm:$0xff]
    %v1042 = vld [vmem:[%s1 + $0x1fa8] sm:$0xff]
    %v1043 = vld [vmem:[%s1 + $0x1fb0] sm:$0xff]
    %v1044 = vld [vmem:[%s1 + $0x1fb8] sm:$0xff]
    %v1045 = vld [vmem:[%s1 + $0x1fc0] sm:$0xff]
    %v1046 = vld [vmem:[%s1 + $0x1fc8] sm:$0xff]
    %v1047 = vld [vmem:[%s1 + $0x1fd0] sm:$0xff]
    %v1048 = vld [vmem:[%s1 + $0x1fd8] sm:$0xff]
    %v1049 = vld [vmem:[%s1 + $0x1fe0] sm:$0xff]
    %v1050 = vld [vmem:[%s1 + $0x1fe8] sm:$0xff]
    %v1051 = vld [vmem:[%s1 + $0x1ff0] sm:$0xff]
    %v1052 = vld [vmem:[%s1 + $0x1ff8] sm:$0xff]
    %v1053 = vld [vmem:[%s2] sm:$0x3]
    %v1055 = vlaneseq
    %v1056 = vshrl.u32 %v1055, 7
    %v1057 = vsub.s32 0, %v1056
    %v1058 = vrot.slane %v1053, %v1057
    %v1059 = vlaneseq
    %v1060 = vshrl.u32 %v1059, 7
    %v1061 = vsub.s32 1, %v1060
    %v1062 = vrot.slane %v1053, %v1061
    %v1073 = vcombine.high %v21, %v21
    %v1075 = vunpack.c.l.s4 1983009808
    %v1076 = vunpack.c.0.s8 %v1075
    %v1077 = vlaneseq
    %v1078 = vshrl.u32 %v1077, 7
    %v1079 = vsub.s32 %v1076, %v1078
    %v1080 = vrot.slane %v21, %v1079
    %v1082 = vunpack.c.l.s4 1983009808
    %v1083 = vunpack.c.0.s8 %v1082
    %v1084 = vlaneseq
    %v1085 = vshrl.u32 %v1084, 7
    %v1086 = vsub.s32 %v1083, %v1085
    %v1087 = vrot.slane %v1073, %v1086
    %v1088 = vcombine.high %v1080, %v1080
    %v1089 = vcombine.high %v1087, %v1087
    %v1090 = vcombine.high %v22, %v22
    %v1092 = vunpack.c.l.s4 1983009808
    %v1093 = vunpack.c.0.s8 %v1092
    %v1094 = vlaneseq
    %v1095 = vshrl.u32 %v1094, 7
    %v1096 = vsub.s32 %v1093, %v1095
    %v1097 = vrot.slane %v22, %v1096
    %v1099 = vunpack.c.l.s4 1983009808
    %v1100 = vunpack.c.0.s8 %v1099
    %v1101 = vlaneseq
    %v1102 = vshrl.u32 %v1101, 7
    %v1103 = vsub.s32 %v1100, %v1102
    %v1104 = vrot.slane %v1090, %v1103
    %v1105 = vcombine.high %v1097, %v1097
    %v1106 = vcombine.high %v1104, %v1104
    %v1107 = vcombine.high %v23, %v23
    %v1109 = vunpack.c.l.s4 1983009808
    %v1110 = vunpack.c.0.s8 %v1109
    %v1111 = vlaneseq
    %v1112 = vshrl.u32 %v1111, 7
    %v1113 = vsub.s32 %v1110, %v1112
    %v1114 = vrot.slane %v23, %v1113
    %v1116 = vunpack.c.l.s4 1983009808
    %v1117 = vunpack.c.0.s8 %v1116
    %v1118 = vlaneseq
    %v1119 = vshrl.u32 %v1118, 7
    %v1120 = vsub.s32 %v1117, %v1119
    %v1121 = vrot.slane %v1107, %v1120
    %v1122 = vcombine.high %v1114, %v1114
    %v1123 = vcombine.high %v1121, %v1121
    %v1124 = vcombine.high %v24, %v24
    %v1126 = vunpack.c.l.s4 1983009808
    %v1127 = vunpack.c.0.s8 %v1126
    %v1128 = vlaneseq
    %v1129 = vshrl.u32 %v1128, 7
    %v1130 = vsub.s32 %v1127, %v1129
    %v1131 = vrot.slane %v24, %v1130
    %v1133 = vunpack.c.l.s4 1983009808
    %v1134 = vunpack.c.0.s8 %v1133
    %v1135 = vlaneseq
    %v1136 = vshrl.u32 %v1135, 7
    %v1137 = vsub.s32 %v1134, %v1136
    %v1138 = vrot.slane %v1124, %v1137
    %v1139 = vcombine.high %v1131, %v1131
    %v1140 = vcombine.high %v1138, %v1138
    %v1141 = vcombine.high %v25, %v25
    %v1143 = vunpack.c.l.s4 1983009808
    %v1144 = vunpack.c.0.s8 %v1143
    %v1145 = vlaneseq
    %v1146 = vshrl.u32 %v1145, 7
    %v1147 = vsub.s32 %v1144, %v1146
    %v1148 = vrot.slane %v25, %v1147
    %v1150 = vunpack.c.l.s4 1983009808
    %v1151 = vunpack.c.0.s8 %v1150
    %v1152 = vlaneseq
    %v1153 = vshrl.u32 %v1152, 7
    %v1154 = vsub.s32 %v1151, %v1153
    %v1155 = vrot.slane %v1141, %v1154
    %v1156 = vcombine.high %v1148, %v1148
    %v1157 = vcombine.high %v1155, %v1155
    %v1158 = vcombine.high %v26, %v26
    %v1160 = vunpack.c.l.s4 1983009808
    %v1161 = vunpack.c.0.s8 %v1160
    %v1162 = vlaneseq
    %v1163 = vshrl.u32 %v1162, 7
    %v1164 = vsub.s32 %v1161, %v1163
    %v1165 = vrot.slane %v26, %v1164
    %v1167 = vunpack.c.l.s4 1983009808
    %v1168 = vunpack.c.0.s8 %v1167
    %v1169 = vlaneseq
    %v1170 = vshrl.u32 %v1169, 7
    %v1171 = vsub.s32 %v1168, %v1170
    %v1172 = vrot.slane %v1158, %v1171
    %v1173 = vcombine.high %v1165, %v1165
    %v1174 = vcombine.high %v1172, %v1172
    %v1175 = vcombine.high %v27, %v27
    %v1177 = vunpack.c.l.s4 1983009808
    %v1178 = vunpack.c.0.s8 %v1177
    %v1179 = vlaneseq
    %v1180 = vshrl.u32 %v1179, 7
    %v1181 = vsub.s32 %v1178, %v1180
    %v1182 = vrot.slane %v27, %v1181
    %v1184 = vunpack.c.l.s4 1983009808
    %v1185 = vunpack.c.0.s8 %v1184
    %v1186 = vlaneseq
    %v1187 = vshrl.u32 %v1186, 7
    %v1188 = vsub.s32 %v1185, %v1187
    %v1189 = vrot.slane %v1175, %v1188
    %v1190 = vcombine.high %v1182, %v1182
    %v1191 = vcombine.high %v1189, %v1189
    %v1192 = vcombine.high %v28, %v28
    %v1194 = vunpack.c.l.s4 1983009808
    %v1195 = vunpack.c.0.s8 %v1194
    %v1196 = vlaneseq
    %v1197 = vshrl.u32 %v1196, 7
    %v1198 = vsub.s32 %v1195, %v1197
    %v1199 = vrot.slane %v28, %v1198
    %v1201 = vunpack.c.l.s4 1983009808
    %v1202 = vunpack.c.0.s8 %v1201
    %v1203 = vlaneseq
    %v1204 = vshrl.u32 %v1203, 7
    %v1205 = vsub.s32 %v1202, %v1204
    %v1206 = vrot.slane %v1192, %v1205
    %v1207 = vcombine.high %v1199, %v1199
    %v1208 = vcombine.high %v1206, %v1206
    %1241 = vmatprep.subr.mxu0 %v60
    %1242 = vmatpush1.msra.mxu0 %v59
    %1243 = vmatprep.subr.mxu0 %v58
    %1244 = vmatpush1.msra.mxu0 %v57
    %1245 = vmatprep.subr.mxu0 %v56
    %1246 = vmatpush1.msra.mxu0 %v55
    %1247 = vmatprep.subr.mxu0 %v54
    %1248 = vmatpush1.msra.mxu0 %v53
    %1249 = vmatprep.subr.mxu0 %v52
    %1250 = vmatpush1.msra.mxu0 %v51
    %1251 = vmatprep.subr.mxu0 %v50
    %1252 = vmatpush1.msra.mxu0 %v49
    %1253 = vmatprep.subr.mxu0 %v48
    %1254 = vmatpush1.msra.mxu0 %v47
    %1255 = vmatprep.subr.mxu0 %v46
    %1256 = vmatpush1.msra.mxu0 %v45
    %1257 = vmatprep.subr.mxu0 %v44
    %1258 = vmatpush1.msra.mxu0 %v43
    %1259 = vmatprep.subr.mxu0 %v42
    %1260 = vmatpush1.msra.mxu0 %v41
    %1261 = vmatprep.subr.mxu0 %v40
    %1262 = vmatpush1.msra.mxu0 %v39
    %1263 = vmatprep.subr.mxu0 %v38
    %1264 = vmatpush1.msra.mxu0 %v37
    %1265 = vmatprep.subr.mxu0 %v36
    %1266 = vmatpush1.msra.mxu0 %v35
    %1267 = vmatprep.subr.mxu0 %v34
    %1268 = vmatpush1.msra.mxu0 %v33
    %1269 = vmatprep.subr.mxu0 %v32
    %1270 = vmatpush1.msra.mxu0 %v31
    %1271 = vmatprep.subr.mxu0 %v30
    %1272 = vmatpush1.msra.mxu0 %v29
    %1273 = vmatprep.subr.mxu0 %v92
    %1274 = vmatpush2.msra.mxu0 %v91
    %1275 = vmatprep.subr.mxu0 %v90
    %1276 = vmatpush2.msra.mxu0 %v89
    %1277 = vmatprep.subr.mxu0 %v88
    %1278 = vmatpush2.msra.mxu0 %v87
    %1279 = vmatprep.subr.mxu0 %v86
    %1280 = vmatpush2.msra.mxu0 %v85
    %1281 = vmatprep.subr.mxu0 %v84
    %1282 = vmatpush2.msra.mxu0 %v83
    %1283 = vmatprep.subr.mxu0 %v82
    %1284 = vmatpush2.msra.mxu0 %v81
    %1285 = vmatprep.subr.mxu0 %v80
    %1286 = vmatpush2.msra.mxu0 %v79
    %1287 = vmatprep.subr.mxu0 %v78
    %1288 = vmatpush2.msra.mxu0 %v77
    %1289 = vmatprep.subr.mxu0 %v76
    %1290 = vmatpush2.msra.mxu0 %v75
    %1291 = vmatprep.subr.mxu0 %v74
    %1292 = vmatpush2.msra.mxu0 %v73
    %1293 = vmatprep.subr.mxu0 %v72
    %1294 = vmatpush2.msra.mxu0 %v71
    %1295 = vmatprep.subr.mxu0 %v70
    %1296 = vmatpush2.msra.mxu0 %v69
    %1297 = vmatprep.subr.mxu0 %v68
    %1298 = vmatpush2.msra.mxu0 %v67
    %1299 = vmatprep.subr.mxu0 %v66
    %1300 = vmatpush2.msra.mxu0 %v65
    %1301 = vmatprep.subr.mxu0 %v64
    %1302 = vmatpush2.msra.mxu0 %v63
    %1303 = vmatprep.subr.mxu0 %v62
    %1304 = vmatpush2.msra.mxu0 %v61
    %1305 = vmatprep.mubr.f32.mxu0 %v1088
    %1306 = vmatmul.mubr.f32.gmra.mxu0 %v1080
    %v1307 = vpop.f32.mrf.mxu0
    %v1308 = vadd.f32 %v1058, %v1307
    %v1309 = vpop.f32.mrf.mxu0
    %v1310 = vadd.f32 %v1062, %v1309
    %1311 = vdwg.mxu0
    %1312 = vmatprep.subr.mxu0 %v124
    %1313 = vmatpush1.msra.mxu0 %v123
    %1314 = vmatprep.subr.mxu0 %v122
    %1315 = vmatpush1.msra.mxu0 %v121
    %1316 = vmatprep.subr.mxu0 %v120
    %1317 = vmatpush1.msra.mxu0 %v119
    %1318 = vmatprep.subr.mxu0 %v118
    %1319 = vmatpush1.msra.mxu0 %v117
    %1320 = vmatprep.subr.mxu0 %v116
    %1321 = vmatpush1.msra.mxu0 %v115
    %1322 = vmatprep.subr.mxu0 %v114
    %1323 = vmatpush1.msra.mxu0 %v113
    %1324 = vmatprep.subr.mxu0 %v112
    %1325 = vmatpush1.msra.mxu0 %v111
    %1326 = vmatprep.subr.mxu0 %v110
    %1327 = vmatpush1.msra.mxu0 %v109
    %1328 = vmatprep.subr.mxu0 %v108
    %1329 = vmatpush1.msra.mxu0 %v107
    %1330 = vmatprep.subr.mxu0 %v106
    %1331 = vmatpush1.msra.mxu0 %v105
    %1332 = vmatprep.subr.mxu0 %v104
    %1333 = vmatpush1.msra.mxu0 %v103
    %1334 = vmatprep.subr.mxu0 %v102
    %1335 = vmatpush1.msra.mxu0 %v101
    %1336 = vmatprep.subr.mxu0 %v100
    %1337 = vmatpush1.msra.mxu0 %v99
    %1338 = vmatprep.subr.mxu0 %v98
    %1339 = vmatpush1.msra.mxu0 %v97
    %1340 = vmatprep.subr.mxu0 %v96
    %1341 = vmatpush1.msra.mxu0 %v95
    %1342 = vmatprep.subr.mxu0 %v94
    %1343 = vmatpush1.msra.mxu0 %v93
    %1344 = vmatprep.subr.mxu0 %v156
    %1345 = vmatpush2.msra.mxu0 %v155
    %1346 = vmatprep.subr.mxu0 %v154
    %1347 = vmatpush2.msra.mxu0 %v153
    %1348 = vmatprep.subr.mxu0 %v152
    %1349 = vmatpush2.msra.mxu0 %v151
    %1350 = vmatprep.subr.mxu0 %v150
    %1351 = vmatpush2.msra.mxu0 %v149
    %1352 = vmatprep.subr.mxu0 %v148
    %1353 = vmatpush2.msra.mxu0 %v147
    %1354 = vmatprep.subr.mxu0 %v146
    %1355 = vmatpush2.msra.mxu0 %v145
    %1356 = vmatprep.subr.mxu0 %v144
    %1357 = vmatpush2.msra.mxu0 %v143
    %1358 = vmatprep.subr.mxu0 %v142
    %1359 = vmatpush2.msra.mxu0 %v141
    %1360 = vmatprep.subr.mxu0 %v140
    %1361 = vmatpush2.msra.mxu0 %v139
    %1362 = vmatprep.subr.mxu0 %v138
    %1363 = vmatpush2.msra.mxu0 %v137
    %1364 = vmatprep.subr.mxu0 %v136
    %1365 = vmatpush2.msra.mxu0 %v135
    %1366 = vmatprep.subr.mxu0 %v134
    %1367 = vmatpush2.msra.mxu0 %v133
    %1368 = vmatprep.subr.mxu0 %v132
    %1369 = vmatpush2.msra.mxu0 %v131
    %1370 = vmatprep.subr.mxu0 %v130
    %1371 = vmatpush2.msra.mxu0 %v129
    %1372 = vmatprep.subr.mxu0 %v128
    %1373 = vmatpush2.msra.mxu0 %v127
    %1374 = vmatprep.subr.mxu0 %v126
    %1375 = vmatpush2.msra.mxu0 %v125
    %1376 = vmatprep.mubr.f32.mxu0 %v1089
    %1377 = vmatmul.mubr.f32.gmra.mxu0 %v1087
    %v1378 = vpop.f32.mrf.mxu0
    %v1379 = vadd.f32 %v1308, %v1378
    %v1380 = vpop.f32.mrf.mxu0
    %v1381 = vadd.f32 %v1310, %v1380
    %1382 = vdwg.mxu0
    %1383 = vmatprep.subr.mxu0 %v188
    %1384 = vmatpush1.msra.mxu0 %v187
    %1385 = vmatprep.subr.mxu0 %v186
    %1386 = vmatpush1.msra.mxu0 %v185
    %1387 = vmatprep.subr.mxu0 %v184
    %1388 = vmatpush1.msra.mxu0 %v183
    %1389 = vmatprep.subr.mxu0 %v182
    %1390 = vmatpush1.msra.mxu0 %v181
    %1391 = vmatprep.subr.mxu0 %v180
    %1392 = vmatpush1.msra.mxu0 %v179
    %1393 = vmatprep.subr.mxu0 %v178
    %1394 = vmatpush1.msra.mxu0 %v177
    %1395 = vmatprep.subr.mxu0 %v176
    %1396 = vmatpush1.msra.mxu0 %v175
    %1397 = vmatprep.subr.mxu0 %v174
    %1398 = vmatpush1.msra.mxu0 %v173
    %1399 = vmatprep.subr.mxu0 %v172
    %1400 = vmatpush1.msra.mxu0 %v171
    %1401 = vmatprep.subr.mxu0 %v170
    %1402 = vmatpush1.msra.mxu0 %v169
    %1403 = vmatprep.subr.mxu0 %v168
    %1404 = vmatpush1.msra.mxu0 %v167
    %1405 = vmatprep.subr.mxu0 %v166
    %1406 = vmatpush1.msra.mxu0 %v165
    %1407 = vmatprep.subr.mxu0 %v164
    %1408 = vmatpush1.msra.mxu0 %v163
    %1409 = vmatprep.subr.mxu0 %v162
    %1410 = vmatpush1.msra.mxu0 %v161
    %1411 = vmatprep.subr.mxu0 %v160
    %1412 = vmatpush1.msra.mxu0 %v159
    %1413 = vmatprep.subr.mxu0 %v158
    %1414 = vmatpush1.msra.mxu0 %v157
    %1415 = vmatprep.subr.mxu0 %v220
    %1416 = vmatpush2.msra.mxu0 %v219
    %1417 = vmatprep.subr.mxu0 %v218
    %1418 = vmatpush2.msra.mxu0 %v217
    %1419 = vmatprep.subr.mxu0 %v216
    %1420 = vmatpush2.msra.mxu0 %v215
    %1421 = vmatprep.subr.mxu0 %v214
    %1422 = vmatpush2.msra.mxu0 %v213
    %1423 = vmatprep.subr.mxu0 %v212
    %1424 = vmatpush2.msra.mxu0 %v211
    %1425 = vmatprep.subr.mxu0 %v210
    %1426 = vmatpush2.msra.mxu0 %v209
    %1427 = vmatprep.subr.mxu0 %v208
    %1428 = vmatpush2.msra.mxu0 %v207
    %1429 = vmatprep.subr.mxu0 %v206
    %1430 = vmatpush2.msra.mxu0 %v205
    %1431 = vmatprep.subr.mxu0 %v204
    %1432 = vmatpush2.msra.mxu0 %v203
    %1433 = vmatprep.subr.mxu0 %v202
    %1434 = vmatpush2.msra.mxu0 %v201
    %1435 = vmatprep.subr.mxu0 %v200
    %1436 = vmatpush2.msra.mxu0 %v199
    %1437 = vmatprep.subr.mxu0 %v198
    %1438 = vmatpush2.msra.mxu0 %v197
    %1439 = vmatprep.subr.mxu0 %v196
    %1440 = vmatpush2.msra.mxu0 %v195
    %1441 = vmatprep.subr.mxu0 %v194
    %1442 = vmatpush2.msra.mxu0 %v193
    %1443 = vmatprep.subr.mxu0 %v192
    %1444 = vmatpush2.msra.mxu0 %v191
    %1445 = vmatprep.subr.mxu0 %v190
    %1446 = vmatpush2.msra.mxu0 %v189
    %1447 = vmatprep.mubr.f32.mxu0 %v1105
    %1448 = vmatmul.mubr.f32.gmra.mxu0 %v1097
    %v1449 = vpop.f32.mrf.mxu0
    %v1450 = vadd.f32 %v1379, %v1449
    %v1451 = vpop.f32.mrf.mxu0
    %v1452 = vadd.f32 %v1381, %v1451
    %1453 = vdwg.mxu0
    %1454 = vmatprep.subr.mxu0 %v252
    %1455 = vmatpush1.msra.mxu0 %v251
    %1456 = vmatprep.subr.mxu0 %v250
    %1457 = vmatpush1.msra.mxu0 %v249
    %1458 = vmatprep.subr.mxu0 %v248
    %1459 = vmatpush1.msra.mxu0 %v247
    %1460 = vmatprep.subr.mxu0 %v246
    %1461 = vmatpush1.msra.mxu0 %v245
    %1462 = vmatprep.subr.mxu0 %v244
    %1463 = vmatpush1.msra.mxu0 %v243
    %1464 = vmatprep.subr.mxu0 %v242
    %1465 = vmatpush1.msra.mxu0 %v241
    %1466 = vmatprep.subr.mxu0 %v240
    %1467 = vmatpush1.msra.mxu0 %v239
    %1468 = vmatprep.subr.mxu0 %v238
    %1469 = vmatpush1.msra.mxu0 %v237
    %1470 = vmatprep.subr.mxu0 %v236
    %1471 = vmatpush1.msra.mxu0 %v235
    %1472 = vmatprep.subr.mxu0 %v234
    %1473 = vmatpush1.msra.mxu0 %v233
    %1474 = vmatprep.subr.mxu0 %v232
    %1475 = vmatpush1.msra.mxu0 %v231
    %1476 = vmatprep.subr.mxu0 %v230
    %1477 = vmatpush1.msra.mxu0 %v229
    %1478 = vmatprep.subr.mxu0 %v228
    %1479 = vmatpush1.msra.mxu0 %v227
    %1480 = vmatprep.subr.mxu0 %v226
    %1481 = vmatpush1.msra.mxu0 %v225
    %1482 = vmatprep.subr.mxu0 %v224
    %1483 = vmatpush1.msra.mxu0 %v223
    %1484 = vmatprep.subr.mxu0 %v222
    %1485 = vmatpush1.msra.mxu0 %v221
    %1486 = vmatprep.subr.mxu0 %v284
    %1487 = vmatpush2.msra.mxu0 %v283
    %1488 = vmatprep.subr.mxu0 %v282
    %1489 = vmatpush2.msra.mxu0 %v281
    %1490 = vmatprep.subr.mxu0 %v280
    %1491 = vmatpush2.msra.mxu0 %v279
    %1492 = vmatprep.subr.mxu0 %v278
    %1493 = vmatpush2.msra.mxu0 %v277
    %1494 = vmatprep.subr.mxu0 %v276
    %1495 = vmatpush2.msra.mxu0 %v275
    %1496 = vmatprep.subr.mxu0 %v274
    %1497 = vmatpush2.msra.mxu0 %v273
    %1498 = vmatprep.subr.mxu0 %v272
    %1499 = vmatpush2.msra.mxu0 %v271
    %1500 = vmatprep.subr.mxu0 %v270
    %1501 = vmatpush2.msra.mxu0 %v269
    %1502 = vmatprep.subr.mxu0 %v268
    %1503 = vmatpush2.msra.mxu0 %v267
    %1504 = vmatprep.subr.mxu0 %v266
    %1505 = vmatpush2.msra.mxu0 %v265
    %1506 = vmatprep.subr.mxu0 %v264
    %1507 = vmatpush2.msra.mxu0 %v263
    %1508 = vmatprep.subr.mxu0 %v262
    %1509 = vmatpush2.msra.mxu0 %v261
    %1510 = vmatprep.subr.mxu0 %v260
    %1511 = vmatpush2.msra.mxu0 %v259
    %1512 = vmatprep.subr.mxu0 %v258
    %1513 = vmatpush2.msra.mxu0 %v257
    %1514 = vmatprep.subr.mxu0 %v256
    %1515 = vmatpush2.msra.mxu0 %v255
    %1516 = vmatprep.subr.mxu0 %v254
    %1517 = vmatpush2.msra.mxu0 %v253
    %1518 = vmatprep.mubr.f32.mxu0 %v1106
    %1519 = vmatmul.mubr.f32.gmra.mxu0 %v1104
    %v1520 = vpop.f32.mrf.mxu0
    %v1521 = vadd.f32 %v1450, %v1520
    %v1522 = vpop.f32.mrf.mxu0
    %v1523 = vadd.f32 %v1452, %v1522
    %1524 = vdwg.mxu0
    %1525 = vmatprep.subr.mxu0 %v316
    %1526 = vmatpush1.msra.mxu0 %v315
    %1527 = vmatprep.subr.mxu0 %v314
    %1528 = vmatpush1.msra.mxu0 %v313
    %1529 = vmatprep.subr.mxu0 %v312
    %1530 = vmatpush1.msra.mxu0 %v311
    %1531 = vmatprep.subr.mxu0 %v310
    %1532 = vmatpush1.msra.mxu0 %v309
    %1533 = vmatprep.subr.mxu0 %v308
    %1534 = vmatpush1.msra.mxu0 %v307
    %1535 = vmatprep.subr.mxu0 %v306
    %1536 = vmatpush1.msra.mxu0 %v305
    %1537 = vmatprep.subr.mxu0 %v304
    %1538 = vmatpush1.msra.mxu0 %v303
    %1539 = vmatprep.subr.mxu0 %v302
    %1540 = vmatpush1.msra.mxu0 %v301
    %1541 = vmatprep.subr.mxu0 %v300
    %1542 = vmatpush1.msra.mxu0 %v299
    %1543 = vmatprep.subr.mxu0 %v298
    %1544 = vmatpush1.msra.mxu0 %v297
    %1545 = vmatprep.subr.mxu0 %v296
    %1546 = vmatpush1.msra.mxu0 %v295
    %1547 = vmatprep.subr.mxu0 %v294
    %1548 = vmatpush1.msra.mxu0 %v293
    %1549 = vmatprep.subr.mxu0 %v292
    %1550 = vmatpush1.msra.mxu0 %v291
    %1551 = vmatprep.subr.mxu0 %v290
    %1552 = vmatpush1.msra.mxu0 %v289
    %1553 = vmatprep.subr.mxu0 %v288
    %1554 = vmatpush1.msra.mxu0 %v287
    %1555 = vmatprep.subr.mxu0 %v286
    %1556 = vmatpush1.msra.mxu0 %v285
    %1557 = vmatprep.subr.mxu0 %v348
    %1558 = vmatpush2.msra.mxu0 %v347
    %1559 = vmatprep.subr.mxu0 %v346
    %1560 = vmatpush2.msra.mxu0 %v345
    %1561 = vmatprep.subr.mxu0 %v344
    %1562 = vmatpush2.msra.mxu0 %v343
    %1563 = vmatprep.subr.mxu0 %v342
    %1564 = vmatpush2.msra.mxu0 %v341
    %1565 = vmatprep.subr.mxu0 %v340
    %1566 = vmatpush2.msra.mxu0 %v339
    %1567 = vmatprep.subr.mxu0 %v338
    %1568 = vmatpush2.msra.mxu0 %v337
    %1569 = vmatprep.subr.mxu0 %v336
    %1570 = vmatpush2.msra.mxu0 %v335
    %1571 = vmatprep.subr.mxu0 %v334
    %1572 = vmatpush2.msra.mxu0 %v333
    %1573 = vmatprep.subr.mxu0 %v332
    %1574 = vmatpush2.msra.mxu0 %v331
    %1575 = vmatprep.subr.mxu0 %v330
    %1576 = vmatpush2.msra.mxu0 %v329
    %1577 = vmatprep.subr.mxu0 %v328
    %1578 = vmatpush2.msra.mxu0 %v327
    %1579 = vmatprep.subr.mxu0 %v326
    %1580 = vmatpush2.msra.mxu0 %v325
    %1581 = vmatprep.subr.mxu0 %v324
    %1582 = vmatpush2.msra.mxu0 %v323
    %1583 = vmatprep.subr.mxu0 %v322
    %1584 = vmatpush2.msra.mxu0 %v321
    %1585 = vmatprep.subr.mxu0 %v320
    %1586 = vmatpush2.msra.mxu0 %v319
    %1587 = vmatprep.subr.mxu0 %v318
    %1588 = vmatpush2.msra.mxu0 %v317
    %1589 = vmatprep.mubr.f32.mxu0 %v1122
    %1590 = vmatmul.mubr.f32.gmra.mxu0 %v1114
    %v1591 = vpop.f32.mrf.mxu0
    %v1592 = vadd.f32 %v1521, %v1591
    %v1593 = vpop.f32.mrf.mxu0
    %v1594 = vadd.f32 %v1523, %v1593
    %1595 = vdwg.mxu0
    %1596 = vmatprep.subr.mxu0 %v380
    %1597 = vmatpush1.msra.mxu0 %v379
    %1598 = vmatprep.subr.mxu0 %v378
    %1599 = vmatpush1.msra.mxu0 %v377
    %1600 = vmatprep.subr.mxu0 %v376
    %1601 = vmatpush1.msra.mxu0 %v375
    %1602 = vmatprep.subr.mxu0 %v374
    %1603 = vmatpush1.msra.mxu0 %v373
    %1604 = vmatprep.subr.mxu0 %v372
    %1605 = vmatpush1.msra.mxu0 %v371
    %1606 = vmatprep.subr.mxu0 %v370
    %1607 = vmatpush1.msra.mxu0 %v369
    %1608 = vmatprep.subr.mxu0 %v368
    %1609 = vmatpush1.msra.mxu0 %v367
    %1610 = vmatprep.subr.mxu0 %v366
    %1611 = vmatpush1.msra.mxu0 %v365
    %1612 = vmatprep.subr.mxu0 %v364
    %1613 = vmatpush1.msra.mxu0 %v363
    %1614 = vmatprep.subr.mxu0 %v362
    %1615 = vmatpush1.msra.mxu0 %v361
    %1616 = vmatprep.subr.mxu0 %v360
    %1617 = vmatpush1.msra.mxu0 %v359
    %1618 = vmatprep.subr.mxu0 %v358
    %1619 = vmatpush1.msra.mxu0 %v357
    %1620 = vmatprep.subr.mxu0 %v356
    %1621 = vmatpush1.msra.mxu0 %v355
    %1622 = vmatprep.subr.mxu0 %v354
    %1623 = vmatpush1.msra.mxu0 %v353
    %1624 = vmatprep.subr.mxu0 %v352
    %1625 = vmatpush1.msra.mxu0 %v351
    %1626 = vmatprep.subr.mxu0 %v350
    %1627 = vmatpush1.msra.mxu0 %v349
    %1628 = vmatprep.subr.mxu0 %v412
    %1629 = vmatpush2.msra.mxu0 %v411
    %1630 = vmatprep.subr.mxu0 %v410
    %1631 = vmatpush2.msra.mxu0 %v409
    %1632 = vmatprep.subr.mxu0 %v408
    %1633 = vmatpush2.msra.mxu0 %v407
    %1634 = vmatprep.subr.mxu0 %v406
    %1635 = vmatpush2.msra.mxu0 %v405
    %1636 = vmatprep.subr.mxu0 %v404
    %1637 = vmatpush2.msra.mxu0 %v403
    %1638 = vmatprep.subr.mxu0 %v402
    %1639 = vmatpush2.msra.mxu0 %v401
    %1640 = vmatprep.subr.mxu0 %v400
    %1641 = vmatpush2.msra.mxu0 %v399
    %1642 = vmatprep.subr.mxu0 %v398
    %1643 = vmatpush2.msra.mxu0 %v397
    %1644 = vmatprep.subr.mxu0 %v396
    %1645 = vmatpush2.msra.mxu0 %v395
    %1646 = vmatprep.subr.mxu0 %v394
    %1647 = vmatpush2.msra.mxu0 %v393
    %1648 = vmatprep.subr.mxu0 %v392
    %1649 = vmatpush2.msra.mxu0 %v391
    %1650 = vmatprep.subr.mxu0 %v390
    %1651 = vmatpush2.msra.mxu0 %v389
    %1652 = vmatprep.subr.mxu0 %v388
    %1653 = vmatpush2.msra.mxu0 %v387
    %1654 = vmatprep.subr.mxu0 %v386
    %1655 = vmatpush2.msra.mxu0 %v385
    %1656 = vmatprep.subr.mxu0 %v384
    %1657 = vmatpush2.msra.mxu0 %v383
    %1658 = vmatprep.subr.mxu0 %v382
    %1659 = vmatpush2.msra.mxu0 %v381
    %1660 = vmatprep.mubr.f32.mxu0 %v1123
    %1661 = vmatmul.mubr.f32.gmra.mxu0 %v1121
    %v1662 = vpop.f32.mrf.mxu0
    %v1663 = vadd.f32 %v1592, %v1662
    %v1664 = vpop.f32.mrf.mxu0
    %v1665 = vadd.f32 %v1594, %v1664
    %1666 = vdwg.mxu0
    %1667 = vmatprep.subr.mxu0 %v444
    %1668 = vmatpush1.msra.mxu0 %v443
    %1669 = vmatprep.subr.mxu0 %v442
    %1670 = vmatpush1.msra.mxu0 %v441
    %1671 = vmatprep.subr.mxu0 %v440
    %1672 = vmatpush1.msra.mxu0 %v439
    %1673 = vmatprep.subr.mxu0 %v438
    %1674 = vmatpush1.msra.mxu0 %v437
    %1675 = vmatprep.subr.mxu0 %v436
    %1676 = vmatpush1.msra.mxu0 %v435
    %1677 = vmatprep.subr.mxu0 %v434
    %1678 = vmatpush1.msra.mxu0 %v433
    %1679 = vmatprep.subr.mxu0 %v432
    %1680 = vmatpush1.msra.mxu0 %v431
    %1681 = vmatprep.subr.mxu0 %v430
    %1682 = vmatpush1.msra.mxu0 %v429
    %1683 = vmatprep.subr.mxu0 %v428
    %1684 = vmatpush1.msra.mxu0 %v427
    %1685 = vmatprep.subr.mxu0 %v426
    %1686 = vmatpush1.msra.mxu0 %v425
    %1687 = vmatprep.subr.mxu0 %v424
    %1688 = vmatpush1.msra.mxu0 %v423
    %1689 = vmatprep.subr.mxu0 %v422
    %1690 = vmatpush1.msra.mxu0 %v421
    %1691 = vmatprep.subr.mxu0 %v420
    %1692 = vmatpush1.msra.mxu0 %v419
    %1693 = vmatprep.subr.mxu0 %v418
    %1694 = vmatpush1.msra.mxu0 %v417
    %1695 = vmatprep.subr.mxu0 %v416
    %1696 = vmatpush1.msra.mxu0 %v415
    %1697 = vmatprep.subr.mxu0 %v414
    %1698 = vmatpush1.msra.mxu0 %v413
    %1699 = vmatprep.subr.mxu0 %v476
    %1700 = vmatpush2.msra.mxu0 %v475
    %1701 = vmatprep.subr.mxu0 %v474
    %1702 = vmatpush2.msra.mxu0 %v473
    %1703 = vmatprep.subr.mxu0 %v472
    %1704 = vmatpush2.msra.mxu0 %v471
    %1705 = vmatprep.subr.mxu0 %v470
    %1706 = vmatpush2.msra.mxu0 %v469
    %1707 = vmatprep.subr.mxu0 %v468
    %1708 = vmatpush2.msra.mxu0 %v467
    %1709 = vmatprep.subr.mxu0 %v466
    %1710 = vmatpush2.msra.mxu0 %v465
    %1711 = vmatprep.subr.mxu0 %v464
    %1712 = vmatpush2.msra.mxu0 %v463
    %1713 = vmatprep.subr.mxu0 %v462
    %1714 = vmatpush2.msra.mxu0 %v461
    %1715 = vmatprep.subr.mxu0 %v460
    %1716 = vmatpush2.msra.mxu0 %v459
    %1717 = vmatprep.subr.mxu0 %v458
    %1718 = vmatpush2.msra.mxu0 %v457
    %1719 = vmatprep.subr.mxu0 %v456
    %1720 = vmatpush2.msra.mxu0 %v455
    %1721 = vmatprep.subr.mxu0 %v454
    %1722 = vmatpush2.msra.mxu0 %v453
    %1723 = vmatprep.subr.mxu0 %v452
    %1724 = vmatpush2.msra.mxu0 %v451
    %1725 = vmatprep.subr.mxu0 %v450
    %1726 = vmatpush2.msra.mxu0 %v449
    %1727 = vmatprep.subr.mxu0 %v448
    %1728 = vmatpush2.msra.mxu0 %v447
    %1729 = vmatprep.subr.mxu0 %v446
    %1730 = vmatpush2.msra.mxu0 %v445
    %1731 = vmatprep.mubr.f32.mxu0 %v1139
    %1732 = vmatmul.mubr.f32.gmra.mxu0 %v1131
    %v1733 = vpop.f32.mrf.mxu0
    %v1734 = vadd.f32 %v1663, %v1733
    %v1735 = vpop.f32.mrf.mxu0
    %v1736 = vadd.f32 %v1665, %v1735
    %1737 = vdwg.mxu0
    %1738 = vmatprep.subr.mxu0 %v508
    %1739 = vmatpush1.msra.mxu0 %v507
    %1740 = vmatprep.subr.mxu0 %v506
    %1741 = vmatpush1.msra.mxu0 %v505
    %1742 = vmatprep.subr.mxu0 %v504
    %1743 = vmatpush1.msra.mxu0 %v503
    %1744 = vmatprep.subr.mxu0 %v502
    %1745 = vmatpush1.msra.mxu0 %v501
    %1746 = vmatprep.subr.mxu0 %v500
    %1747 = vmatpush1.msra.mxu0 %v499
    %1748 = vmatprep.subr.mxu0 %v498
    %1749 = vmatpush1.msra.mxu0 %v497
    %1750 = vmatprep.subr.mxu0 %v496
    %1751 = vmatpush1.msra.mxu0 %v495
    %1752 = vmatprep.subr.mxu0 %v494
    %1753 = vmatpush1.msra.mxu0 %v493
    %1754 = vmatprep.subr.mxu0 %v492
    %1755 = vmatpush1.msra.mxu0 %v491
    %1756 = vmatprep.subr.mxu0 %v490
    %1757 = vmatpush1.msra.mxu0 %v489
    %1758 = vmatprep.subr.mxu0 %v488
    %1759 = vmatpush1.msra.mxu0 %v487
    %1760 = vmatprep.subr.mxu0 %v486
    %1761 = vmatpush1.msra.mxu0 %v485
    %1762 = vmatprep.subr.mxu0 %v484
    %1763 = vmatpush1.msra.mxu0 %v483
    %1764 = vmatprep.subr.mxu0 %v482
    %1765 = vmatpush1.msra.mxu0 %v481
    %1766 = vmatprep.subr.mxu0 %v480
    %1767 = vmatpush1.msra.mxu0 %v479
    %1768 = vmatprep.subr.mxu0 %v478
    %1769 = vmatpush1.msra.mxu0 %v477
    %1770 = vmatprep.subr.mxu0 %v540
    %1771 = vmatpush2.msra.mxu0 %v539
    %1772 = vmatprep.subr.mxu0 %v538
    %1773 = vmatpush2.msra.mxu0 %v537
    %1774 = vmatprep.subr.mxu0 %v536
    %1775 = vmatpush2.msra.mxu0 %v535
    %1776 = vmatprep.subr.mxu0 %v534
    %1777 = vmatpush2.msra.mxu0 %v533
    %1778 = vmatprep.subr.mxu0 %v532
    %1779 = vmatpush2.msra.mxu0 %v531
    %1780 = vmatprep.subr.mxu0 %v530
    %1781 = vmatpush2.msra.mxu0 %v529
    %1782 = vmatprep.subr.mxu0 %v528
    %1783 = vmatpush2.msra.mxu0 %v527
    %1784 = vmatprep.subr.mxu0 %v526
    %1785 = vmatpush2.msra.mxu0 %v525
    %1786 = vmatprep.subr.mxu0 %v524
    %1787 = vmatpush2.msra.mxu0 %v523
    %1788 = vmatprep.subr.mxu0 %v522
    %1789 = vmatpush2.msra.mxu0 %v521
    %1790 = vmatprep.subr.mxu0 %v520
    %1791 = vmatpush2.msra.mxu0 %v519
    %1792 = vmatprep.subr.mxu0 %v518
    %1793 = vmatpush2.msra.mxu0 %v517
    %1794 = vmatprep.subr.mxu0 %v516
    %1795 = vmatpush2.msra.mxu0 %v515
    %1796 = vmatprep.subr.mxu0 %v514
    %1797 = vmatpush2.msra.mxu0 %v513
    %1798 = vmatprep.subr.mxu0 %v512
    %1799 = vmatpush2.msra.mxu0 %v511
    %1800 = vmatprep.subr.mxu0 %v510
    %1801 = vmatpush2.msra.mxu0 %v509
    %1802 = vmatprep.mubr.f32.mxu0 %v1140
    %1803 = vmatmul.mubr.f32.gmra.mxu0 %v1138
    %v1804 = vpop.f32.mrf.mxu0
    %v1805 = vadd.f32 %v1734, %v1804
    %v1806 = vpop.f32.mrf.mxu0
    %v1807 = vadd.f32 %v1736, %v1806
    %1808 = vdwg.mxu0
    %1809 = vmatprep.subr.mxu0 %v572
    %1810 = vmatpush1.msra.mxu0 %v571
    %1811 = vmatprep.subr.mxu0 %v570
    %1812 = vmatpush1.msra.mxu0 %v569
    %1813 = vmatprep.subr.mxu0 %v568
    %1814 = vmatpush1.msra.mxu0 %v567
    %1815 = vmatprep.subr.mxu0 %v566
    %1816 = vmatpush1.msra.mxu0 %v565
    %1817 = vmatprep.subr.mxu0 %v564
    %1818 = vmatpush1.msra.mxu0 %v563
    %1819 = vmatprep.subr.mxu0 %v562
    %1820 = vmatpush1.msra.mxu0 %v561
    %1821 = vmatprep.subr.mxu0 %v560
    %1822 = vmatpush1.msra.mxu0 %v559
    %1823 = vmatprep.subr.mxu0 %v558
    %1824 = vmatpush1.msra.mxu0 %v557
    %1825 = vmatprep.subr.mxu0 %v556
    %1826 = vmatpush1.msra.mxu0 %v555
    %1827 = vmatprep.subr.mxu0 %v554
    %1828 = vmatpush1.msra.mxu0 %v553
    %1829 = vmatprep.subr.mxu0 %v552
    %1830 = vmatpush1.msra.mxu0 %v551
    %1831 = vmatprep.subr.mxu0 %v550
    %1832 = vmatpush1.msra.mxu0 %v549
    %1833 = vmatprep.subr.mxu0 %v548
    %1834 = vmatpush1.msra.mxu0 %v547
    %1835 = vmatprep.subr.mxu0 %v546
    %1836 = vmatpush1.msra.mxu0 %v545
    %1837 = vmatprep.subr.mxu0 %v544
    %1838 = vmatpush1.msra.mxu0 %v543
    %1839 = vmatprep.subr.mxu0 %v542
    %1840 = vmatpush1.msra.mxu0 %v541
    %1841 = vmatprep.subr.mxu0 %v604
    %1842 = vmatpush2.msra.mxu0 %v603
    %1843 = vmatprep.subr.mxu0 %v602
    %1844 = vmatpush2.msra.mxu0 %v601
    %1845 = vmatprep.subr.mxu0 %v600
    %1846 = vmatpush2.msra.mxu0 %v599
    %1847 = vmatprep.subr.mxu0 %v598
    %1848 = vmatpush2.msra.mxu0 %v597
    %1849 = vmatprep.subr.mxu0 %v596
    %1850 = vmatpush2.msra.mxu0 %v595
    %1851 = vmatprep.subr.mxu0 %v594
    %1852 = vmatpush2.msra.mxu0 %v593
    %1853 = vmatprep.subr.mxu0 %v592
    %1854 = vmatpush2.msra.mxu0 %v591
    %1855 = vmatprep.subr.mxu0 %v590
    %1856 = vmatpush2.msra.mxu0 %v589
    %1857 = vmatprep.subr.mxu0 %v588
    %1858 = vmatpush2.msra.mxu0 %v587
    %1859 = vmatprep.subr.mxu0 %v586
    %1860 = vmatpush2.msra.mxu0 %v585
    %1861 = vmatprep.subr.mxu0 %v584
    %1862 = vmatpush2.msra.mxu0 %v583
    %1863 = vmatprep.subr.mxu0 %v582
    %1864 = vmatpush2.msra.mxu0 %v581
    %1865 = vmatprep.subr.mxu0 %v580
    %1866 = vmatpush2.msra.mxu0 %v579
    %1867 = vmatprep.subr.mxu0 %v578
    %1868 = vmatpush2.msra.mxu0 %v577
    %1869 = vmatprep.subr.mxu0 %v576
    %1870 = vmatpush2.msra.mxu0 %v575
    %1871 = vmatprep.subr.mxu0 %v574
    %1872 = vmatpush2.msra.mxu0 %v573
    %1873 = vmatprep.mubr.f32.mxu0 %v1156
    %1874 = vmatmul.mubr.f32.gmra.mxu0 %v1148
    %v1875 = vpop.f32.mrf.mxu0
    %v1876 = vadd.f32 %v1805, %v1875
    %v1877 = vpop.f32.mrf.mxu0
    %v1878 = vadd.f32 %v1807, %v1877
    %1879 = vdwg.mxu0
    %1880 = vmatprep.subr.mxu0 %v636
    %1881 = vmatpush1.msra.mxu0 %v635
    %1882 = vmatprep.subr.mxu0 %v634
    %1883 = vmatpush1.msra.mxu0 %v633
    %1884 = vmatprep.subr.mxu0 %v632
    %1885 = vmatpush1.msra.mxu0 %v631
    %1886 = vmatprep.subr.mxu0 %v630
    %1887 = vmatpush1.msra.mxu0 %v629
    %1888 = vmatprep.subr.mxu0 %v628
    %1889 = vmatpush1.msra.mxu0 %v627
    %1890 = vmatprep.subr.mxu0 %v626
    %1891 = vmatpush1.msra.mxu0 %v625
    %1892 = vmatprep.subr.mxu0 %v624
    %1893 = vmatpush1.msra.mxu0 %v623
    %1894 = vmatprep.subr.mxu0 %v622
    %1895 = vmatpush1.msra.mxu0 %v621
    %1896 = vmatprep.subr.mxu0 %v620
    %1897 = vmatpush1.msra.mxu0 %v619
    %1898 = vmatprep.subr.mxu0 %v618
    %1899 = vmatpush1.msra.mxu0 %v617
    %1900 = vmatprep.subr.mxu0 %v616
    %1901 = vmatpush1.msra.mxu0 %v615
    %1902 = vmatprep.subr.mxu0 %v614
    %1903 = vmatpush1.msra.mxu0 %v613
    %1904 = vmatprep.subr.mxu0 %v612
    %1905 = vmatpush1.msra.mxu0 %v611
    %1906 = vmatprep.subr.mxu0 %v610
    %1907 = vmatpush1.msra.mxu0 %v609
    %1908 = vmatprep.subr.mxu0 %v608
    %1909 = vmatpush1.msra.mxu0 %v607
    %1910 = vmatprep.subr.mxu0 %v606
    %1911 = vmatpush1.msra.mxu0 %v605
    %1912 = vmatprep.subr.mxu0 %v668
    %1913 = vmatpush2.msra.mxu0 %v667
    %1914 = vmatprep.subr.mxu0 %v666
    %1915 = vmatpush2.msra.mxu0 %v665
    %1916 = vmatprep.subr.mxu0 %v664
    %1917 = vmatpush2.msra.mxu0 %v663
    %1918 = vmatprep.subr.mxu0 %v662
    %1919 = vmatpush2.msra.mxu0 %v661
    %1920 = vmatprep.subr.mxu0 %v660
    %1921 = vmatpush2.msra.mxu0 %v659
    %1922 = vmatprep.subr.mxu0 %v658
    %1923 = vmatpush2.msra.mxu0 %v657
    %1924 = vmatprep.subr.mxu0 %v656
    %1925 = vmatpush2.msra.mxu0 %v655
    %1926 = vmatprep.subr.mxu0 %v654
    %1927 = vmatpush2.msra.mxu0 %v653
    %1928 = vmatprep.subr.mxu0 %v652
    %1929 = vmatpush2.msra.mxu0 %v651
    %1930 = vmatprep.subr.mxu0 %v650
    %1931 = vmatpush2.msra.mxu0 %v649
    %1932 = vmatprep.subr.mxu0 %v648
    %1933 = vmatpush2.msra.mxu0 %v647
    %1934 = vmatprep.subr.mxu0 %v646
    %1935 = vmatpush2.msra.mxu0 %v645
    %1936 = vmatprep.subr.mxu0 %v644
    %1937 = vmatpush2.msra.mxu0 %v643
    %1938 = vmatprep.subr.mxu0 %v642
    %1939 = vmatpush2.msra.mxu0 %v641
    %1940 = vmatprep.subr.mxu0 %v640
    %1941 = vmatpush2.msra.mxu0 %v639
    %1942 = vmatprep.subr.mxu0 %v638
    %1943 = vmatpush2.msra.mxu0 %v637
    %1944 = vmatprep.mubr.f32.mxu0 %v1157
    %1945 = vmatmul.mubr.f32.gmra.mxu0 %v1155
    %v1946 = vpop.f32.mrf.mxu0
    %v1947 = vadd.f32 %v1876, %v1946
    %v1948 = vpop.f32.mrf.mxu0
    %v1949 = vadd.f32 %v1878, %v1948
    %1950 = vdwg.mxu0
    %1951 = vmatprep.subr.mxu0 %v700
    %1952 = vmatpush1.msra.mxu0 %v699
    %1953 = vmatprep.subr.mxu0 %v698
    %1954 = vmatpush1.msra.mxu0 %v697
    %1955 = vmatprep.subr.mxu0 %v696
    %1956 = vmatpush1.msra.mxu0 %v695
    %1957 = vmatprep.subr.mxu0 %v694
    %1958 = vmatpush1.msra.mxu0 %v693
    %1959 = vmatprep.subr.mxu0 %v692
    %1960 = vmatpush1.msra.mxu0 %v691
    %1961 = vmatprep.subr.mxu0 %v690
    %1962 = vmatpush1.msra.mxu0 %v689
    %1963 = vmatprep.subr.mxu0 %v688
    %1964 = vmatpush1.msra.mxu0 %v687
    %1965 = vmatprep.subr.mxu0 %v686
    %1966 = vmatpush1.msra.mxu0 %v685
    %1967 = vmatprep.subr.mxu0 %v684
    %1968 = vmatpush1.msra.mxu0 %v683
    %1969 = vmatprep.subr.mxu0 %v682
    %1970 = vmatpush1.msra.mxu0 %v681
    %1971 = vmatprep.subr.mxu0 %v680
    %1972 = vmatpush1.msra.mxu0 %v679
    %1973 = vmatprep.subr.mxu0 %v678
    %1974 = vmatpush1.msra.mxu0 %v677
    %1975 = vmatprep.subr.mxu0 %v676
    %1976 = vmatpush1.msra.mxu0 %v675
    %1977 = vmatprep.subr.mxu0 %v674
    %1978 = vmatpush1.msra.mxu0 %v673
    %1979 = vmatprep.subr.mxu0 %v672
    %1980 = vmatpush1.msra.mxu0 %v671
    %1981 = vmatprep.subr.mxu0 %v670
    %1982 = vmatpush1.msra.mxu0 %v669
    %1983 = vmatprep.subr.mxu0 %v732
    %1984 = vmatpush2.msra.mxu0 %v731
    %1985 = vmatprep.subr.mxu0 %v730
    %1986 = vmatpush2.msra.mxu0 %v729
    %1987 = vmatprep.subr.mxu0 %v728
    %1988 = vmatpush2.msra.mxu0 %v727
    %1989 = vmatprep.subr.mxu0 %v726
    %1990 = vmatpush2.msra.mxu0 %v725
    %1991 = vmatprep.subr.mxu0 %v724
    %1992 = vmatpush2.msra.mxu0 %v723
    %1993 = vmatprep.subr.mxu0 %v722
    %1994 = vmatpush2.msra.mxu0 %v721
    %1995 = vmatprep.subr.mxu0 %v720
    %1996 = vmatpush2.msra.mxu0 %v719
    %1997 = vmatprep.subr.mxu0 %v718
    %1998 = vmatpush2.msra.mxu0 %v717
    %1999 = vmatprep.subr.mxu0 %v716
    %2000 = vmatpush2.msra.mxu0 %v715
    %2001 = vmatprep.subr.mxu0 %v714
    %2002 = vmatpush2.msra.mxu0 %v713
    %2003 = vmatprep.subr.mxu0 %v712
    %2004 = vmatpush2.msra.mxu0 %v711
    %2005 = vmatprep.subr.mxu0 %v710
    %2006 = vmatpush2.msra.mxu0 %v709
    %2007 = vmatprep.subr.mxu0 %v708
    %2008 = vmatpush2.msra.mxu0 %v707
    %2009 = vmatprep.subr.mxu0 %v706
    %2010 = vmatpush2.msra.mxu0 %v705
    %2011 = vmatprep.subr.mxu0 %v704
    %2012 = vmatpush2.msra.mxu0 %v703
    %2013 = vmatprep.subr.mxu0 %v702
    %2014 = vmatpush2.msra.mxu0 %v701
    %2015 = vmatprep.mubr.f32.mxu0 %v1173
    %2016 = vmatmul.mubr.f32.gmra.mxu0 %v1165
    %v2017 = vpop.f32.mrf.mxu0
    %v2018 = vadd.f32 %v1947, %v2017
    %v2019 = vpop.f32.mrf.mxu0
    %v2020 = vadd.f32 %v1949, %v2019
    %2021 = vdwg.mxu0
    %2022 = vmatprep.subr.mxu0 %v764
    %2023 = vmatpush1.msra.mxu0 %v763
    %2024 = vmatprep.subr.mxu0 %v762
    %2025 = vmatpush1.msra.mxu0 %v761
    %2026 = vmatprep.subr.mxu0 %v760
    %2027 = vmatpush1.msra.mxu0 %v759
    %2028 = vmatprep.subr.mxu0 %v758
    %2029 = vmatpush1.msra.mxu0 %v757
    %2030 = vmatprep.subr.mxu0 %v756
    %2031 = vmatpush1.msra.mxu0 %v755
    %2032 = vmatprep.subr.mxu0 %v754
    %2033 = vmatpush1.msra.mxu0 %v753
    %2034 = vmatprep.subr.mxu0 %v752
    %2035 = vmatpush1.msra.mxu0 %v751
    %2036 = vmatprep.subr.mxu0 %v750
    %2037 = vmatpush1.msra.mxu0 %v749
    %2038 = vmatprep.subr.mxu0 %v748
    %2039 = vmatpush1.msra.mxu0 %v747
    %2040 = vmatprep.subr.mxu0 %v746
    %2041 = vmatpush1.msra.mxu0 %v745
    %2042 = vmatprep.subr.mxu0 %v744
    %2043 = vmatpush1.msra.mxu0 %v743
    %2044 = vmatprep.subr.mxu0 %v742
    %2045 = vmatpush1.msra.mxu0 %v741
    %2046 = vmatprep.subr.mxu0 %v740
    %2047 = vmatpush1.msra.mxu0 %v739
    %2048 = vmatprep.subr.mxu0 %v738
    %2049 = vmatpush1.msra.mxu0 %v737
    %2050 = vmatprep.subr.mxu0 %v736
    %2051 = vmatpush1.msra.mxu0 %v735
    %2052 = vmatprep.subr.mxu0 %v734
    %2053 = vmatpush1.msra.mxu0 %v733
    %2054 = vmatprep.subr.mxu0 %v796
    %2055 = vmatpush2.msra.mxu0 %v795
    %2056 = vmatprep.subr.mxu0 %v794
    %2057 = vmatpush2.msra.mxu0 %v793
    %2058 = vmatprep.subr.mxu0 %v792
    %2059 = vmatpush2.msra.mxu0 %v791
    %2060 = vmatprep.subr.mxu0 %v790
    %2061 = vmatpush2.msra.mxu0 %v789
    %2062 = vmatprep.subr.mxu0 %v788
    %2063 = vmatpush2.msra.mxu0 %v787
    %2064 = vmatprep.subr.mxu0 %v786
    %2065 = vmatpush2.msra.mxu0 %v785
    %2066 = vmatprep.subr.mxu0 %v784
    %2067 = vmatpush2.msra.mxu0 %v783
    %2068 = vmatprep.subr.mxu0 %v782
    %2069 = vmatpush2.msra.mxu0 %v781
    %2070 = vmatprep.subr.mxu0 %v780
    %2071 = vmatpush2.msra.mxu0 %v779
    %2072 = vmatprep.subr.mxu0 %v778
    %2073 = vmatpush2.msra.mxu0 %v777
    %2074 = vmatprep.subr.mxu0 %v776
    %2075 = vmatpush2.msra.mxu0 %v775
    %2076 = vmatprep.subr.mxu0 %v774
    %2077 = vmatpush2.msra.mxu0 %v773
    %2078 = vmatprep.subr.mxu0 %v772
    %2079 = vmatpush2.msra.mxu0 %v771
    %2080 = vmatprep.subr.mxu0 %v770
    %2081 = vmatpush2.msra.mxu0 %v769
    %2082 = vmatprep.subr.mxu0 %v768
    %2083 = vmatpush2.msra.mxu0 %v767
    %2084 = vmatprep.subr.mxu0 %v766
    %2085 = vmatpush2.msra.mxu0 %v765
    %2086 = vmatprep.mubr.f32.mxu0 %v1174
    %2087 = vmatmul.mubr.f32.gmra.mxu0 %v1172
    %v2088 = vpop.f32.mrf.mxu0
    %v2089 = vadd.f32 %v2018, %v2088
    %v2090 = vpop.f32.mrf.mxu0
    %v2091 = vadd.f32 %v2020, %v2090
    %2092 = vdwg.mxu0
    %2093 = vmatprep.subr.mxu0 %v828
    %2094 = vmatpush1.msra.mxu0 %v827
    %2095 = vmatprep.subr.mxu0 %v826
    %2096 = vmatpush1.msra.mxu0 %v825
    %2097 = vmatprep.subr.mxu0 %v824
    %2098 = vmatpush1.msra.mxu0 %v823
    %2099 = vmatprep.subr.mxu0 %v822
    %2100 = vmatpush1.msra.mxu0 %v821
    %2101 = vmatprep.subr.mxu0 %v820
    %2102 = vmatpush1.msra.mxu0 %v819
    %2103 = vmatprep.subr.mxu0 %v818
    %2104 = vmatpush1.msra.mxu0 %v817
    %2105 = vmatprep.subr.mxu0 %v816
    %2106 = vmatpush1.msra.mxu0 %v815
    %2107 = vmatprep.subr.mxu0 %v814
    %2108 = vmatpush1.msra.mxu0 %v813
    %2109 = vmatprep.subr.mxu0 %v812
    %2110 = vmatpush1.msra.mxu0 %v811
    %2111 = vmatprep.subr.mxu0 %v810
    %2112 = vmatpush1.msra.mxu0 %v809
    %2113 = vmatprep.subr.mxu0 %v808
    %2114 = vmatpush1.msra.mxu0 %v807
    %2115 = vmatprep.subr.mxu0 %v806
    %2116 = vmatpush1.msra.mxu0 %v805
    %2117 = vmatprep.subr.mxu0 %v804
    %2118 = vmatpush1.msra.mxu0 %v803
    %2119 = vmatprep.subr.mxu0 %v802
    %2120 = vmatpush1.msra.mxu0 %v801
    %2121 = vmatprep.subr.mxu0 %v800
    %2122 = vmatpush1.msra.mxu0 %v799
    %2123 = vmatprep.subr.mxu0 %v798
    %2124 = vmatpush1.msra.mxu0 %v797
    %2125 = vmatprep.subr.mxu0 %v860
    %2126 = vmatpush2.msra.mxu0 %v859
    %2127 = vmatprep.subr.mxu0 %v858
    %2128 = vmatpush2.msra.mxu0 %v857
    %2129 = vmatprep.subr.mxu0 %v856
    %2130 = vmatpush2.msra.mxu0 %v855
    %2131 = vmatprep.subr.mxu0 %v854
    %2132 = vmatpush2.msra.mxu0 %v853
    %2133 = vmatprep.subr.mxu0 %v852
    %2134 = vmatpush2.msra.mxu0 %v851
    %2135 = vmatprep.subr.mxu0 %v850
    %2136 = vmatpush2.msra.mxu0 %v849
    %2137 = vmatprep.subr.mxu0 %v848
    %2138 = vmatpush2.msra.mxu0 %v847
    %2139 = vmatprep.subr.mxu0 %v846
    %2140 = vmatpush2.msra.mxu0 %v845
    %2141 = vmatprep.subr.mxu0 %v844
    %2142 = vmatpush2.msra.mxu0 %v843
    %2143 = vmatprep.subr.mxu0 %v842
    %2144 = vmatpush2.msra.mxu0 %v841
    %2145 = vmatprep.subr.mxu0 %v840
    %2146 = vmatpush2.msra.mxu0 %v839
    %2147 = vmatprep.subr.mxu0 %v838
    %2148 = vmatpush2.msra.mxu0 %v837
    %2149 = vmatprep.subr.mxu0 %v836
    %2150 = vmatpush2.msra.mxu0 %v835
    %2151 = vmatprep.subr.mxu0 %v834
    %2152 = vmatpush2.msra.mxu0 %v833
    %2153 = vmatprep.subr.mxu0 %v832
    %2154 = vmatpush2.msra.mxu0 %v831
    %2155 = vmatprep.subr.mxu0 %v830
    %2156 = vmatpush2.msra.mxu0 %v829
    %2157 = vmatprep.mubr.f32.mxu0 %v1190
    %2158 = vmatmul.mubr.f32.gmra.mxu0 %v1182
    %v2159 = vpop.f32.mrf.mxu0
    %v2160 = vadd.f32 %v2089, %v2159
    %v2161 = vpop.f32.mrf.mxu0
    %v2162 = vadd.f32 %v2091, %v2161
    %2163 = vdwg.mxu0
    %2164 = vmatprep.subr.mxu0 %v892
    %2165 = vmatpush1.msra.mxu0 %v891
    %2166 = vmatprep.subr.mxu0 %v890
    %2167 = vmatpush1.msra.mxu0 %v889
    %2168 = vmatprep.subr.mxu0 %v888
    %2169 = vmatpush1.msra.mxu0 %v887
    %2170 = vmatprep.subr.mxu0 %v886
    %2171 = vmatpush1.msra.mxu0 %v885
    %2172 = vmatprep.subr.mxu0 %v884
    %2173 = vmatpush1.msra.mxu0 %v883
    %2174 = vmatprep.subr.mxu0 %v882
    %2175 = vmatpush1.msra.mxu0 %v881
    %2176 = vmatprep.subr.mxu0 %v880
    %2177 = vmatpush1.msra.mxu0 %v879
    %2178 = vmatprep.subr.mxu0 %v878
    %2179 = vmatpush1.msra.mxu0 %v877
    %2180 = vmatprep.subr.mxu0 %v876
    %2181 = vmatpush1.msra.mxu0 %v875
    %2182 = vmatprep.subr.mxu0 %v874
    %2183 = vmatpush1.msra.mxu0 %v873
    %2184 = vmatprep.subr.mxu0 %v872
    %2185 = vmatpush1.msra.mxu0 %v871
    %2186 = vmatprep.subr.mxu0 %v870
    %2187 = vmatpush1.msra.mxu0 %v869
    %2188 = vmatprep.subr.mxu0 %v868
    %2189 = vmatpush1.msra.mxu0 %v867
    %2190 = vmatprep.subr.mxu0 %v866
    %2191 = vmatpush1.msra.mxu0 %v865
    %2192 = vmatprep.subr.mxu0 %v864
    %2193 = vmatpush1.msra.mxu0 %v863
    %2194 = vmatprep.subr.mxu0 %v862
    %2195 = vmatpush1.msra.mxu0 %v861
    %2196 = vmatprep.subr.mxu0 %v924
    %2197 = vmatpush2.msra.mxu0 %v923
    %2198 = vmatprep.subr.mxu0 %v922
    %2199 = vmatpush2.msra.mxu0 %v921
    %2200 = vmatprep.subr.mxu0 %v920
    %2201 = vmatpush2.msra.mxu0 %v919
    %2202 = vmatprep.subr.mxu0 %v918
    %2203 = vmatpush2.msra.mxu0 %v917
    %2204 = vmatprep.subr.mxu0 %v916
    %2205 = vmatpush2.msra.mxu0 %v915
    %2206 = vmatprep.subr.mxu0 %v914
    %2207 = vmatpush2.msra.mxu0 %v913
    %2208 = vmatprep.subr.mxu0 %v912
    %2209 = vmatpush2.msra.mxu0 %v911
    %2210 = vmatprep.subr.mxu0 %v910
    %2211 = vmatpush2.msra.mxu0 %v909
    %2212 = vmatprep.subr.mxu0 %v908
    %2213 = vmatpush2.msra.mxu0 %v907
    %2214 = vmatprep.subr.mxu0 %v906
    %2215 = vmatpush2.msra.mxu0 %v905
    %2216 = vmatprep.subr.mxu0 %v904
    %2217 = vmatpush2.msra.mxu0 %v903
    %2218 = vmatprep.subr.mxu0 %v902
    %2219 = vmatpush2.msra.mxu0 %v901
    %2220 = vmatprep.subr.mxu0 %v900
    %2221 = vmatpush2.msra.mxu0 %v899
    %2222 = vmatprep.subr.mxu0 %v898
    %2223 = vmatpush2.msra.mxu0 %v897
    %2224 = vmatprep.subr.mxu0 %v896
    %2225 = vmatpush2.msra.mxu0 %v895
    %2226 = vmatprep.subr.mxu0 %v894
    %2227 = vmatpush2.msra.mxu0 %v893
    %2228 = vmatprep.mubr.f32.mxu0 %v1191
    %2229 = vmatmul.mubr.f32.gmra.mxu0 %v1189
    %v2230 = vpop.f32.mrf.mxu0
    %v2231 = vadd.f32 %v2160, %v2230
    %v2232 = vpop.f32.mrf.mxu0
    %v2233 = vadd.f32 %v2162, %v2232
    %2234 = vdwg.mxu0
    %2235 = vmatprep.subr.mxu0 %v956
    %2236 = vmatpush1.msra.mxu0 %v955
    %2237 = vmatprep.subr.mxu0 %v954
    %2238 = vmatpush1.msra.mxu0 %v953
    %2239 = vmatprep.subr.mxu0 %v952
    %2240 = vmatpush1.msra.mxu0 %v951
    %2241 = vmatprep.subr.mxu0 %v950
    %2242 = vmatpush1.msra.mxu0 %v949
    %2243 = vmatprep.subr.mxu0 %v948
    %2244 = vmatpush1.msra.mxu0 %v947
    %2245 = vmatprep.subr.mxu0 %v946
    %2246 = vmatpush1.msra.mxu0 %v945
    %2247 = vmatprep.subr.mxu0 %v944
    %2248 = vmatpush1.msra.mxu0 %v943
    %2249 = vmatprep.subr.mxu0 %v942
    %2250 = vmatpush1.msra.mxu0 %v941
    %2251 = vmatprep.subr.mxu0 %v940
    %2252 = vmatpush1.msra.mxu0 %v939
    %2253 = vmatprep.subr.mxu0 %v938
    %2254 = vmatpush1.msra.mxu0 %v937
    %2255 = vmatprep.subr.mxu0 %v936
    %2256 = vmatpush1.msra.mxu0 %v935
    %2257 = vmatprep.subr.mxu0 %v934
    %2258 = vmatpush1.msra.mxu0 %v933
    %2259 = vmatprep.subr.mxu0 %v932
    %2260 = vmatpush1.msra.mxu0 %v931
    %2261 = vmatprep.subr.mxu0 %v930
    %2262 = vmatpush1.msra.mxu0 %v929
    %2263 = vmatprep.subr.mxu0 %v928
    %2264 = vmatpush1.msra.mxu0 %v927
    %2265 = vmatprep.subr.mxu0 %v926
    %2266 = vmatpush1.msra.mxu0 %v925
    %2267 = vmatprep.subr.mxu0 %v988
    %2268 = vmatpush2.msra.mxu0 %v987
    %2269 = vmatprep.subr.mxu0 %v986
    %2270 = vmatpush2.msra.mxu0 %v985
    %2271 = vmatprep.subr.mxu0 %v984
    %2272 = vmatpush2.msra.mxu0 %v983
    %2273 = vmatprep.subr.mxu0 %v982
    %2274 = vmatpush2.msra.mxu0 %v981
    %2275 = vmatprep.subr.mxu0 %v980
    %2276 = vmatpush2.msra.mxu0 %v979
    %2277 = vmatprep.subr.mxu0 %v978
    %2278 = vmatpush2.msra.mxu0 %v977
    %2279 = vmatprep.subr.mxu0 %v976
    %2280 = vmatpush2.msra.mxu0 %v975
    %2281 = vmatprep.subr.mxu0 %v974
    %2282 = vmatpush2.msra.mxu0 %v973
    %2283 = vmatprep.subr.mxu0 %v972
    %2284 = vmatpush2.msra.mxu0 %v971
    %2285 = vmatprep.subr.mxu0 %v970
    %2286 = vmatpush2.msra.mxu0 %v969
    %2287 = vmatprep.subr.mxu0 %v968
    %2288 = vmatpush2.msra.mxu0 %v967
    %2289 = vmatprep.subr.mxu0 %v966
    %2290 = vmatpush2.msra.mxu0 %v965
    %2291 = vmatprep.subr.mxu0 %v964
    %2292 = vmatpush2.msra.mxu0 %v963
    %2293 = vmatprep.subr.mxu0 %v962
    %2294 = vmatpush2.msra.mxu0 %v961
    %2295 = vmatprep.subr.mxu0 %v960
    %2296 = vmatpush2.msra.mxu0 %v959
    %2297 = vmatprep.subr.mxu0 %v958
    %2298 = vmatpush2.msra.mxu0 %v957
    %2299 = vmatprep.mubr.f32.mxu0 %v1207
    %2300 = vmatmul.mubr.f32.gmra.mxu0 %v1199
    %v2301 = vpop.f32.mrf.mxu0
    %v2302 = vadd.f32 %v2231, %v2301
    %v2303 = vpop.f32.mrf.mxu0
    %v2304 = vadd.f32 %v2233, %v2303
    %2305 = vdwg.mxu0
    %2306 = vmatprep.subr.mxu0 %v1020
    %2307 = vmatpush1.msra.mxu0 %v1019
    %2308 = vmatprep.subr.mxu0 %v1018
    %2309 = vmatpush1.msra.mxu0 %v1017
    %2310 = vmatprep.subr.mxu0 %v1016
    %2311 = vmatpush1.msra.mxu0 %v1015
    %2312 = vmatprep.subr.mxu0 %v1014
    %2313 = vmatpush1.msra.mxu0 %v1013
    %2314 = vmatprep.subr.mxu0 %v1012
    %2315 = vmatpush1.msra.mxu0 %v1011
    %2316 = vmatprep.subr.mxu0 %v1010
    %2317 = vmatpush1.msra.mxu0 %v1009
    %2318 = vmatprep.subr.mxu0 %v1008
    %2319 = vmatpush1.msra.mxu0 %v1007
    %2320 = vmatprep.subr.mxu0 %v1006
    %2321 = vmatpush1.msra.mxu0 %v1005
    %2322 = vmatprep.subr.mxu0 %v1004
    %2323 = vmatpush1.msra.mxu0 %v1003
    %2324 = vmatprep.subr.mxu0 %v1002
    %2325 = vmatpush1.msra.mxu0 %v1001
    %2326 = vmatprep.subr.mxu0 %v1000
    %2327 = vmatpush1.msra.mxu0 %v999
    %2328 = vmatprep.subr.mxu0 %v998
    %2329 = vmatpush1.msra.mxu0 %v997
    %2330 = vmatprep.subr.mxu0 %v996
    %2331 = vmatpush1.msra.mxu0 %v995
    %2332 = vmatprep.subr.mxu0 %v994
    %2333 = vmatpush1.msra.mxu0 %v993
    %2334 = vmatprep.subr.mxu0 %v992
    %2335 = vmatpush1.msra.mxu0 %v991
    %2336 = vmatprep.subr.mxu0 %v990
    %2337 = vmatpush1.msra.mxu0 %v989
    %2338 = vmatprep.subr.mxu0 %v1052
    %2339 = vmatpush2.msra.mxu0 %v1051
    %2340 = vmatprep.subr.mxu0 %v1050
    %2341 = vmatpush2.msra.mxu0 %v1049
    %2342 = vmatprep.subr.mxu0 %v1048
    %2343 = vmatpush2.msra.mxu0 %v1047
    %2344 = vmatprep.subr.mxu0 %v1046
    %2345 = vmatpush2.msra.mxu0 %v1045
    %2346 = vmatprep.subr.mxu0 %v1044
    %2347 = vmatpush2.msra.mxu0 %v1043
    %2348 = vmatprep.subr.mxu0 %v1042
    %2349 = vmatpush2.msra.mxu0 %v1041
    %2350 = vmatprep.subr.mxu0 %v1040
    %2351 = vmatpush2.msra.mxu0 %v1039
    %2352 = vmatprep.subr.mxu0 %v1038
    %2353 = vmatpush2.msra.mxu0 %v1037
    %2354 = vmatprep.subr.mxu0 %v1036
    %2355 = vmatpush2.msra.mxu0 %v1035
    %2356 = vmatprep.subr.mxu0 %v1034
    %2357 = vmatpush2.msra.mxu0 %v1033
    %2358 = vmatprep.subr.mxu0 %v1032
    %2359 = vmatpush2.msra.mxu0 %v1031
    %2360 = vmatprep.subr.mxu0 %v1030
    %2361 = vmatpush2.msra.mxu0 %v1029
    %2362 = vmatprep.subr.mxu0 %v1028
    %2363 = vmatpush2.msra.mxu0 %v1027
    %2364 = vmatprep.subr.mxu0 %v1026
    %2365 = vmatpush2.msra.mxu0 %v1025
    %2366 = vmatprep.subr.mxu0 %v1024
    %2367 = vmatpush2.msra.mxu0 %v1023
    %2368 = vmatprep.subr.mxu0 %v1022
    %2369 = vmatpush2.msra.mxu0 %v1021
    %2370 = vmatprep.mubr.f32.mxu0 %v1208
    %2371 = vmatmul.mubr.f32.gmra.mxu0 %v1206
    %v2372 = vpop.f32.mrf.mxu0
    %v2373 = vadd.f32 %v2302, %v2372
    %v2374 = vpop.f32.mrf.mxu0
    %v2375 = vadd.f32 %v2304, %v2374
    %2376 = vdwg.mxu0
    %v2377 = vmax.f32 %v2373, 0.0
    %v2378 = vmax.f32 %v2375, 0.0
    %v2379 = vld [vmem:[%s3] sm:$0xff]
    %v2380 = vld [vmem:[%s3 + $0x8] sm:$0xff]
    %v2381 = vld [vmem:[%s3 + $0x10] sm:$0xff]
    %v2382 = vld [vmem:[%s3 + $0x18] sm:$0xff]
    %v2383 = vld [vmem:[%s3 + $0x20] sm:$0xff]
    %v2384 = vld [vmem:[%s3 + $0x28] sm:$0xff]
    %v2385 = vld [vmem:[%s3 + $0x30] sm:$0xff]
    %v2386 = vld [vmem:[%s3 + $0x38] sm:$0xff]
    %v2387 = vld [vmem:[%s3 + $0x40] sm:$0xff]
    %v2388 = vld [vmem:[%s3 + $0x48] sm:$0xff]
    %v2389 = vld [vmem:[%s3 + $0x50] sm:$0xff]
    %v2390 = vld [vmem:[%s3 + $0x58] sm:$0xff]
    %v2391 = vld [vmem:[%s3 + $0x60] sm:$0xff]
    %v2392 = vld [vmem:[%s3 + $0x68] sm:$0xff]
    %v2393 = vld [vmem:[%s3 + $0x70] sm:$0xff]
    %v2394 = vld [vmem:[%s3 + $0x78] sm:$0xff]
    %v2395 = vld [vmem:[%s3 + $0x80] sm:$0xff]
    %v2396 = vld [vmem:[%s3 + $0x88] sm:$0xff]
    %v2397 = vld [vmem:[%s3 + $0x90] sm:$0xff]
    %v2398 = vld [vmem:[%s3 + $0x98] sm:$0xff]
    %v2399 = vld [vmem:[%s3 + $0xa0] sm:$0xff]
    %v2400 = vld [vmem:[%s3 + $0xa8] sm:$0xff]
    %v2401 = vld [vmem:[%s3 + $0xb0] sm:$0xff]
    %v2402 = vld [vmem:[%s3 + $0xb8] sm:$0xff]
    %v2403 = vld [vmem:[%s3 + $0xc0] sm:$0xff]
    %v2404 = vld [vmem:[%s3 + $0xc8] sm:$0xff]
    %v2405 = vld [vmem:[%s3 + $0xd0] sm:$0xff]
    %v2406 = vld [vmem:[%s3 + $0xd8] sm:$0xff]
    %v2407 = vld [vmem:[%s3 + $0xe0] sm:$0xff]
    %v2408 = vld [vmem:[%s3 + $0xe8] sm:$0xff]
    %v2409 = vld [vmem:[%s3 + $0xf0] sm:$0xff]
    %v2410 = vld [vmem:[%s3 + $0xf8] sm:$0xff]
    %v2411 = vld [vmem:[%s4] sm:$0x1]
    %v2413 = vlaneseq
    %v2414 = vshrl.u32 %v2413, 7
    %v2415 = vsub.s32 0, %v2414
    %v2416 = vrot.slane %v2411, %v2415
    %2418 = vmatprep.subr.mxu0 0.0
    %2419 = vmatpush1.msra.mxu0 %v2394
    %2420 = vmatprep.subr.mxu0 0.0
    %2421 = vmatpush1.msra.mxu0 %v2393
    %2422 = vmatprep.subr.mxu0 0.0
    %2423 = vmatpush1.msra.mxu0 %v2392
    %2424 = vmatprep.subr.mxu0 0.0
    %2425 = vmatpush1.msra.mxu0 %v2391
    %2426 = vmatprep.subr.mxu0 0.0
    %2427 = vmatpush1.msra.mxu0 %v2390
    %2428 = vmatprep.subr.mxu0 0.0
    %2429 = vmatpush1.msra.mxu0 %v2389
    %2430 = vmatprep.subr.mxu0 0.0
    %2431 = vmatpush1.msra.mxu0 %v2388
    %2432 = vmatprep.subr.mxu0 0.0
    %2433 = vmatpush1.msra.mxu0 %v2387
    %2434 = vmatprep.subr.mxu0 0.0
    %2435 = vmatpush1.msra.mxu0 %v2386
    %2436 = vmatprep.subr.mxu0 0.0
    %2437 = vmatpush1.msra.mxu0 %v2385
    %2438 = vmatprep.subr.mxu0 0.0
    %2439 = vmatpush1.msra.mxu0 %v2384
    %2440 = vmatprep.subr.mxu0 0.0
    %2441 = vmatpush1.msra.mxu0 %v2383
    %2442 = vmatprep.subr.mxu0 0.0
    %2443 = vmatpush1.msra.mxu0 %v2382
    %2444 = vmatprep.subr.mxu0 0.0
    %2445 = vmatpush1.msra.mxu0 %v2381
    %2446 = vmatprep.subr.mxu0 0.0
    %2447 = vmatpush1.msra.mxu0 %v2380
    %2448 = vmatprep.subr.mxu0 0.0
    %2449 = vmatpush1.msra.mxu0 %v2379
    %2450 = vmatprep.subr.mxu0 0.0
    %2451 = vmatpush2.msra.mxu0 %v2410
    %2452 = vmatprep.subr.mxu0 0.0
    %2453 = vmatpush2.msra.mxu0 %v2409
    %2454 = vmatprep.subr.mxu0 0.0
    %2455 = vmatpush2.msra.mxu0 %v2408
    %2456 = vmatprep.subr.mxu0 0.0
    %2457 = vmatpush2.msra.mxu0 %v2407
    %2458 = vmatprep.subr.mxu0 0.0
    %2459 = vmatpush2.msra.mxu0 %v2406
    %2460 = vmatprep.subr.mxu0 0.0
    %2461 = vmatpush2.msra.mxu0 %v2405
    %2462 = vmatprep.subr.mxu0 0.0
    %2463 = vmatpush2.msra.mxu0 %v2404
    %2464 = vmatprep.subr.mxu0 0.0
    %2465 = vmatpush2.msra.mxu0 %v2403
    %2466 = vmatprep.subr.mxu0 0.0
    %2467 = vmatpush2.msra.mxu0 %v2402
    %2468 = vmatprep.subr.mxu0 0.0
    %2469 = vmatpush2.msra.mxu0 %v2401
    %2470 = vmatprep.subr.mxu0 0.0
    %2471 = vmatpush2.msra.mxu0 %v2400
    %2472 = vmatprep.subr.mxu0 0.0
    %2473 = vmatpush2.msra.mxu0 %v2399
    %2474 = vmatprep.subr.mxu0 0.0
    %2475 = vmatpush2.msra.mxu0 %v2398
    %2476 = vmatprep.subr.mxu0 0.0
    %2477 = vmatpush2.msra.mxu0 %v2397
    %2478 = vmatprep.subr.mxu0 0.0
    %2479 = vmatpush2.msra.mxu0 %v2396
    %2480 = vmatprep.subr.mxu0 0.0
    %2481 = vmatpush2.msra.mxu0 %v2395
    %2482 = vmatprep.mubr.f32.mxu0 %v2378
    %2483 = vmatmul.mubr.f32.gmra.mxu0 %v2377
    %v2484 = vpop.f32.mrf.mxu0
    %v2485 = vadd.f32 %v2416, %v2484
    %v2486 = vpop.f32.mrf.mxu0
    %2487 = vdwg.mxu0
    %2488 = vst [vmem:[#allocation2] sm:$0x3] %v2485
    // Predicated region
    $region22: #{dqn_forward.7} parent=1 // pred_check
      _
    $region23: #{dqn_forward.7} parent=1 // pred_check_branch
      %2490 = sbr.rel (0) target = $region25
    $region24: #{dqn_forward.7} parent=1 // pred_region
      %s2492 = ssub.s32 32, 32
      %2493 = vsyncadd [#allocation3], %s2492
      %s2495 = sshll.u32 [#allocation2], 4
      %s2496 = int_to_ptr.vmem [resolvable:$true] %s2495
      %2498 = dma.vmem_to_hbm [thread:$0]  %s2496, 32, %s5, [#allocation3]
    $region25: #{dqn_forward.7} parent=1 // pred_fallthru
      _
    // Predicated region
    $region26: #{dqn_forward.7} parent=1 // pred_check
      _
    $region27: #{dqn_forward.7} parent=1 // pred_check_branch
      %2500 = sbr.rel (0) target = $region29
    $region28: #{dqn_forward.7} parent=1 // pred_region
      %2501 = dma.done [#allocation3], 32
    $region29: #{dqn_forward.7} parent=1 // pred_fallthru
      _
    %2502 = vsyncpa [#allocation3], 1

</llo_original>
